<compile_context>
chip_gen: v6e
topology: v6e:2x2x1
jax: 0.10.0
libtpu: 0.0.40
codegen_flags: <defaults>
</compile_context>

<pallas_src>
import functools

import jax
import jax.numpy as jnp
from jax import lax
from jax.experimental import pallas as pl
from jax.experimental.pallas import tpu as pltpu

BN_EPS = 1e-5


def _round_up(x, m):
    return (x + m - 1) // m * m


def _pick_row_tile(oh, ow):
    """Largest divisor t of oh with t*ow <= ~512; prefer >=2 row tiles (v7x)."""
    best = 1
    for t in range(1, oh + 1):
        if oh % t == 0 and t * ow <= max(512, ow):
            best = t
    if best == oh and oh > 1:
        for t in range(oh // 2, 0, -1):
            if oh % t == 0 and t * ow >= 64:
                return t
    return best


# ----------------------------------------------------------------------------
# Pallas kernel: fused direct conv (k x k) + folded BN + optional residual/ReLU.
# ----------------------------------------------------------------------------
def _conv_bn_act_kernel(x_ref, w_ref, scale_ref, shift_ref, *rest,
                        taps, t_oh, ow, apply_relu, has_residual):
    """Computes one (1, t_oh, ow, Np) output tile.

    x_ref:     (1, s*s, Hq, Wq, Cin) whole phase-split padded image (VMEM resident)
    w_ref:     (k*k, Cin, Np)        whole pre-laid-out weight tensor (resident)
    scale_ref, shift_ref: (1, Np)    folded BN (+conv bias), f32
    res_ref:   (1, t_oh, ow, Np)     optional residual tile
    o_ref:     (1, t_oh, ow, Np)     output tile
    acc_ref:   (t_oh*ow, Np) f32     accumulator scratch
    """
    if has_residual:
        res_ref, o_ref, acc_ref = rest
    else:
        o_ref, acc_ref = rest
        res_ref = None

    row0 = pl.program_id(1) * t_oh
    cin = x_ref.shape[-1]
    n_out = o_ref.shape[-1]
    m = t_oh * ow

    for j, (ph, qh, qw, t) in enumerate(taps):
        lhs = x_ref[0, ph, pl.ds(row0 + qh, t_oh), pl.ds(qw, ow), :]
        lhs = lhs.reshape(m, cin)
        part = jnp.dot(lhs, w_ref[t], preferred_element_type=jnp.float32)
        if j == 0:
            acc_ref[...] = part
        else:
            acc_ref[...] += part

    out = acc_ref[...] * scale_ref[...] + shift_ref[...]
    if has_residual:
        out = out + res_ref[...].reshape(m, n_out).astype(jnp.float32)
    if apply_relu:
        out = jnp.maximum(out, 0.0)
    o_ref[...] = out.reshape(1, t_oh, ow, n_out).astype(o_ref.dtype)


# ----------------------------------------------------------------------------
# Input prep: spatial zero-pad + stride-phase split so every conv tap becomes a
# contiguous window (one cheap XLA pass; no 9x im2col blowup).
# ----------------------------------------------------------------------------
def _phase_split(x, k, stride, pad, t_oh, oh, ow):
    B, H, W, C = x.shape
    s = stride
    oh_pad = _round_up(oh, t_oh)
    q = (k - 1) // s
    hq = oh_pad + q
    wq = ow + q
    h_need = s * hq
    w_need = s * wq
    xp = jnp.pad(x, ((0, 0), (pad, h_need - H - pad),
                     (pad, w_need - W - pad), (0, 0)))
    xr = xp.reshape(B, hq, s, wq, s, C).transpose(0, 2, 4, 1, 3, 5)
    return xr.reshape(B, s * s, hq, wq, C), oh_pad


# ----------------------------------------------------------------------------
# One fused conv + BN (+residual) (+ReLU) as a single pallas_call.
# ----------------------------------------------------------------------------
def conv_bn_act(x, w_taps, scale, shift, *, k, stride, pad, apply_relu,
                t_oh=None, residual=None, out_dtype=jnp.bfloat16):
    if k == 1 and stride > 1:               # 1x1 conv: subsample instead of phases
        x = x[:, ::stride, ::stride, :]
        stride = 1
    B, H, W, Cin = x.shape
    assert Cin == w_taps.shape[1], (Cin, w_taps.shape)
    oh = (H + 2 * pad - k) // stride + 1
    ow = (W + 2 * pad - k) // stride + 1
    if t_oh is None:
        t_oh = _pick_row_tile(oh, ow)

    phases, oh_pad = _phase_split(x, k, stride, pad, t_oh, oh, ow)
    _, nph, hq, wq, _ = phases.shape
    n_tiles = oh_pad // t_oh
    npad = w_taps.shape[-1]

    taps = tuple(((kh % stride) * stride + (kw % stride),
                  kh // stride, kw // stride, kh * k + kw)
                 for kh in range(k) for kw in range(k))

    in_specs = [
        pl.BlockSpec((1, nph, hq, wq, Cin), lambda b, i: (b, 0, 0, 0, 0)),
        pl.BlockSpec((k * k, Cin, npad), lambda b, i: (0, 0, 0)),
        pl.BlockSpec((1, npad), lambda b, i: (0, 0)),
        pl.BlockSpec((1, npad), lambda b, i: (0, 0)),
    ]
    inputs = [phases, w_taps, scale, shift]
    has_residual = residual is not None
    if has_residual:
        assert residual.shape == (B, oh_pad, ow, npad), residual.shape
        in_specs.append(pl.BlockSpec((1, t_oh, ow, npad),
                                     lambda b, i: (b, i, 0, 0)))
        inputs.append(residual)

    # Explicit VMEM budget: scales with need, >=32 MiB, <=48 MiB (v7x-safe).
    out_bytes = t_oh * ow * npad * jnp.dtype(out_dtype).itemsize
    est = (2 * (nph * hq * wq * Cin * 2 + k * k * Cin * npad * 2
                + 2 * npad * 4 + out_bytes
                + (t_oh * ow * npad * 2 if has_residual else 0))
           + t_oh * ow * npad * 4)
    vmem_limit = int(max(32 << 20, min(48 << 20, 2 * est)))

    kernel = functools.partial(
        _conv_bn_act_kernel, taps=taps, t_oh=t_oh, ow=ow,
        apply_relu=apply_relu, has_residual=has_residual)

    out = pl.pallas_call(
        kernel,
        out_shape=jax.ShapeDtypeStruct((B, oh_pad, ow, npad), out_dtype),
        grid_spec=pltpu.PrefetchScalarGridSpec(
            num_scalar_prefetch=0,
            grid=(B, n_tiles),
            in_specs=in_specs,
            out_specs=pl.BlockSpec((1, t_oh, ow, npad),
                                   lambda b, i: (b, i, 0, 0)),
            scratch_shapes=[pltpu.VMEM((t_oh * ow, npad), jnp.float32)],
        ),
        compiler_params=pltpu.CompilerParams(
            dimension_semantics=("parallel", "parallel"),
            vmem_limit_bytes=vmem_limit),
    )(*inputs)
    return out, oh, ow, oh_pad


# ----------------------------------------------------------------------------
# Init: fold conv bias + eval-mode BN into (scale, shift); pre-layout weights
# ONCE as (k*k, Cin[, padded], Np) bf16 tap matrices.
# ----------------------------------------------------------------------------
def _fold_conv_bn(w_oihw, b, gamma, beta, mean, var, cin_pad=None):
    O, C, kh, kw = w_oihw.shape
    w_t = jnp.transpose(w_oihw, (2, 3, 1, 0)).reshape(kh * kw, C, O)
    scale = gamma / jnp.sqrt(var + BN_EPS)
    shift = beta + scale * (b - mean)
    npad = _round_up(O, 128)
    cin_p = C if cin_pad is None else cin_pad
    w_p = jnp.pad(w_t, ((0, 0), (0, cin_p - C), (0, npad - O))).astype(jnp.bfloat16)
    scale_p = jnp.pad(scale, (0, npad - O)).reshape(1, npad).astype(jnp.float32)
    shift_p = jnp.pad(shift, (0, npad - O)).reshape(1, npad).astype(jnp.float32)
    return w_p, scale_p, shift_p


def init_basic_block(key, in_channels, out_channels, stride):
    def conv_params(key, cin, cout, k):
        kw_, kb_, kg, kbt, km, kv = jax.random.split(key, 6)
        fan_in = cin * k * k
        w = jax.random.normal(kw_, (cout, cin, k, k), jnp.float32) * (
            (2.0 / fan_in) ** 0.5)
        b = 0.05 * jax.random.normal(kb_, (cout,), jnp.float32)
        gamma = 1.0 + 0.1 * jax.random.normal(kg, (cout,), jnp.float32)
        beta = 0.1 * jax.random.normal(kbt, (cout,), jnp.float32)
        mean = 0.1 * jax.random.normal(km, (cout,), jnp.float32)
        var = 1.0 + 0.1 * jnp.abs(jax.random.normal(kv, (cout,), jnp.float32))
        return w, b, gamma, beta, mean, var

    k1, k2, k3 = jax.random.split(key, 3)
    raw = {"conv1": conv_params(k1, in_channels, out_channels, 3),
           "conv2": conv_params(k2, out_channels, out_channels, 3)}
    has_shortcut = (stride != 1) or (in_channels != out_channels)
    if has_shortcut:
        raw["shortcut"] = conv_params(k3, in_channels, out_channels, 1)

    npad = _round_up(out_channels, 128)
    params = {"conv1": _fold_conv_bn(*raw["conv1"]),
              "conv2": _fold_conv_bn(*raw["conv2"], cin_pad=npad)}
    if has_shortcut:
        params["shortcut"] = _fold_conv_bn(*raw["shortcut"])
    return params, raw, has_shortcut


# ----------------------------------------------------------------------------
# BasicBlock forward: 3 pallas_calls (2 if identity shortcut).
# ----------------------------------------------------------------------------
def basic_block_forward(x_nchw, params, *, out_channels, stride, has_shortcut):
    x = jnp.transpose(x_nchw, (0, 2, 3, 1)).astype(jnp.bfloat16)   # NCHW -> NHWC
    B, H, W, in_channels = x.shape
    npad = params["conv1"][0].shape[-1]

    oh = (H + 2 - 3) // stride + 1
    ow = (W + 2 - 3) // stride + 1
    t_oh = _pick_row_tile(oh, ow)

    # conv1 (3x3, stride, pad 1) + bn1 + relu -> bf16, channel-padded to npad
    w1, s1, t1 = params["conv1"]
    h1, _, _, oh_pad1 = conv_bn_act(x, w1, s1, t1, k=3, stride=stride, pad=1,
                                    apply_relu=True, t_oh=t_oh,
                                    out_dtype=jnp.bfloat16)
    if oh_pad1 != oh:
        h1 = h1[:, :oh]

    # residual branch (kept channel-padded to npad; trimmed only at block exit)
    if has_shortcut:
        ws, ss, ts = params["shortcut"]
        res, _, _, _ = conv_bn_act(x, ws, ss, ts, k=1, stride=stride, pad=0,
                                   apply_relu=False, t_oh=t_oh,
                                   out_dtype=jnp.bfloat16)
    else:
        assert stride == 1 and in_channels == out_channels
        res = jnp.pad(x, ((0, 0), (0, _round_up(oh, t_oh) - H), (0, 0),
                          (0, npad - in_channels)))

    # conv2 (3x3, stride 1, pad 1) + bn2 + residual add + relu -> f32
    w2, s2, t2 = params["conv2"]
    out, _, _, _ = conv_bn_act(h1, w2, s2, t2, k=3, stride=1, pad=1,
                               apply_relu=True, t_oh=t_oh, residual=res,
                               out_dtype=jnp.float32)

    out = out[:, :oh, :, :out_channels]              # single trim at block boundary
    return jnp.transpose(out, (0, 3, 1, 2))          # NHWC -> NCHW


# ----------------------------------------------------------------------------
# Pure-JAX reference (independent path via lax.conv, f32) for correctness.
# ----------------------------------------------------------------------------
def reference_forward(x_nchw, raw, stride, has_shortcut):
    x = jnp.transpose(x_nchw, (0, 2, 3, 1))

    def conv_bn(inp, p, s, pad):
        w, b, gamma, beta, mean, var = p
        w_hwio = jnp.transpose(w, (2, 3, 1, 0))
        y = lax.conv_general_dilated(
            inp, w_hwio, (s, s), [(pad, pad), (pad, pad)],
            dimension_numbers=("NHWC", "HWIO", "NHWC"),
            precision=lax.Precision.HIGHEST)
        y = y + b
        return (y - mean) / jnp.sqrt(var + BN_EPS) * gamma + beta

    h = jnp.maximum(conv_bn(x, raw["conv1"], stride, 1), 0.0)
    h = conv_bn(h, raw["conv2"], 1, 1)
    sc = conv_bn(x, raw["shortcut"], stride, 0) if has_shortcut else x
    out = jnp.maximum(h + sc, 0.0)
    return jnp.transpose(out, (0, 3, 1, 2))


if __name__ == "__main__":
    IN_CH, OUT_CH, STRIDE = 4, 8, 2            # exercises the conv-shortcut path
    key = jax.random.PRNGKey(0)
    kx, kp = jax.random.split(key)
    x = jax.random.normal(kx, (2, IN_CH, 16, 16), jnp.float32)    # NCHW like torch
    params, raw, has_shortcut = init_basic_block(kp, IN_CH, OUT_CH, STRIDE)

    fwd = jax.jit(functools.partial(basic_block_forward, out_channels=OUT_CH,
                                    stride=STRIDE, has_shortcut=has_shortcut))
    out = fwd(x, params)
    jax.block_until_ready(out)
    assert out.shape == (2, OUT_CH, 8, 8), out.shape

    ref = reference_forward(x, raw, STRIDE, has_shortcut)
    err = float(jnp.max(jnp.abs(out - ref) / (1.0 + jnp.abs(ref))))
    assert err < 5e-2, f"max relative err {err}"
    print("KERNEL_OK")
</pallas_src>

<mosaic_0001>
module attributes {stable_mosaic.version = 11 : i64} {
  func.func @_conv_bn_act_kernel(%arg0: i32, %arg1: i32, %arg2: memref<1x4x9x9x4xbf16, #tpu.memory_space<vmem>>, %arg3: memref<9x4x128xbf16, #tpu.memory_space<vmem>>, %arg4: memref<1x128xf32, #tpu.memory_space<vmem>>, %arg5: memref<1x128xf32, #tpu.memory_space<vmem>>, %arg6: memref<1x8x8x128xbf16, #tpu.memory_space<vmem>>, %arg7: memref<64x128xf32, #tpu.memory_space<vmem>>) attributes {dimension_semantics = [#tpu.dimension_semantics<parallel>, #tpu.dimension_semantics<parallel>], iteration_bounds = array<i64: 2, 1>, scalar_prefetch = 0 : i64, scratch_operands = 1 : i64, tpu.core_type = #tpu.core_type<tc>, window_params = [{transform_indices = @transform_0, window_bounds = array<i64: 1, 4, 9, 9, 4>}, {pipeline_mode = #tpu.pipeline_mode<synchronous>, transform_indices = @transform_1, window_bounds = array<i64: 9, 4, 128>}, {pipeline_mode = #tpu.pipeline_mode<synchronous>, transform_indices = @transform_2, window_bounds = array<i64: 1, 128>}, {pipeline_mode = #tpu.pipeline_mode<synchronous>, transform_indices = @transform_3, window_bounds = array<i64: 1, 128>}, {transform_indices = @transform_4, window_bounds = array<i64: 1, 8, 8, 128>}]} {
    %c8_i32 = arith.constant 8 : i32
    %0 = arith.muli %arg1, %c8_i32 : i32
    %c0_i32 = arith.constant 0 : i32
    %1 = arith.addi %0, %c0_i32 : i32
    %c0 = arith.constant 0 : index
    %c0_0 = arith.constant 0 : index
    %2 = arith.index_cast %1 : i32 to index
    %c0_1 = arith.constant 0 : index
    %c0_2 = arith.constant 0 : index
    %3 = vector.load %arg2[%c0, %c0_0, %2, %c0_1, %c0_2] : memref<1x4x9x9x4xbf16, #tpu.memory_space<vmem>>, vector<1x1x8x8x4xbf16>
    %4 = vector.shape_cast %3 : vector<1x1x8x8x4xbf16> to vector<8x8x4xbf16>
    %5 = vector.shape_cast %4 : vector<8x8x4xbf16> to vector<64x4xbf16>
    %c0_3 = arith.constant 0 : index
    %c0_4 = arith.constant 0 : index
    %c0_5 = arith.constant 0 : index
    %6 = vector.load %arg3[%c0_3, %c0_4, %c0_5] : memref<9x4x128xbf16, #tpu.memory_space<vmem>>, vector<1x4x128xbf16>
    %7 = vector.shape_cast %6 : vector<1x4x128xbf16> to vector<4x128xbf16>
    %cst = arith.constant dense<0.000000e+00> : vector<64x128xf32>
    %8 = tpu.matmul %5, %7, %cst {dimension_numbers = #tpu.dot_dimension_numbers<[1], [0], [0], [1], [0, 0, 1, 1], [], []>} : vector<64x4xbf16>, vector<4x128xbf16>, vector<64x128xf32> -> vector<64x128xf32>
    %c0_6 = arith.constant 0 : index
    %c0_7 = arith.constant 0 : index
    %9 = vector.load %arg7[%c0_6, %c0_7] : memref<64x128xf32, #tpu.memory_space<vmem>>, vector<64x128xf32>
    tpu.vector_store %arg7[%c0_6, %c0_7], %8 {strides = array<i32>} : memref<64x128xf32, #tpu.memory_space<vmem>>, vector<64x128xf32>,
    %c0_i32_8 = arith.constant 0 : i32
    %10 = arith.addi %0, %c0_i32_8 : i32
    %c0_9 = arith.constant 0 : index
    %c1 = arith.constant 1 : index
    %11 = arith.index_cast %10 : i32 to index
    %c0_10 = arith.constant 0 : index
    %c0_11 = arith.constant 0 : index
    %12 = vector.load %arg2[%c0_9, %c1, %11, %c0_10, %c0_11] : memref<1x4x9x9x4xbf16, #tpu.memory_space<vmem>>, vector<1x1x8x8x4xbf16>
    %13 = vector.shape_cast %12 : vector<1x1x8x8x4xbf16> to vector<8x8x4xbf16>
    %14 = vector.shape_cast %13 : vector<8x8x4xbf16> to vector<64x4xbf16>
    %c1_12 = arith.constant 1 : index
    %c0_13 = arith.constant 0 : index
    %c0_14 = arith.constant 0 : index
    %15 = vector.load %arg3[%c1_12, %c0_13, %c0_14] : memref<9x4x128xbf16, #tpu.memory_space<vmem>>, vector<1x4x128xbf16>
    %16 = vector.shape_cast %15 : vector<1x4x128xbf16> to vector<4x128xbf16>
    %cst_15 = arith.constant dense<0.000000e+00> : vector<64x128xf32>
    %17 = tpu.matmul %14, %16, %cst_15 {dimension_numbers = #tpu.dot_dimension_numbers<[1], [0], [0], [1], [0, 0, 1, 1], [], []>} : vector<64x4xbf16>, vector<4x128xbf16>, vector<64x128xf32> -> vector<64x128xf32>
    %c0_16 = arith.constant 0 : index
    %c0_17 = arith.constant 0 : index
    %18 = vector.load %arg7[%c0_16, %c0_17] : memref<64x128xf32, #tpu.memory_space<vmem>>, vector<64x128xf32>
    %19 = arith.addf %18, %17 : vector<64x128xf32>
    %c0_18 = arith.constant 0 : index
    %c0_19 = arith.constant 0 : index
    %20 = vector.load %arg7[%c0_18, %c0_19] : memref<64x128xf32, #tpu.memory_space<vmem>>, vector<64x128xf32>
    tpu.vector_store %arg7[%c0_18, %c0_19], %19 {strides = array<i32>} : memref<64x128xf32, #tpu.memory_space<vmem>>, vector<64x128xf32>,
    %c0_i32_20 = arith.constant 0 : i32
    %21 = arith.addi %0, %c0_i32_20 : i32
    %c0_21 = arith.constant 0 : index
    %c0_22 = arith.constant 0 : index
    %22 = arith.index_cast %21 : i32 to index
    %c1_23 = arith.constant 1 : index
    %c0_24 = arith.constant 0 : index
    %23 = vector.load %arg2[%c0_21, %c0_22, %22, %c1_23, %c0_24] : memref<1x4x9x9x4xbf16, #tpu.memory_space<vmem>>, vector<1x1x8x8x4xbf16>
    %24 = vector.shape_cast %23 : vector<1x1x8x8x4xbf16> to vector<8x8x4xbf16>
    %25 = vector.shape_cast %24 : vector<8x8x4xbf16> to vector<64x4xbf16>
    %c2 = arith.constant 2 : index
    %c0_25 = arith.constant 0 : index
    %c0_26 = arith.constant 0 : index
    %26 = vector.load %arg3[%c2, %c0_25, %c0_26] : memref<9x4x128xbf16, #tpu.memory_space<vmem>>, vector<1x4x128xbf16>
    %27 = vector.shape_cast %26 : vector<1x4x128xbf16> to vector<4x128xbf16>
    %cst_27 = arith.constant dense<0.000000e+00> : vector<64x128xf32>
    %28 = tpu.matmul %25, %27, %cst_27 {dimension_numbers = #tpu.dot_dimension_numbers<[1], [0], [0], [1], [0, 0, 1, 1], [], []>} : vector<64x4xbf16>, vector<4x128xbf16>, vector<64x128xf32> -> vector<64x128xf32>
    %c0_28 = arith.constant 0 : index
    %c0_29 = arith.constant 0 : index
    %29 = vector.load %arg7[%c0_28, %c0_29] : memref<64x128xf32, #tpu.memory_space<vmem>>, vector<64x128xf32>
    %30 = arith.addf %29, %28 : vector<64x128xf32>
    %c0_30 = arith.constant 0 : index
    %c0_31 = arith.constant 0 : index
    %31 = vector.load %arg7[%c0_30, %c0_31] : memref<64x128xf32, #tpu.memory_space<vmem>>, vector<64x128xf32>
    tpu.vector_store %arg7[%c0_30, %c0_31], %30 {strides = array<i32>} : memref<64x128xf32, #tpu.memory_space<vmem>>, vector<64x128xf32>,
    %c0_i32_32 = arith.constant 0 : i32
    %32 = arith.addi %0, %c0_i32_32 : i32
    %c0_33 = arith.constant 0 : index
    %c2_34 = arith.constant 2 : index
    %33 = arith.index_cast %32 : i32 to index
    %c0_35 = arith.constant 0 : index
    %c0_36 = arith.constant 0 : index
    %34 = vector.load %arg2[%c0_33, %c2_34, %33, %c0_35, %c0_36] : memref<1x4x9x9x4xbf16, #tpu.memory_space<vmem>>, vector<1x1x8x8x4xbf16>
    %35 = vector.shape_cast %34 : vector<1x1x8x8x4xbf16> to vector<8x8x4xbf16>
    %36 = vector.shape_cast %35 : vector<8x8x4xbf16> to vector<64x4xbf16>
    %c3 = arith.constant 3 : index
    %c0_37 = arith.constant 0 : index
    %c0_38 = arith.constant 0 : index
    %37 = vector.load %arg3[%c3, %c0_37, %c0_38] : memref<9x4x128xbf16, #tpu.memory_space<vmem>>, vector<1x4x128xbf16>
    %38 = vector.shape_cast %37 : vector<1x4x128xbf16> to vector<4x128xbf16>
    %cst_39 = arith.constant dense<0.000000e+00> : vector<64x128xf32>
    %39 = tpu.matmul %36, %38, %cst_39 {dimension_numbers = #tpu.dot_dimension_numbers<[1], [0], [0], [1], [0, 0, 1, 1], [], []>} : vector<64x4xbf16>, vector<4x128xbf16>, vector<64x128xf32> -> vector<64x128xf32>
    %c0_40 = arith.constant 0 : index
    %c0_41 = arith.constant 0 : index
    %40 = vector.load %arg7[%c0_40, %c0_41] : memref<64x128xf32, #tpu.memory_space<vmem>>, vector<64x128xf32>
    %41 = arith.addf %40, %39 : vector<64x128xf32>
    %c0_42 = arith.constant 0 : index
    %c0_43 = arith.constant 0 : index
    %42 = vector.load %arg7[%c0_42, %c0_43] : memref<64x128xf32, #tpu.memory_space<vmem>>, vector<64x128xf32>
    tpu.vector_store %arg7[%c0_42, %c0_43], %41 {strides = array<i32>} : memref<64x128xf32, #tpu.memory_space<vmem>>, vector<64x128xf32>,
    %c0_i32_44 = arith.constant 0 : i32
    %43 = arith.addi %0, %c0_i32_44 : i32
    %c0_45 = arith.constant 0 : index
    %c3_46 = arith.constant 3 : index
    %44 = arith.index_cast %43 : i32 to index
    %c0_47 = arith.constant 0 : index
    %c0_48 = arith.constant 0 : index
    %45 = vector.load %arg2[%c0_45, %c3_46, %44, %c0_47, %c0_48] : memref<1x4x9x9x4xbf16, #tpu.memory_space<vmem>>, vector<1x1x8x8x4xbf16>
    %46 = vector.shape_cast %45 : vector<1x1x8x8x4xbf16> to vector<8x8x4xbf16>
    %47 = vector.shape_cast %46 : vector<8x8x4xbf16> to vector<64x4xbf16>
    %c4 = arith.constant 4 : index
    %c0_49 = arith.constant 0 : index
    %c0_50 = arith.constant 0 : index
    %48 = vector.load %arg3[%c4, %c0_49, %c0_50] : memref<9x4x128xbf16, #tpu.memory_space<vmem>>, vector<1x4x128xbf16>
    %49 = vector.shape_cast %48 : vector<1x4x128xbf16> to vector<4x128xbf16>
    %cst_51 = arith.constant dense<0.000000e+00> : vector<64x128xf32>
    %50 = tpu.matmul %47, %49, %cst_51 {dimension_numbers = #tpu.dot_dimension_numbers<[1], [0], [0], [1], [0, 0, 1, 1], [], []>} : vector<64x4xbf16>, vector<4x128xbf16>, vector<64x128xf32> -> vector<64x128xf32>
    %c0_52 = arith.constant 0 : index
    %c0_53 = arith.constant 0 : index
    %51 = vector.load %arg7[%c0_52, %c0_53] : memref<64x128xf32, #tpu.memory_space<vmem>>, vector<64x128xf32>
    %52 = arith.addf %51, %50 : vector<64x128xf32>
    %c0_54 = arith.constant 0 : index
    %c0_55 = arith.constant 0 : index
    %53 = vector.load %arg7[%c0_54, %c0_55] : memref<64x128xf32, #tpu.memory_space<vmem>>, vector<64x128xf32>
    tpu.vector_store %arg7[%c0_54, %c0_55], %52 {strides = array<i32>} : memref<64x128xf32, #tpu.memory_space<vmem>>, vector<64x128xf32>,
    %c0_i32_56 = arith.constant 0 : i32
    %54 = arith.addi %0, %c0_i32_56 : i32
    %c0_57 = arith.constant 0 : index
    %c2_58 = arith.constant 2 : index
    %55 = arith.index_cast %54 : i32 to index
    %c1_59 = arith.constant 1 : index
    %c0_60 = arith.constant 0 : index
    %56 = vector.load %arg2[%c0_57, %c2_58, %55, %c1_59, %c0_60] : memref<1x4x9x9x4xbf16, #tpu.memory_space<vmem>>, vector<1x1x8x8x4xbf16>
    %57 = vector.shape_cast %56 : vector<1x1x8x8x4xbf16> to vector<8x8x4xbf16>
    %58 = vector.shape_cast %57 : vector<8x8x4xbf16> to vector<64x4xbf16>
    %c5 = arith.constant 5 : index
    %c0_61 = arith.constant 0 : index
    %c0_62 = arith.constant 0 : index
    %59 = vector.load %arg3[%c5, %c0_61, %c0_62] : memref<9x4x128xbf16, #tpu.memory_space<vmem>>, vector<1x4x128xbf16>
    %60 = vector.shape_cast %59 : vector<1x4x128xbf16> to vector<4x128xbf16>
    %cst_63 = arith.constant dense<0.000000e+00> : vector<64x128xf32>
    %61 = tpu.matmul %58, %60, %cst_63 {dimension_numbers = #tpu.dot_dimension_numbers<[1], [0], [0], [1], [0, 0, 1, 1], [], []>} : vector<64x4xbf16>, vector<4x128xbf16>, vector<64x128xf32> -> vector<64x128xf32>
    %c0_64 = arith.constant 0 : index
    %c0_65 = arith.constant 0 : index
    %62 = vector.load %arg7[%c0_64, %c0_65] : memref<64x128xf32, #tpu.memory_space<vmem>>, vector<64x128xf32>
    %63 = arith.addf %62, %61 : vector<64x128xf32>
    %c0_66 = arith.constant 0 : index
    %c0_67 = arith.constant 0 : index
    %64 = vector.load %arg7[%c0_66, %c0_67] : memref<64x128xf32, #tpu.memory_space<vmem>>, vector<64x128xf32>
    tpu.vector_store %arg7[%c0_66, %c0_67], %63 {strides = array<i32>} : memref<64x128xf32, #tpu.memory_space<vmem>>, vector<64x128xf32>,
    %c1_i32 = arith.constant 1 : i32
    %65 = arith.addi %0, %c1_i32 : i32
    %c0_68 = arith.constant 0 : index
    %c0_69 = arith.constant 0 : index
    %66 = arith.index_cast %65 : i32 to index
    %c0_70 = arith.constant 0 : index
    %c0_71 = arith.constant 0 : index
    %67 = vector.load %arg2[%c0_68, %c0_69, %66, %c0_70, %c0_71] : memref<1x4x9x9x4xbf16, #tpu.memory_space<vmem>>, vector<1x1x8x8x4xbf16>
    %68 = vector.shape_cast %67 : vector<1x1x8x8x4xbf16> to vector<8x8x4xbf16>
    %69 = vector.shape_cast %68 : vector<8x8x4xbf16> to vector<64x4xbf16>
    %c6 = arith.constant 6 : index
    %c0_72 = arith.constant 0 : index
    %c0_73 = arith.constant 0 : index
    %70 = vector.load %arg3[%c6, %c0_72, %c0_73] : memref<9x4x128xbf16, #tpu.memory_space<vmem>>, vector<1x4x128xbf16>
    %71 = vector.shape_cast %70 : vector<1x4x128xbf16> to vector<4x128xbf16>
    %cst_74 = arith.constant dense<0.000000e+00> : vector<64x128xf32>
    %72 = tpu.matmul %69, %71, %cst_74 {dimension_numbers = #tpu.dot_dimension_numbers<[1], [0], [0], [1], [0, 0, 1, 1], [], []>} : vector<64x4xbf16>, vector<4x128xbf16>, vector<64x128xf32> -> vector<64x128xf32>
    %c0_75 = arith.constant 0 : index
    %c0_76 = arith.constant 0 : index
    %73 = vector.load %arg7[%c0_75, %c0_76] : memref<64x128xf32, #tpu.memory_space<vmem>>, vector<64x128xf32>
    %74 = arith.addf %73, %72 : vector<64x128xf32>
    %c0_77 = arith.constant 0 : index
    %c0_78 = arith.constant 0 : index
    %75 = vector.load %arg7[%c0_77, %c0_78] : memref<64x128xf32, #tpu.memory_space<vmem>>, vector<64x128xf32>
    tpu.vector_store %arg7[%c0_77, %c0_78], %74 {strides = array<i32>} : memref<64x128xf32, #tpu.memory_space<vmem>>, vector<64x128xf32>,
    %c1_i32_79 = arith.constant 1 : i32
    %76 = arith.addi %0, %c1_i32_79 : i32
    %c0_80 = arith.constant 0 : index
    %c1_81 = arith.constant 1 : index
    %77 = arith.index_cast %76 : i32 to index
    %c0_82 = arith.constant 0 : index
    %c0_83 = arith.constant 0 : index
    %78 = vector.load %arg2[%c0_80, %c1_81, %77, %c0_82, %c0_83] : memref<1x4x9x9x4xbf16, #tpu.memory_space<vmem>>, vector<1x1x8x8x4xbf16>
    %79 = vector.shape_cast %78 : vector<1x1x8x8x4xbf16> to vector<8x8x4xbf16>
    %80 = vector.shape_cast %79 : vector<8x8x4xbf16> to vector<64x4xbf16>
    %c7 = arith.constant 7 : index
    %c0_84 = arith.constant 0 : index
    %c0_85 = arith.constant 0 : index
    %81 = vector.load %arg3[%c7, %c0_84, %c0_85] : memref<9x4x128xbf16, #tpu.memory_space<vmem>>, vector<1x4x128xbf16>
    %82 = vector.shape_cast %81 : vector<1x4x128xbf16> to vector<4x128xbf16>
    %cst_86 = arith.constant dense<0.000000e+00> : vector<64x128xf32>
    %83 = tpu.matmul %80, %82, %cst_86 {dimension_numbers = #tpu.dot_dimension_numbers<[1], [0], [0], [1], [0, 0, 1, 1], [], []>} : vector<64x4xbf16>, vector<4x128xbf16>, vector<64x128xf32> -> vector<64x128xf32>
    %c0_87 = arith.constant 0 : index
    %c0_88 = arith.constant 0 : index
    %84 = vector.load %arg7[%c0_87, %c0_88] : memref<64x128xf32, #tpu.memory_space<vmem>>, vector<64x128xf32>
    %85 = arith.addf %84, %83 : vector<64x128xf32>
    %c0_89 = arith.constant 0 : index
    %c0_90 = arith.constant 0 : index
    %86 = vector.load %arg7[%c0_89, %c0_90] : memref<64x128xf32, #tpu.memory_space<vmem>>, vector<64x128xf32>
    tpu.vector_store %arg7[%c0_89, %c0_90], %85 {strides = array<i32>} : memref<64x128xf32, #tpu.memory_space<vmem>>, vector<64x128xf32>,
    %c1_i32_91 = arith.constant 1 : i32
    %87 = arith.addi %0, %c1_i32_91 : i32
    %c0_92 = arith.constant 0 : index
    %c0_93 = arith.constant 0 : index
    %88 = arith.index_cast %87 : i32 to index
    %c1_94 = arith.constant 1 : index
    %c0_95 = arith.constant 0 : index
    %89 = vector.load %arg2[%c0_92, %c0_93, %88, %c1_94, %c0_95] : memref<1x4x9x9x4xbf16, #tpu.memory_space<vmem>>, vector<1x1x8x8x4xbf16>
    %90 = vector.shape_cast %89 : vector<1x1x8x8x4xbf16> to vector<8x8x4xbf16>
    %91 = vector.shape_cast %90 : vector<8x8x4xbf16> to vector<64x4xbf16>
    %c8 = arith.constant 8 : index
    %c0_96 = arith.constant 0 : index
    %c0_97 = arith.constant 0 : index
    %92 = vector.load %arg3[%c8, %c0_96, %c0_97] : memref<9x4x128xbf16, #tpu.memory_space<vmem>>, vector<1x4x128xbf16>
    %93 = vector.shape_cast %92 : vector<1x4x128xbf16> to vector<4x128xbf16>
    %cst_98 = arith.constant dense<0.000000e+00> : vector<64x128xf32>
    %94 = tpu.matmul %91, %93, %cst_98 {dimension_numbers = #tpu.dot_dimension_numbers<[1], [0], [0], [1], [0, 0, 1, 1], [], []>} : vector<64x4xbf16>, vector<4x128xbf16>, vector<64x128xf32> -> vector<64x128xf32>
    %c0_99 = arith.constant 0 : index
    %c0_100 = arith.constant 0 : index
    %95 = vector.load %arg7[%c0_99, %c0_100] : memref<64x128xf32, #tpu.memory_space<vmem>>, vector<64x128xf32>
    %96 = arith.addf %95, %94 : vector<64x128xf32>
    %c0_101 = arith.constant 0 : index
    %c0_102 = arith.constant 0 : index
    %97 = vector.load %arg7[%c0_101, %c0_102] : memref<64x128xf32, #tpu.memory_space<vmem>>, vector<64x128xf32>
    tpu.vector_store %arg7[%c0_101, %c0_102], %96 {strides = array<i32>} : memref<64x128xf32, #tpu.memory_space<vmem>>, vector<64x128xf32>,
    %c0_103 = arith.constant 0 : index
    %c0_104 = arith.constant 0 : index
    %98 = vector.load %arg7[%c0_103, %c0_104] : memref<64x128xf32, #tpu.memory_space<vmem>>, vector<64x128xf32>
    %c0_105 = arith.constant 0 : index
    %c0_106 = arith.constant 0 : index
    %99 = vector.load %arg4[%c0_105, %c0_106] : memref<1x128xf32, #tpu.memory_space<vmem>>, vector<1x128xf32>
    %100 = vector.broadcast %99 : vector<1x128xf32> to vector<64x128xf32>
    %101 = arith.mulf %98, %100 : vector<64x128xf32>
    %c0_107 = arith.constant 0 : index
    %c0_108 = arith.constant 0 : index
    %102 = vector.load %arg5[%c0_107, %c0_108] : memref<1x128xf32, #tpu.memory_space<vmem>>, vector<1x128xf32>
    %103 = vector.broadcast %102 : vector<1x128xf32> to vector<64x128xf32>
    %104 = arith.addf %101, %103 : vector<64x128xf32>
    %cst_109 = arith.constant 0.000000e+00 : f32
    %105 = vector.broadcast %cst_109 : f32 to vector<64x128xf32>
    %106 = arith.maximumf %104, %105 : vector<64x128xf32>
    %107 = vector.shape_cast %106 : vector<64x128xf32> to vector<1x8x8x128xf32>
    %108 = arith.truncf %107 : vector<1x8x8x128xf32> to vector<1x8x8x128xbf16>
    %c0_110 = arith.constant 0 : index
    %c0_111 = arith.constant 0 : index
    %c0_112 = arith.constant 0 : index
    %c0_113 = arith.constant 0 : index
    %109 = vector.load %arg6[%c0_110, %c0_111, %c0_112, %c0_113] : memref<1x8x8x128xbf16, #tpu.memory_space<vmem>>, vector<1x8x8x128xbf16>
    tpu.vector_store %arg6[%c0_110, %c0_111, %c0_112, %c0_113], %108 {strides = array<i32>} : memref<1x8x8x128xbf16, #tpu.memory_space<vmem>>, vector<1x8x8x128xbf16>,
    return
  }
  func.func @transform_0(%arg0: i32, %arg1: i32) -> (i32, i32, i32, i32, i32) {
    %c0_i32 = arith.constant 0 : i32
    %c0_i32_0 = arith.constant 0 : i32
    %c0_i32_1 = arith.constant 0 : i32
    %c0_i32_2 = arith.constant 0 : i32
    %c0_i32_3 = arith.constant 0 : i32
    return %arg0, %c0_i32, %c0_i32_0, %c0_i32_1, %c0_i32_2 : i32, i32, i32, i32, i32
  }
  func.func @transform_1(%arg0: i32, %arg1: i32) -> (i32, i32, i32) {
    %c0_i32 = arith.constant 0 : i32
    %c0_i32_0 = arith.constant 0 : i32
    %c0_i32_1 = arith.constant 0 : i32
    %c0_i32_2 = arith.constant 0 : i32
    return %c0_i32, %c0_i32_0, %c0_i32_1 : i32, i32, i32
  }
  func.func @transform_2(%arg0: i32, %arg1: i32) -> (i32, i32) {
    %c0_i32 = arith.constant 0 : i32
    %c0_i32_0 = arith.constant 0 : i32
    %c0_i32_1 = arith.constant 0 : i32
    return %c0_i32, %c0_i32_0 : i32, i32
  }
  func.func @transform_3(%arg0: i32, %arg1: i32) -> (i32, i32) {
    %c0_i32 = arith.constant 0 : i32
    %c0_i32_0 = arith.constant 0 : i32
    %c0_i32_1 = arith.constant 0 : i32
    return %c0_i32, %c0_i32_0 : i32, i32
  }
  func.func @transform_4(%arg0: i32, %arg1: i32) -> (i32, i32, i32, i32) {
    %c0_i32 = arith.constant 0 : i32
    %c0_i32_0 = arith.constant 0 : i32
    %c0_i32_1 = arith.constant 0 : i32
    return %arg0, %arg1, %c0_i32, %c0_i32_0 : i32, i32, i32, i32
  }
}

module attributes {stable_mosaic.version = 11 : i64} {
  func.func @_conv_bn_act_kernel(%arg0: i32, %arg1: i32, %arg2: memref<1x1x10x10x128xbf16, #tpu.memory_space<vmem>>, %arg3: memref<9x128x128xbf16, #tpu.memory_space<vmem>>, %arg4: memref<1x128xf32, #tpu.memory_space<vmem>>, %arg5: memref<1x128xf32, #tpu.memory_space<vmem>>, %arg6: memref<1x8x8x128xbf16, #tpu.memory_space<vmem>>, %arg7: memref<1x8x8x128xf32, #tpu.memory_space<vmem>>, %arg8: memref<64x128xf32, #tpu.memory_space<vmem>>) attributes {dimension_semantics = [#tpu.dimension_semantics<parallel>, #tpu.dimension_semantics<parallel>], iteration_bounds = array<i64: 2, 1>, scalar_prefetch = 0 : i64, scratch_operands = 1 : i64, tpu.core_type = #tpu.core_type<tc>, window_params = [{transform_indices = @transform_0, window_bounds = array<i64: 1, 1, 10, 10, 128>}, {pipeline_mode = #tpu.pipeline_mode<synchronous>, transform_indices = @transform_1, window_bounds = array<i64: 9, 128, 128>}, {pipeline_mode = #tpu.pipeline_mode<synchronous>, transform_indices = @transform_2, window_bounds = array<i64: 1, 128>}, {pipeline_mode = #tpu.pipeline_mode<synchronous>, transform_indices = @transform_3, window_bounds = array<i64: 1, 128>}, {transform_indices = @transform_4, window_bounds = array<i64: 1, 8, 8, 128>}, {transform_indices = @transform_5, window_bounds = array<i64: 1, 8, 8, 128>}]} {
    %c8_i32 = arith.constant 8 : i32
    %0 = arith.muli %arg1, %c8_i32 : i32
    %c0_i32 = arith.constant 0 : i32
    %1 = arith.addi %0, %c0_i32 : i32
    %c0 = arith.constant 0 : index
    %c0_0 = arith.constant 0 : index
    %2 = arith.index_cast %1 : i32 to index
    %c0_1 = arith.constant 0 : index
    %c0_2 = arith.constant 0 : index
    %3 = vector.load %arg2[%c0, %c0_0, %2, %c0_1, %c0_2] : memref<1x1x10x10x128xbf16, #tpu.memory_space<vmem>>, vector<1x1x8x8x128xbf16>
    %4 = vector.shape_cast %3 : vector<1x1x8x8x128xbf16> to vector<8x8x128xbf16>
    %5 = vector.shape_cast %4 : vector<8x8x128xbf16> to vector<64x128xbf16>
    %c0_3 = arith.constant 0 : index
    %c0_4 = arith.constant 0 : index
    %c0_5 = arith.constant 0 : index
    %6 = vector.load %arg3[%c0_3, %c0_4, %c0_5] : memref<9x128x128xbf16, #tpu.memory_space<vmem>>, vector<1x128x128xbf16>
    %7 = vector.shape_cast %6 : vector<1x128x128xbf16> to vector<128x128xbf16>
    %cst = arith.constant dense<0.000000e+00> : vector<64x128xf32>
    %8 = tpu.matmul %5, %7, %cst {dimension_numbers = #tpu.dot_dimension_numbers<[1], [0], [0], [1], [0, 0, 1, 1], [], []>} : vector<64x128xbf16>, vector<128x128xbf16>, vector<64x128xf32> -> vector<64x128xf32>
    %c0_6 = arith.constant 0 : index
    %c0_7 = arith.constant 0 : index
    %9 = vector.load %arg8[%c0_6, %c0_7] : memref<64x128xf32, #tpu.memory_space<vmem>>, vector<64x128xf32>
    tpu.vector_store %arg8[%c0_6, %c0_7], %8 {strides = array<i32>} : memref<64x128xf32, #tpu.memory_space<vmem>>, vector<64x128xf32>,
    %c0_i32_8 = arith.constant 0 : i32
    %10 = arith.addi %0, %c0_i32_8 : i32
    %c0_9 = arith.constant 0 : index
    %c0_10 = arith.constant 0 : index
    %11 = arith.index_cast %10 : i32 to index
    %c1 = arith.constant 1 : index
    %c0_11 = arith.constant 0 : index
    %12 = vector.load %arg2[%c0_9, %c0_10, %11, %c1, %c0_11] : memref<1x1x10x10x128xbf16, #tpu.memory_space<vmem>>, vector<1x1x8x8x128xbf16>
    %13 = vector.shape_cast %12 : vector<1x1x8x8x128xbf16> to vector<8x8x128xbf16>
    %14 = vector.shape_cast %13 : vector<8x8x128xbf16> to vector<64x128xbf16>
    %c1_12 = arith.constant 1 : index
    %c0_13 = arith.constant 0 : index
    %c0_14 = arith.constant 0 : index
    %15 = vector.load %arg3[%c1_12, %c0_13, %c0_14] : memref<9x128x128xbf16, #tpu.memory_space<vmem>>, vector<1x128x128xbf16>
    %16 = vector.shape_cast %15 : vector<1x128x128xbf16> to vector<128x128xbf16>
    %cst_15 = arith.constant dense<0.000000e+00> : vector<64x128xf32>
    %17 = tpu.matmul %14, %16, %cst_15 {dimension_numbers = #tpu.dot_dimension_numbers<[1], [0], [0], [1], [0, 0, 1, 1], [], []>} : vector<64x128xbf16>, vector<128x128xbf16>, vector<64x128xf32> -> vector<64x128xf32>
    %c0_16 = arith.constant 0 : index
    %c0_17 = arith.constant 0 : index
    %18 = vector.load %arg8[%c0_16, %c0_17] : memref<64x128xf32, #tpu.memory_space<vmem>>, vector<64x128xf32>
    %19 = arith.addf %18, %17 : vector<64x128xf32>
    %c0_18 = arith.constant 0 : index
    %c0_19 = arith.constant 0 : index
    %20 = vector.load %arg8[%c0_18, %c0_19] : memref<64x128xf32, #tpu.memory_space<vmem>>, vector<64x128xf32>
    tpu.vector_store %arg8[%c0_18, %c0_19], %19 {strides = array<i32>} : memref<64x128xf32, #tpu.memory_space<vmem>>, vector<64x128xf32>,
    %c0_i32_20 = arith.constant 0 : i32
    %21 = arith.addi %0, %c0_i32_20 : i32
    %c0_21 = arith.constant 0 : index
    %c0_22 = arith.constant 0 : index
    %22 = arith.index_cast %21 : i32 to index
    %c2 = arith.constant 2 : index
    %c0_23 = arith.constant 0 : index
    %23 = vector.load %arg2[%c0_21, %c0_22, %22, %c2, %c0_23] : memref<1x1x10x10x128xbf16, #tpu.memory_space<vmem>>, vector<1x1x8x8x128xbf16>
    %24 = vector.shape_cast %23 : vector<1x1x8x8x128xbf16> to vector<8x8x128xbf16>
    %25 = vector.shape_cast %24 : vector<8x8x128xbf16> to vector<64x128xbf16>
    %c2_24 = arith.constant 2 : index
    %c0_25 = arith.constant 0 : index
    %c0_26 = arith.constant 0 : index
    %26 = vector.load %arg3[%c2_24, %c0_25, %c0_26] : memref<9x128x128xbf16, #tpu.memory_space<vmem>>, vector<1x128x128xbf16>
    %27 = vector.shape_cast %26 : vector<1x128x128xbf16> to vector<128x128xbf16>
    %cst_27 = arith.constant dense<0.000000e+00> : vector<64x128xf32>
    %28 = tpu.matmul %25, %27, %cst_27 {dimension_numbers = #tpu.dot_dimension_numbers<[1], [0], [0], [1], [0, 0, 1, 1], [], []>} : vector<64x128xbf16>, vector<128x128xbf16>, vector<64x128xf32> -> vector<64x128xf32>
    %c0_28 = arith.constant 0 : index
    %c0_29 = arith.constant 0 : index
    %29 = vector.load %arg8[%c0_28, %c0_29] : memref<64x128xf32, #tpu.memory_space<vmem>>, vector<64x128xf32>
    %30 = arith.addf %29, %28 : vector<64x128xf32>
    %c0_30 = arith.constant 0 : index
    %c0_31 = arith.constant 0 : index
    %31 = vector.load %arg8[%c0_30, %c0_31] : memref<64x128xf32, #tpu.memory_space<vmem>>, vector<64x128xf32>
    tpu.vector_store %arg8[%c0_30, %c0_31], %30 {strides = array<i32>} : memref<64x128xf32, #tpu.memory_space<vmem>>, vector<64x128xf32>,
    %c1_i32 = arith.constant 1 : i32
    %32 = arith.addi %0, %c1_i32 : i32
    %c0_32 = arith.constant 0 : index
    %c0_33 = arith.constant 0 : index
    %33 = arith.index_cast %32 : i32 to index
    %c0_34 = arith.constant 0 : index
    %c0_35 = arith.constant 0 : index
    %34 = vector.load %arg2[%c0_32, %c0_33, %33, %c0_34, %c0_35] : memref<1x1x10x10x128xbf16, #tpu.memory_space<vmem>>, vector<1x1x8x8x128xbf16>
    %35 = vector.shape_cast %34 : vector<1x1x8x8x128xbf16> to vector<8x8x128xbf16>
    %36 = vector.shape_cast %35 : vector<8x8x128xbf16> to vector<64x128xbf16>
    %c3 = arith.constant 3 : index
    %c0_36 = arith.constant 0 : index
    %c0_37 = arith.constant 0 : index
    %37 = vector.load %arg3[%c3, %c0_36, %c0_37] : memref<9x128x128xbf16, #tpu.memory_space<vmem>>, vector<1x128x128xbf16>
    %38 = vector.shape_cast %37 : vector<1x128x128xbf16> to vector<128x128xbf16>
    %cst_38 = arith.constant dense<0.000000e+00> : vector<64x128xf32>
    %39 = tpu.matmul %36, %38, %cst_38 {dimension_numbers = #tpu.dot_dimension_numbers<[1], [0], [0], [1], [0, 0, 1, 1], [], []>} : vector<64x128xbf16>, vector<128x128xbf16>, vector<64x128xf32> -> vector<64x128xf32>
    %c0_39 = arith.constant 0 : index
    %c0_40 = arith.constant 0 : index
    %40 = vector.load %arg8[%c0_39, %c0_40] : memref<64x128xf32, #tpu.memory_space<vmem>>, vector<64x128xf32>
    %41 = arith.addf %40, %39 : vector<64x128xf32>
    %c0_41 = arith.constant 0 : index
    %c0_42 = arith.constant 0 : index
    %42 = vector.load %arg8[%c0_41, %c0_42] : memref<64x128xf32, #tpu.memory_space<vmem>>, vector<64x128xf32>
    tpu.vector_store %arg8[%c0_41, %c0_42], %41 {strides = array<i32>} : memref<64x128xf32, #tpu.memory_space<vmem>>, vector<64x128xf32>,
    %c1_i32_43 = arith.constant 1 : i32
    %43 = arith.addi %0, %c1_i32_43 : i32
    %c0_44 = arith.constant 0 : index
    %c0_45 = arith.constant 0 : index
    %44 = arith.index_cast %43 : i32 to index
    %c1_46 = arith.constant 1 : index
    %c0_47 = arith.constant 0 : index
    %45 = vector.load %arg2[%c0_44, %c0_45, %44, %c1_46, %c0_47] : memref<1x1x10x10x128xbf16, #tpu.memory_space<vmem>>, vector<1x1x8x8x128xbf16>
    %46 = vector.shape_cast %45 : vector<1x1x8x8x128xbf16> to vector<8x8x128xbf16>
    %47 = vector.shape_cast %46 : vector<8x8x128xbf16> to vector<64x128xbf16>
    %c4 = arith.constant 4 : index
    %c0_48 = arith.constant 0 : index
    %c0_49 = arith.constant 0 : index
    %48 = vector.load %arg3[%c4, %c0_48, %c0_49] : memref<9x128x128xbf16, #tpu.memory_space<vmem>>, vector<1x128x128xbf16>
    %49 = vector.shape_cast %48 : vector<1x128x128xbf16> to vector<128x128xbf16>
    %cst_50 = arith.constant dense<0.000000e+00> : vector<64x128xf32>
    %50 = tpu.matmul %47, %49, %cst_50 {dimension_numbers = #tpu.dot_dimension_numbers<[1], [0], [0], [1], [0, 0, 1, 1], [], []>} : vector<64x128xbf16>, vector<128x128xbf16>, vector<64x128xf32> -> vector<64x128xf32>
    %c0_51 = arith.constant 0 : index
    %c0_52 = arith.constant 0 : index
    %51 = vector.load %arg8[%c0_51, %c0_52] : memref<64x128xf32, #tpu.memory_space<vmem>>, vector<64x128xf32>
    %52 = arith.addf %51, %50 : vector<64x128xf32>
    %c0_53 = arith.constant 0 : index
    %c0_54 = arith.constant 0 : index
    %53 = vector.load %arg8[%c0_53, %c0_54] : memref<64x128xf32, #tpu.memory_space<vmem>>, vector<64x128xf32>
    tpu.vector_store %arg8[%c0_53, %c0_54], %52 {strides = array<i32>} : memref<64x128xf32, #tpu.memory_space<vmem>>, vector<64x128xf32>,
    %c1_i32_55 = arith.constant 1 : i32
    %54 = arith.addi %0, %c1_i32_55 : i32
    %c0_56 = arith.constant 0 : index
    %c0_57 = arith.constant 0 : index
    %55 = arith.index_cast %54 : i32 to index
    %c2_58 = arith.constant 2 : index
    %c0_59 = arith.constant 0 : index
    %56 = vector.load %arg2[%c0_56, %c0_57, %55, %c2_58, %c0_59] : memref<1x1x10x10x128xbf16, #tpu.memory_space<vmem>>, vector<1x1x8x8x128xbf16>
    %57 = vector.shape_cast %56 : vector<1x1x8x8x128xbf16> to vector<8x8x128xbf16>
    %58 = vector.shape_cast %57 : vector<8x8x128xbf16> to vector<64x128xbf16>
    %c5 = arith.constant 5 : index
    %c0_60 = arith.constant 0 : index
    %c0_61 = arith.constant 0 : index
    %59 = vector.load %arg3[%c5, %c0_60, %c0_61] : memref<9x128x128xbf16, #tpu.memory_space<vmem>>, vector<1x128x128xbf16>
    %60 = vector.shape_cast %59 : vector<1x128x128xbf16> to vector<128x128xbf16>
    %cst_62 = arith.constant dense<0.000000e+00> : vector<64x128xf32>
    %61 = tpu.matmul %58, %60, %cst_62 {dimension_numbers = #tpu.dot_dimension_numbers<[1], [0], [0], [1], [0, 0, 1, 1], [], []>} : vector<64x128xbf16>, vector<128x128xbf16>, vector<64x128xf32> -> vector<64x128xf32>
    %c0_63 = arith.constant 0 : index
    %c0_64 = arith.constant 0 : index
    %62 = vector.load %arg8[%c0_63, %c0_64] : memref<64x128xf32, #tpu.memory_space<vmem>>, vector<64x128xf32>
    %63 = arith.addf %62, %61 : vector<64x128xf32>
    %c0_65 = arith.constant 0 : index
    %c0_66 = arith.constant 0 : index
    %64 = vector.load %arg8[%c0_65, %c0_66] : memref<64x128xf32, #tpu.memory_space<vmem>>, vector<64x128xf32>
    tpu.vector_store %arg8[%c0_65, %c0_66], %63 {strides = array<i32>} : memref<64x128xf32, #tpu.memory_space<vmem>>, vector<64x128xf32>,
    %c2_i32 = arith.constant 2 : i32
    %65 = arith.addi %0, %c2_i32 : i32
    %c0_67 = arith.constant 0 : index
    %c0_68 = arith.constant 0 : index
    %66 = arith.index_cast %65 : i32 to index
    %c0_69 = arith.constant 0 : index
    %c0_70 = arith.constant 0 : index
    %67 = vector.load %arg2[%c0_67, %c0_68, %66, %c0_69, %c0_70] : memref<1x1x10x10x128xbf16, #tpu.memory_space<vmem>>, vector<1x1x8x8x128xbf16>
    %68 = vector.shape_cast %67 : vector<1x1x8x8x128xbf16> to vector<8x8x128xbf16>
    %69 = vector.shape_cast %68 : vector<8x8x128xbf16> to vector<64x128xbf16>
    %c6 = arith.constant 6 : index
    %c0_71 = arith.constant 0 : index
    %c0_72 = arith.constant 0 : index
    %70 = vector.load %arg3[%c6, %c0_71, %c0_72] : memref<9x128x128xbf16, #tpu.memory_space<vmem>>, vector<1x128x128xbf16>
    %71 = vector.shape_cast %70 : vector<1x128x128xbf16> to vector<128x128xbf16>
    %cst_73 = arith.constant dense<0.000000e+00> : vector<64x128xf32>
    %72 = tpu.matmul %69, %71, %cst_73 {dimension_numbers = #tpu.dot_dimension_numbers<[1], [0], [0], [1], [0, 0, 1, 1], [], []>} : vector<64x128xbf16>, vector<128x128xbf16>, vector<64x128xf32> -> vector<64x128xf32>
    %c0_74 = arith.constant 0 : index
    %c0_75 = arith.constant 0 : index
    %73 = vector.load %arg8[%c0_74, %c0_75] : memref<64x128xf32, #tpu.memory_space<vmem>>, vector<64x128xf32>
    %74 = arith.addf %73, %72 : vector<64x128xf32>
    %c0_76 = arith.constant 0 : index
    %c0_77 = arith.constant 0 : index
    %75 = vector.load %arg8[%c0_76, %c0_77] : memref<64x128xf32, #tpu.memory_space<vmem>>, vector<64x128xf32>
    tpu.vector_store %arg8[%c0_76, %c0_77], %74 {strides = array<i32>} : memref<64x128xf32, #tpu.memory_space<vmem>>, vector<64x128xf32>,
    %c2_i32_78 = arith.constant 2 : i32
    %76 = arith.addi %0, %c2_i32_78 : i32
    %c0_79 = arith.constant 0 : index
    %c0_80 = arith.constant 0 : index
    %77 = arith.index_cast %76 : i32 to index
    %c1_81 = arith.constant 1 : index
    %c0_82 = arith.constant 0 : index
    %78 = vector.load %arg2[%c0_79, %c0_80, %77, %c1_81, %c0_82] : memref<1x1x10x10x128xbf16, #tpu.memory_space<vmem>>, vector<1x1x8x8x128xbf16>
    %79 = vector.shape_cast %78 : vector<1x1x8x8x128xbf16> to vector<8x8x128xbf16>
    %80 = vector.shape_cast %79 : vector<8x8x128xbf16> to vector<64x128xbf16>
    %c7 = arith.constant 7 : index
    %c0_83 = arith.constant 0 : index
    %c0_84 = arith.constant 0 : index
    %81 = vector.load %arg3[%c7, %c0_83, %c0_84] : memref<9x128x128xbf16, #tpu.memory_space<vmem>>, vector<1x128x128xbf16>
    %82 = vector.shape_cast %81 : vector<1x128x128xbf16> to vector<128x128xbf16>
    %cst_85 = arith.constant dense<0.000000e+00> : vector<64x128xf32>
    %83 = tpu.matmul %80, %82, %cst_85 {dimension_numbers = #tpu.dot_dimension_numbers<[1], [0], [0], [1], [0, 0, 1, 1], [], []>} : vector<64x128xbf16>, vector<128x128xbf16>, vector<64x128xf32> -> vector<64x128xf32>
    %c0_86 = arith.constant 0 : index
    %c0_87 = arith.constant 0 : index
    %84 = vector.load %arg8[%c0_86, %c0_87] : memref<64x128xf32, #tpu.memory_space<vmem>>, vector<64x128xf32>
    %85 = arith.addf %84, %83 : vector<64x128xf32>
    %c0_88 = arith.constant 0 : index
    %c0_89 = arith.constant 0 : index
    %86 = vector.load %arg8[%c0_88, %c0_89] : memref<64x128xf32, #tpu.memory_space<vmem>>, vector<64x128xf32>
    tpu.vector_store %arg8[%c0_88, %c0_89], %85 {strides = array<i32>} : memref<64x128xf32, #tpu.memory_space<vmem>>, vector<64x128xf32>,
    %c2_i32_90 = arith.constant 2 : i32
    %87 = arith.addi %0, %c2_i32_90 : i32
    %c0_91 = arith.constant 0 : index
    %c0_92 = arith.constant 0 : index
    %88 = arith.index_cast %87 : i32 to index
    %c2_93 = arith.constant 2 : index
    %c0_94 = arith.constant 0 : index
    %89 = vector.load %arg2[%c0_91, %c0_92, %88, %c2_93, %c0_94] : memref<1x1x10x10x128xbf16, #tpu.memory_space<vmem>>, vector<1x1x8x8x128xbf16>
    %90 = vector.shape_cast %89 : vector<1x1x8x8x128xbf16> to vector<8x8x128xbf16>
    %91 = vector.shape_cast %90 : vector<8x8x128xbf16> to vector<64x128xbf16>
    %c8 = arith.constant 8 : index
    %c0_95 = arith.constant 0 : index
    %c0_96 = arith.constant 0 : index
    %92 = vector.load %arg3[%c8, %c0_95, %c0_96] : memref<9x128x128xbf16, #tpu.memory_space<vmem>>, vector<1x128x128xbf16>
    %93 = vector.shape_cast %92 : vector<1x128x128xbf16> to vector<128x128xbf16>
    %cst_97 = arith.constant dense<0.000000e+00> : vector<64x128xf32>
    %94 = tpu.matmul %91, %93, %cst_97 {dimension_numbers = #tpu.dot_dimension_numbers<[1], [0], [0], [1], [0, 0, 1, 1], [], []>} : vector<64x128xbf16>, vector<128x128xbf16>, vector<64x128xf32> -> vector<64x128xf32>
    %c0_98 = arith.constant 0 : index
    %c0_99 = arith.constant 0 : index
    %95 = vector.load %arg8[%c0_98, %c0_99] : memref<64x128xf32, #tpu.memory_space<vmem>>, vector<64x128xf32>
    %96 = arith.addf %95, %94 : vector<64x128xf32>
    %c0_100 = arith.constant 0 : index
    %c0_101 = arith.constant 0 : index
    %97 = vector.load %arg8[%c0_100, %c0_101] : memref<64x128xf32, #tpu.memory_space<vmem>>, vector<64x128xf32>
    tpu.vector_store %arg8[%c0_100, %c0_101], %96 {strides = array<i32>} : memref<64x128xf32, #tpu.memory_space<vmem>>, vector<64x128xf32>,
    %c0_102 = arith.constant 0 : index
    %c0_103 = arith.constant 0 : index
    %98 = vector.load %arg8[%c0_102, %c0_103] : memref<64x128xf32, #tpu.memory_space<vmem>>, vector<64x128xf32>
    %c0_104 = arith.constant 0 : index
    %c0_105 = arith.constant 0 : index
    %99 = vector.load %arg4[%c0_104, %c0_105] : memref<1x128xf32, #tpu.memory_space<vmem>>, vector<1x128xf32>
    %100 = vector.broadcast %99 : vector<1x128xf32> to vector<64x128xf32>
    %101 = arith.mulf %98, %100 : vector<64x128xf32>
    %c0_106 = arith.constant 0 : index
    %c0_107 = arith.constant 0 : index
    %102 = vector.load %arg5[%c0_106, %c0_107] : memref<1x128xf32, #tpu.memory_space<vmem>>, vector<1x128xf32>
    %103 = vector.broadcast %102 : vector<1x128xf32> to vector<64x128xf32>
    %104 = arith.addf %101, %103 : vector<64x128xf32>
    %c0_108 = arith.constant 0 : index
    %c0_109 = arith.constant 0 : index
    %c0_110 = arith.constant 0 : index
    %c0_111 = arith.constant 0 : index
    %105 = vector.load %arg6[%c0_108, %c0_109, %c0_110, %c0_111] : memref<1x8x8x128xbf16, #tpu.memory_space<vmem>>, vector<1x8x8x128xbf16>
    %106 = vector.shape_cast %105 : vector<1x8x8x128xbf16> to vector<64x128xbf16>
    %107 = arith.extf %106 : vector<64x128xbf16> to vector<64x128xf32>
    %108 = arith.addf %104, %107 : vector<64x128xf32>
    %cst_112 = arith.constant 0.000000e+00 : f32
    %109 = vector.broadcast %cst_112 : f32 to vector<64x128xf32>
    %110 = arith.maximumf %108, %109 : vector<64x128xf32>
    %111 = vector.shape_cast %110 : vector<64x128xf32> to vector<1x8x8x128xf32>
    %c0_113 = arith.constant 0 : index
    %c0_114 = arith.constant 0 : index
    %c0_115 = arith.constant 0 : index
    %c0_116 = arith.constant 0 : index
    %112 = vector.load %arg7[%c0_113, %c0_114, %c0_115, %c0_116] : memref<1x8x8x128xf32, #tpu.memory_space<vmem>>, vector<1x8x8x128xf32>
    tpu.vector_store %arg7[%c0_113, %c0_114, %c0_115, %c0_116], %111 {strides = array<i32>} : memref<1x8x8x128xf32, #tpu.memory_space<vmem>>, vector<1x8x8x128xf32>,
    return
  }
  func.func @transform_0(%arg0: i32, %arg1: i32) -> (i32, i32, i32, i32, i32) {
    %c0_i32 = arith.constant 0 : i32
    %c0_i32_0 = arith.constant 0 : i32
    %c0_i32_1 = arith.constant 0 : i32
    %c0_i32_2 = arith.constant 0 : i32
    %c0_i32_3 = arith.constant 0 : i32
    return %arg0, %c0_i32, %c0_i32_0, %c0_i32_1, %c0_i32_2 : i32, i32, i32, i32, i32
  }
  func.func @transform_1(%arg0: i32, %arg1: i32) -> (i32, i32, i32) {
    %c0_i32 = arith.constant 0 : i32
    %c0_i32_0 = arith.constant 0 : i32
    %c0_i32_1 = arith.constant 0 : i32
    %c0_i32_2 = arith.constant 0 : i32
    return %c0_i32, %c0_i32_0, %c0_i32_1 : i32, i32, i32
  }
  func.func @transform_2(%arg0: i32, %arg1: i32) -> (i32, i32) {
    %c0_i32 = arith.constant 0 : i32
    %c0_i32_0 = arith.constant 0 : i32
    %c0_i32_1 = arith.constant 0 : i32
    return %c0_i32, %c0_i32_0 : i32, i32
  }
  func.func @transform_3(%arg0: i32, %arg1: i32) -> (i32, i32) {
    %c0_i32 = arith.constant 0 : i32
    %c0_i32_0 = arith.constant 0 : i32
    %c0_i32_1 = arith.constant 0 : i32
    return %c0_i32, %c0_i32_0 : i32, i32
  }
  func.func @transform_4(%arg0: i32, %arg1: i32) -> (i32, i32, i32, i32) {
    %c0_i32 = arith.constant 0 : i32
    %c0_i32_0 = arith.constant 0 : i32
    %c0_i32_1 = arith.constant 0 : i32
    return %arg0, %arg1, %c0_i32, %c0_i32_0 : i32, i32, i32, i32
  }
  func.func @transform_5(%arg0: i32, %arg1: i32) -> (i32, i32, i32, i32) {
    %c0_i32 = arith.constant 0 : i32
    %c0_i32_0 = arith.constant 0 : i32
    %c0_i32_1 = arith.constant 0 : i32
    return %arg0, %arg1, %c0_i32, %c0_i32_0 : i32, i32, i32, i32
  }
}

module attributes {stable_mosaic.version = 11 : i64} {
  func.func @_conv_bn_act_kernel(%arg0: i32, %arg1: i32, %arg2: memref<1x1x8x8x4xbf16, #tpu.memory_space<vmem>>, %arg3: memref<1x4x128xbf16, #tpu.memory_space<vmem>>, %arg4: memref<1x128xf32, #tpu.memory_space<vmem>>, %arg5: memref<1x128xf32, #tpu.memory_space<vmem>>, %arg6: memref<1x8x8x128xbf16, #tpu.memory_space<vmem>>, %arg7: memref<64x128xf32, #tpu.memory_space<vmem>>) attributes {dimension_semantics = [#tpu.dimension_semantics<parallel>, #tpu.dimension_semantics<parallel>], iteration_bounds = array<i64: 2, 1>, scalar_prefetch = 0 : i64, scratch_operands = 1 : i64, tpu.core_type = #tpu.core_type<tc>, window_params = [{transform_indices = @transform_0, window_bounds = array<i64: 1, 1, 8, 8, 4>}, {pipeline_mode = #tpu.pipeline_mode<synchronous>, transform_indices = @transform_1, window_bounds = array<i64: 1, 4, 128>}, {pipeline_mode = #tpu.pipeline_mode<synchronous>, transform_indices = @transform_2, window_bounds = array<i64: 1, 128>}, {pipeline_mode = #tpu.pipeline_mode<synchronous>, transform_indices = @transform_3, window_bounds = array<i64: 1, 128>}, {transform_indices = @transform_4, window_bounds = array<i64: 1, 8, 8, 128>}]} {
    %c8_i32 = arith.constant 8 : i32
    %0 = arith.muli %arg1, %c8_i32 : i32
    %c0_i32 = arith.constant 0 : i32
    %1 = arith.addi %0, %c0_i32 : i32
    %c0 = arith.constant 0 : index
    %c0_0 = arith.constant 0 : index
    %2 = arith.index_cast %1 : i32 to index
    %c0_1 = arith.constant 0 : index
    %c0_2 = arith.constant 0 : index
    %3 = vector.load %arg2[%c0, %c0_0, %2, %c0_1, %c0_2] : memref<1x1x8x8x4xbf16, #tpu.memory_space<vmem>>, vector<1x1x8x8x4xbf16>
    %4 = vector.shape_cast %3 : vector<1x1x8x8x4xbf16> to vector<8x8x4xbf16>
    %5 = vector.shape_cast %4 : vector<8x8x4xbf16> to vector<64x4xbf16>
    %c0_3 = arith.constant 0 : index
    %c0_4 = arith.constant 0 : index
    %c0_5 = arith.constant 0 : index
    %6 = vector.load %arg3[%c0_3, %c0_4, %c0_5] : memref<1x4x128xbf16, #tpu.memory_space<vmem>>, vector<1x4x128xbf16>
    %7 = vector.shape_cast %6 : vector<1x4x128xbf16> to vector<4x128xbf16>
    %cst = arith.constant dense<0.000000e+00> : vector<64x128xf32>
    %8 = tpu.matmul %5, %7, %cst {dimension_numbers = #tpu.dot_dimension_numbers<[1], [0], [0], [1], [0, 0, 1, 1], [], []>} : vector<64x4xbf16>, vector<4x128xbf16>, vector<64x128xf32> -> vector<64x128xf32>
    %c0_6 = arith.constant 0 : index
    %c0_7 = arith.constant 0 : index
    %9 = vector.load %arg7[%c0_6, %c0_7] : memref<64x128xf32, #tpu.memory_space<vmem>>, vector<64x128xf32>
    tpu.vector_store %arg7[%c0_6, %c0_7], %8 {strides = array<i32>} : memref<64x128xf32, #tpu.memory_space<vmem>>, vector<64x128xf32>,
    %c0_8 = arith.constant 0 : index
    %c0_9 = arith.constant 0 : index
    %10 = vector.load %arg7[%c0_8, %c0_9] : memref<64x128xf32, #tpu.memory_space<vmem>>, vector<64x128xf32>
    %c0_10 = arith.constant 0 : index
    %c0_11 = arith.constant 0 : index
    %11 = vector.load %arg4[%c0_10, %c0_11] : memref<1x128xf32, #tpu.memory_space<vmem>>, vector<1x128xf32>
    %12 = vector.broadcast %11 : vector<1x128xf32> to vector<64x128xf32>
    %13 = arith.mulf %10, %12 : vector<64x128xf32>
    %c0_12 = arith.constant 0 : index
    %c0_13 = arith.constant 0 : index
    %14 = vector.load %arg5[%c0_12, %c0_13] : memref<1x128xf32, #tpu.memory_space<vmem>>, vector<1x128xf32>
    %15 = vector.broadcast %14 : vector<1x128xf32> to vector<64x128xf32>
    %16 = arith.addf %13, %15 : vector<64x128xf32>
    %17 = vector.shape_cast %16 : vector<64x128xf32> to vector<1x8x8x128xf32>
    %18 = arith.truncf %17 : vector<1x8x8x128xf32> to vector<1x8x8x128xbf16>
    %c0_14 = arith.constant 0 : index
    %c0_15 = arith.constant 0 : index
    %c0_16 = arith.constant 0 : index
    %c0_17 = arith.constant 0 : index
    %19 = vector.load %arg6[%c0_14, %c0_15, %c0_16, %c0_17] : memref<1x8x8x128xbf16, #tpu.memory_space<vmem>>, vector<1x8x8x128xbf16>
    tpu.vector_store %arg6[%c0_14, %c0_15, %c0_16, %c0_17], %18 {strides = array<i32>} : memref<1x8x8x128xbf16, #tpu.memory_space<vmem>>, vector<1x8x8x128xbf16>,
    return
  }
  func.func @transform_0(%arg0: i32, %arg1: i32) -> (i32, i32, i32, i32, i32) {
    %c0_i32 = arith.constant 0 : i32
    %c0_i32_0 = arith.constant 0 : i32
    %c0_i32_1 = arith.constant 0 : i32
    %c0_i32_2 = arith.constant 0 : i32
    %c0_i32_3 = arith.constant 0 : i32
    return %arg0, %c0_i32, %c0_i32_0, %c0_i32_1, %c0_i32_2 : i32, i32, i32, i32, i32
  }
  func.func @transform_1(%arg0: i32, %arg1: i32) -> (i32, i32, i32) {
    %c0_i32 = arith.constant 0 : i32
    %c0_i32_0 = arith.constant 0 : i32
    %c0_i32_1 = arith.constant 0 : i32
    %c0_i32_2 = arith.constant 0 : i32
    return %c0_i32, %c0_i32_0, %c0_i32_1 : i32, i32, i32
  }
  func.func @transform_2(%arg0: i32, %arg1: i32) -> (i32, i32) {
    %c0_i32 = arith.constant 0 : i32
    %c0_i32_0 = arith.constant 0 : i32
    %c0_i32_1 = arith.constant 0 : i32
    return %c0_i32, %c0_i32_0 : i32, i32
  }
  func.func @transform_3(%arg0: i32, %arg1: i32) -> (i32, i32) {
    %c0_i32 = arith.constant 0 : i32
    %c0_i32_0 = arith.constant 0 : i32
    %c0_i32_1 = arith.constant 0 : i32
    return %c0_i32, %c0_i32_0 : i32, i32
  }
  func.func @transform_4(%arg0: i32, %arg1: i32) -> (i32, i32, i32, i32) {
    %c0_i32 = arith.constant 0 : i32
    %c0_i32_0 = arith.constant 0 : i32
    %c0_i32_1 = arith.constant 0 : i32
    return %arg0, %arg1, %c0_i32, %c0_i32_0 : i32, i32, i32, i32
  }
}

</mosaic_0001>

<llo_original>
// kernel: basic_block_forward.4
$region0: #{basic_block_forward.4}
  #allocation0 [shape = 'u32[]', space=smem, size = 0x4, offset = 0x4, fixed_abs, tag = 'smem constant byte address 0x4 - core index']
  #allocation1 [shape = 'u32[144,128]{1,0:T(1,128)}', space=vmem, size = 0x12000, scoped, tag = 'internal scratch']
  #allocation2 [shape = 'f32[64,128]{1,0:T(8,128)}', space=vmem, size = 0x8000, scoped, tag = 'scratch operand']
  %s0 = inlined_call_operand.vmem [shape: bf16[2,1,8,8,4], index: 0, kind: input, shape index: {}]
  %s1 = inlined_call_operand.vmem [shape: bf16[1,4,128], index: 1, kind: input, shape index: {}]
  %s2 = inlined_call_operand.vmem [shape: f32[1,128], index: 2, kind: input, shape index: {}]
  %s3 = inlined_call_operand.vmem [shape: f32[1,128], index: 3, kind: input, shape index: {}]
  %s4 = inlined_call_operand.vmem [shape: bf16[2,8,8,128], index: 4, kind: output, shape index: {}]
  %s5 = sld [smem:[#allocation0]]
  $region49: #{basic_block_forward.4} parent=0
    _
  %s7 = ssub.s32 1, %s5
  %s8 = scalar_select 0, %s7, %s5
  loop: start=0, step=1, limit=4
  $region2: #{basic_block_forward.4} parent=0 // loop_pre_header
    _
  $region3: #{basic_block_forward.4} parent=0 // loop_header
    %s10 = sphi 0, %s14
    %p11 = scmp.ge.s32.totalorder %s10, 4
    %s17 = sphi 0, %s29
    %s18 = sphi 0, %s25
    %s19 = sphi 0, %s17
    %s20 = sphi 0, %s18
    %s21 = sphi 0, %s19
    %s22 = sphi 0, %s20
    %s32 = sphi 0, %s34
    %s35 = sphi 0, %s32
    %s36 = sphi 0, %s35
    %s52 = sphi 0, %s36
    %s56 = sphi 0, %s56
    %s58 = sphi 0, %s56
    %s59 = sphi 0, %s58
    %s73 = sphi 0, %s59
    %s77 = sphi 0, %s77
    %s79 = sphi 0, %s77
    %s80 = sphi 0, %s79
    %s94 = sphi 0, %s80
    %s98 = sphi 0, %s98
    %s100 = sphi 0, %s98
    %s101 = sphi 0, %s100
    %s115 = sphi 0, %s101
    %s123 = sphi 0, %s125
    %s126 = sphi 0, %s123
    %s127 = sphi 0, %s126
    %s143 = sphi 0, %s127
  $region4: #{basic_block_forward.4} parent=0 // loop_header_branch
    %13 = sbr.rel (%p11) target = $region8
  $region5: #{basic_block_forward.4} parent=0 // loop_body
    %s15 = ssub.s32 %s10, 1
    %s16 = ssub.s32 %s10, 2
    %s23 = sadd.s32 1, %s18
    %p24 = scmp.ge.s32.totalorder %s23, 1
    %s25 = scalar_select %p24, 0, %s23
    %s26 = sadd.s32 1, %s17
    %s27 = scalar_select %p24, %s26, %s17
    %p28 = scmp.ge.s32.totalorder %s27, 2
    %s29 = scalar_select %p28, 0, %s27
    %s30 = ssub.s32 %s17, %s29
    %p31 = scmp.eq.s32.totalorder %s30, 0
    %s33 = sadd.s32 %s32, 1
    %s34 = scalar_select %p31, %s32, %s33
    %p37 = pneg %p31
    %p38 = scmp.eq.s32.totalorder %s10, 1
    %p39 = por %p37, %p38
    %p40 = scmp.ne.s32.totalorder %s32, %s35
    %p41 = scmp.eq.s32.totalorder %s10, 0
    %p42 = por %p40, %p41
    %p43 = scmp.ne.s32.totalorder %s32, %s35
    %p44 = scmp.eq.s32.totalorder %s15, 1
    %p45 = por %p43, %p44
    %p46 = scmp.ne.s32.totalorder %s35, %s36
    %p47 = scmp.eq.s32.totalorder %s15, 0
    %p48 = por %p46, %p47
    %p49 = scmp.ne.s32.totalorder %s35, %s36
    %p50 = scmp.eq.s32.totalorder %s16, 1
    %p51 = por %p49, %p50
    %p53 = scmp.ne.s32.totalorder %s36, %s52
    %p54 = scmp.eq.s32.totalorder %s16, 0
    %p55 = por %p53, %p54
    %s57 = sadd.s32 %s56, 1
    %p60 = scmp.eq.s32.totalorder %s10, 1
    %p61 = scmp.ne.s32.totalorder %s56, %s58
    %p62 = scmp.eq.s32.totalorder %s10, 0
    %p63 = por %p61, %p62
    %p64 = scmp.ne.s32.totalorder %s56, %s58
    %p65 = scmp.eq.s32.totalorder %s15, 1
    %p66 = por %p64, %p65
    %p67 = scmp.ne.s32.totalorder %s58, %s59
    %p68 = scmp.eq.s32.totalorder %s15, 0
    %p69 = por %p67, %p68
    %p70 = scmp.ne.s32.totalorder %s58, %s59
    %p71 = scmp.eq.s32.totalorder %s16, 1
    %p72 = por %p70, %p71
    %p74 = scmp.ne.s32.totalorder %s59, %s73
    %p75 = scmp.eq.s32.totalorder %s16, 0
    %p76 = por %p74, %p75
    %s78 = sadd.s32 %s77, 1
    %p81 = scmp.eq.s32.totalorder %s10, 1
    %p82 = scmp.ne.s32.totalorder %s77, %s79
    %p83 = scmp.eq.s32.totalorder %s10, 0
    %p84 = por %p82, %p83
    %p85 = scmp.ne.s32.totalorder %s77, %s79
    %p86 = scmp.eq.s32.totalorder %s15, 1
    %p87 = por %p85, %p86
    %p88 = scmp.ne.s32.totalorder %s79, %s80
    %p89 = scmp.eq.s32.totalorder %s15, 0
    %p90 = por %p88, %p89
    %p91 = scmp.ne.s32.totalorder %s79, %s80
    %p92 = scmp.eq.s32.totalorder %s16, 1
    %p93 = por %p91, %p92
    %p95 = scmp.ne.s32.totalorder %s80, %s94
    %p96 = scmp.eq.s32.totalorder %s16, 0
    %p97 = por %p95, %p96
    %s99 = sadd.s32 %s98, 1
    %p102 = scmp.eq.s32.totalorder %s10, 1
    %p103 = scmp.ne.s32.totalorder %s98, %s100
    %p104 = scmp.eq.s32.totalorder %s10, 0
    %p105 = por %p103, %p104
    %p106 = scmp.ne.s32.totalorder %s98, %s100
    %p107 = scmp.eq.s32.totalorder %s15, 1
    %p108 = por %p106, %p107
    %p109 = scmp.ne.s32.totalorder %s100, %s101
    %p110 = scmp.eq.s32.totalorder %s15, 0
    %p111 = por %p109, %p110
    %p112 = scmp.ne.s32.totalorder %s100, %s101
    %p113 = scmp.eq.s32.totalorder %s16, 1
    %p114 = por %p112, %p113
    %p116 = scmp.ne.s32.totalorder %s101, %s115
    %p117 = scmp.eq.s32.totalorder %s16, 0
    %p118 = por %p116, %p117
    %s119 = ssub.s32 %s17, %s29
    %s120 = ssub.s32 %s18, %s25
    %s121 = sor.u32 %s119, %s120
    %p122 = scmp.eq.s32.totalorder %s121, 0
    %s124 = sadd.s32 %s123, 1
    %s125 = scalar_select %p122, %s123, %s124
    %p128 = pneg %p122
    %p129 = scmp.eq.s32.totalorder %s10, 1
    %p130 = por %p128, %p129
    %p131 = scmp.ne.s32.totalorder %s123, %s126
    %p132 = scmp.eq.s32.totalorder %s10, 0
    %p133 = por %p131, %p132
    %p134 = scmp.ne.s32.totalorder %s123, %s126
    %p135 = scmp.eq.s32.totalorder %s15, 1
    %p136 = por %p134, %p135
    %p137 = scmp.ne.s32.totalorder %s126, %s127
    %p138 = scmp.eq.s32.totalorder %s15, 0
    %p139 = por %p137, %p138
    %p140 = scmp.ne.s32.totalorder %s126, %s127
    %p141 = scmp.eq.s32.totalorder %s16, 1
    %p142 = por %p140, %p141
    %p144 = scmp.ne.s32.totalorder %s127, %s143
    %p145 = scmp.eq.s32.totalorder %s16, 0
    %p146 = por %p144, %p145
    %p147 = scmp.le.s32.totalorder 1, %s10
    %p148 = scmp.lt.s32.totalorder %s10, 3
    %p149 = pnand %p147, %p148
    %p150 = pneg %p149
    // Predicated region
    $region9: #{basic_block_forward.4} parent=5 // pred_check
      _
    $region10: #{basic_block_forward.4} parent=5 // pred_check_branch
      %152 = sbr.rel (%p149) target = $region12
    $region11: #{basic_block_forward.4} parent=5 // pred_region
      %s153 = ssub.s32 %s10, 1
      // Predicated region
      $region13: #{basic_block_forward.4} parent=11 // pred_check
        %p154 = pneg %p69
      $region14: #{basic_block_forward.4} parent=11 // pred_check_branch
        %156 = sbr.rel (%p154) target = $region16
      $region15: #{basic_block_forward.4} parent=11 // pred_region
        _
      $region16: #{basic_block_forward.4} parent=11 // pred_fallthru
        _
      // Predicated region
      $region17: #{basic_block_forward.4} parent=11 // pred_check
        %p157 = pneg %p90
      $region18: #{basic_block_forward.4} parent=11 // pred_check_branch
        %159 = sbr.rel (%p157) target = $region20
      $region19: #{basic_block_forward.4} parent=11 // pred_region
        _
      $region20: #{basic_block_forward.4} parent=11 // pred_fallthru
        _
      // Predicated region
      $region21: #{basic_block_forward.4} parent=11 // pred_check
        %p160 = pneg %p111
      $region22: #{basic_block_forward.4} parent=11 // pred_check_branch
        %162 = sbr.rel (%p160) target = $region24
      $region23: #{basic_block_forward.4} parent=11 // pred_region
        _
      $region24: #{basic_block_forward.4} parent=11 // pred_fallthru
        _
    $region12: #{basic_block_forward.4} parent=5 // pred_fallthru
      _
    %p163 = scmp.lt.s32.totalorder %s10, 2
    // Predicated region
    $region25: #{basic_block_forward.4} parent=5 // pred_check
      %p164 = pneg %p163
    $region26: #{basic_block_forward.4} parent=5 // pred_check_branch
      %166 = sbr.rel (%p164) target = $region28
    $region27: #{basic_block_forward.4} parent=5 // pred_region
      // Predicated region
      $region29: #{basic_block_forward.4} parent=27 // pred_check
        %p167 = pneg %p42
      $region30: #{basic_block_forward.4} parent=27 // pred_check_branch
        %169 = sbr.rel (%p167) target = $region32
      $region31: #{basic_block_forward.4} parent=27 // pred_region
        %p170 = scmp.lt.s32.totalorder %s17, 1
        %s171 = scalar_select %p170, %s17, 1
        %s172 = smul.addr %s171, 8
        %s173 = smul.addr %s172, 4
        %s174 = scalar_lea.vmem %s0, %s173
      $region32: #{basic_block_forward.4} parent=27 // pred_fallthru
        _
    $region28: #{basic_block_forward.4} parent=5 // pred_fallthru
      _
    %p175 = scmp.le.s32.totalorder 1, %s10
    %p176 = scmp.lt.s32.totalorder %s10, 3
    %p177 = pnand %p175, %p176
    %p178 = pneg %p177
    // Predicated region
    $region33: #{basic_block_forward.4} parent=5 // pred_check
      _
    $region34: #{basic_block_forward.4} parent=5 // pred_check_branch
      %180 = sbr.rel (%p177) target = $region36
    $region35: #{basic_block_forward.4} parent=5 // pred_region
      %s181 = ssub.s32 %s10, 1
      %p182 = scmp.lt.s32.totalorder %s19, 1
      %s183 = scalar_select %p182, %s19, 1
      %s184 = smul.addr %s183, 8
      %s185 = smul.addr %s184, 4
      %s186 = scalar_lea.vmem %s0, %s185
      %p187 = pneg %p48
      %p188 = pneg %p45
      %p189 = pneg %p69
      %p190 = pneg %p66
      %p191 = pneg %p90
      %p192 = pneg %p87
      %p193 = pneg %p111
      %p194 = pneg %p108
      %p195 = pneg %p139
      %p196 = pneg %p136
      %s197 = smul.u32 8, %s20
      %p198 = scmp.lt.s32.totalorder %s19, 1
      %s199 = scalar_select %p198, %s19, 1
      %p200 = scmp.lt.s32.totalorder %s197, 7
      %s201 = scalar_select %p200, %s197, 7
      %s202 = smul.addr %s199, 8
      %s203 = sadd.s32 %s201, %s202
      %s204 = smul.addr %s203, 4
      %s205 = scalar_lea.vmem %s4, %s204
      %p206 = scmp.lt.s32.totalorder %s19, 1
      %s207 = scalar_select %p206, %s19, 1
      %s208 = smul.addr %s207, 8
      %s209 = smul.addr %s208, 4
      %s210 = scalar_lea.vmem %s0, %s209
      %s211 = smul.u32 8, %s20
      %p212 = scmp.lt.s32.totalorder %s19, 1
      %s213 = scalar_select %p212, %s19, 1
      %p214 = scmp.lt.s32.totalorder %s211, 7
      %s215 = scalar_select %p214, %s211, 7
      %s216 = smul.addr %s213, 8
      %s217 = sadd.s32 %s215, %s216
      %s218 = smul.addr %s217, 4
      %s219 = scalar_lea.vmem %s4, %s218
      %s220 = smul.u32 8, %s20
      %s222 = smul.u32 %s20, 8
      %s223 = smul.addr %s222, 4
      %s224 = scalar_lea.vmem %s210, %s223
      %v225 = vld [vmem:[%s224] sm:$0xf]
      %v226 = vld [vmem:[%s224 + $0x4] sm:$0xf]
      %v227 = vld [vmem:[%s224 + $0x8] sm:$0xf]
      %v228 = vld [vmem:[%s224 + $0xc] sm:$0xf]
      %v229 = vld [vmem:[%s224 + $0x10] sm:$0xf]
      %v230 = vld [vmem:[%s224 + $0x14] sm:$0xf]
      %v231 = vld [vmem:[%s224 + $0x18] sm:$0xf]
      %v232 = vld [vmem:[%s224 + $0x1c] sm:$0xf]
      %v233 = vld [vmem:[%s1] sm:$0x3]
      %v242 = vunpack.c.l.b16 %v225
      %v243 = vunpack.c.l.b16 %v226
      %v244 = vunpack.c.l.b16 %v227
      %v245 = vunpack.c.l.b16 %v228
      %v246 = vunpack.c.l.b16 %v229
      %v247 = vunpack.c.l.b16 %v230
      %v248 = vunpack.c.l.b16 %v231
      %v249 = vunpack.c.l.b16 %v232
      %v250 = vpack.c.b16 %v243, %v242
      %v251 = vpack.c.b16 %v245, %v244
      %v252 = vpack.c.b16 %v247, %v246
      %v253 = vpack.c.b16 %v249, %v248
      %vm254 = vcmask 31744
      %v256 = vsel %vm254, %v250, 0
      %v259 = vsel %vm254, %v251, 0
      %v262 = vsel %vm254, %v252, 0
      %v265 = vsel %vm254, %v253, 0
      %vm267 = vcmask 1041408
      %v269 = vsel %vm267, %v233, 0
      %271 = vmatprep.subr.bf16.mxu0 0
      %272 = vmatpush1.bf16.msra.mxu0 0
      %273 = vmatprep.subr.bf16.mxu0 0
      %274 = vmatpush1.bf16.msra.mxu0 0
      %275 = vmatprep.subr.bf16.mxu0 0
      %276 = vmatpush1.bf16.msra.mxu0 0
      %277 = vmatprep.subr.bf16.mxu0 0
      %278 = vmatpush1.bf16.msra.mxu0 0
      %279 = vmatprep.subr.bf16.mxu0 0
      %280 = vmatpush1.bf16.msra.mxu0 0
      %281 = vmatprep.subr.bf16.mxu0 0
      %282 = vmatpush1.bf16.msra.mxu0 0
      %283 = vmatprep.subr.bf16.mxu0 0
      %284 = vmatpush1.bf16.msra.mxu0 0
      %285 = vmatprep.subr.bf16.mxu0 0
      %286 = vmatpush1.bf16.msra.mxu0 %v269
      %287 = vmatprep.subr.bf16.mxu0 0
      %288 = vmatpush2.bf16.msra.mxu0 0
      %289 = vmatprep.subr.bf16.mxu0 0
      %290 = vmatpush2.bf16.msra.mxu0 0
      %291 = vmatprep.subr.bf16.mxu0 0
      %292 = vmatpush2.bf16.msra.mxu0 0
      %293 = vmatprep.subr.bf16.mxu0 0
      %294 = vmatpush2.bf16.msra.mxu0 0
      %295 = vmatprep.subr.bf16.mxu0 0
      %296 = vmatpush2.bf16.msra.mxu0 0
      %297 = vmatprep.subr.bf16.mxu0 0
      %298 = vmatpush2.bf16.msra.mxu0 0
      %299 = vmatprep.subr.bf16.mxu0 0
      %300 = vmatpush2.bf16.msra.mxu0 0
      %301 = vmatprep.subr.bf16.mxu0 0
      %302 = vmatpush2.bf16.msra.mxu0 0
      %303 = vmatprep.mubr.bf16.mxu0 0
      %304 = vmatmul.mubr.bf16.gmra.mxu0 %v256
      %v305 = vpop.f32.mrf.mxu0
      %v306 = vadd.f32 0.0, %v305
      %v307 = vpop.f32.mrf.mxu0
      %v308 = vpop.f32.mrf.mxu0
      %v309 = vadd.f32 0.0, %v308
      %v310 = vpop.f32.mrf.mxu0
      %311 = vmatprep.mubr.bf16.mxu0 0
      %312 = vmatmul.mubr.bf16.gmra.mxu0 %v259
      %v313 = vpop.f32.mrf.mxu0
      %v314 = vadd.f32 0.0, %v313
      %v315 = vpop.f32.mrf.mxu0
      %v316 = vpop.f32.mrf.mxu0
      %v317 = vadd.f32 0.0, %v316
      %v318 = vpop.f32.mrf.mxu0
      %319 = vmatprep.mubr.bf16.mxu0 0
      %320 = vmatmul.mubr.bf16.gmra.mxu0 %v262
      %v321 = vpop.f32.mrf.mxu0
      %v322 = vadd.f32 0.0, %v321
      %v323 = vpop.f32.mrf.mxu0
      %v324 = vpop.f32.mrf.mxu0
      %v325 = vadd.f32 0.0, %v324
      %v326 = vpop.f32.mrf.mxu0
      %327 = vmatprep.mubr.bf16.mxu0 0
      %328 = vmatmul.mubr.bf16.gmra.mxu0 %v265
      %v329 = vpop.f32.mrf.mxu0
      %v330 = vadd.f32 0.0, %v329
      %v331 = vpop.f32.mrf.mxu0
      %v332 = vpop.f32.mrf.mxu0
      %v333 = vadd.f32 0.0, %v332
      %v334 = vpop.f32.mrf.mxu0
      %335 = vdwg.mxu0
      %336 = vst [vmem:[#allocation2] sm:$0xff] %v306
      %337 = vst [vmem:[#allocation2 + $0x8] sm:$0xff] %v309
      %338 = vst [vmem:[#allocation2 + $0x10] sm:$0xff] %v314
      %339 = vst [vmem:[#allocation2 + $0x18] sm:$0xff] %v317
      %340 = vst [vmem:[#allocation2 + $0x20] sm:$0xff] %v322
      %341 = vst [vmem:[#allocation2 + $0x28] sm:$0xff] %v325
      %342 = vst [vmem:[#allocation2 + $0x30] sm:$0xff] %v330
      %343 = vst [vmem:[#allocation2 + $0x38] sm:$0xff] %v333
      %v344 = vld [vmem:[#allocation2] sm:$0xff]
      %v345 = vld [vmem:[#allocation2 + $0x8] sm:$0xff]
      %v346 = vld [vmem:[#allocation2 + $0x10] sm:$0xff]
      %v347 = vld [vmem:[#allocation2 + $0x18] sm:$0xff]
      %v348 = vld [vmem:[#allocation2 + $0x20] sm:$0xff]
      %v349 = vld [vmem:[#allocation2 + $0x28] sm:$0xff]
      %v350 = vld [vmem:[#allocation2 + $0x30] sm:$0xff]
      %v351 = vld [vmem:[#allocation2 + $0x38] sm:$0xff]
      %v352 = vld [vmem:[%s2] sm:$0x1]
      %v354 = vlaneseq
      %v355 = vshrl.u32 %v354, 7
      %v356 = vsub.s32 0, %v355
      %v357 = vrot.slane %v352, %v356
      %v359 = vmul.f32 %v344, %v357
      %v360 = vmul.f32 %v345, %v357
      %v361 = vmul.f32 %v346, %v357
      %v362 = vmul.f32 %v347, %v357
      %v363 = vmul.f32 %v348, %v357
      %v364 = vmul.f32 %v349, %v357
      %v365 = vmul.f32 %v350, %v357
      %v366 = vmul.f32 %v351, %v357
      %v367 = vld [vmem:[%s3] sm:$0x1]
      %v369 = vlaneseq
      %v370 = vshrl.u32 %v369, 7
      %v371 = vsub.s32 0, %v370
      %v372 = vrot.slane %v367, %v371
      %v374 = vadd.f32 %v359, %v372
      %v375 = vadd.f32 %v360, %v372
      %v376 = vadd.f32 %v361, %v372
      %v377 = vadd.f32 %v362, %v372
      %v378 = vadd.f32 %v363, %v372
      %v379 = vadd.f32 %v364, %v372
      %v380 = vadd.f32 %v365, %v372
      %v381 = vadd.f32 %v366, %v372
      %v382 = vpack.c.bf16 %v374, %v374
      %v383 = vpack.c.bf16 %v375, %v375
      %v384 = vpack.c.bf16 %v376, %v376
      %v385 = vpack.c.bf16 %v377, %v377
      %v386 = vpack.c.bf16 %v378, %v378
      %v387 = vpack.c.bf16 %v379, %v379
      %v388 = vpack.c.bf16 %v380, %v380
      %v389 = vpack.c.bf16 %v381, %v381
      %390 = vst [vmem:[%s219] sm:$0xf] %v382
      %391 = vst [vmem:[%s219 + $0x4] sm:$0xf] %v383
      %392 = vst [vmem:[%s219 + $0x8] sm:$0xf] %v384
      %393 = vst [vmem:[%s219 + $0xc] sm:$0xf] %v385
      %394 = vst [vmem:[%s219 + $0x10] sm:$0xf] %v386
      %395 = vst [vmem:[%s219 + $0x14] sm:$0xf] %v387
      %396 = vst [vmem:[%s219 + $0x18] sm:$0xf] %v388
      %397 = vst [vmem:[%s219 + $0x1c] sm:$0xf] %v389
      %s398 = smul.u32 8, %s20
      %p399 = scmp.lt.s32.totalorder %s19, 1
      %s400 = scalar_select %p399, %s19, 1
      %p401 = scmp.lt.s32.totalorder %s398, 7
      %s402 = scalar_select %p401, %s398, 7
      %s403 = smul.addr %s400, 8
      %s404 = sadd.s32 %s402, %s403
      %s405 = smul.addr %s404, 4
      %s406 = scalar_lea.vmem %s4, %s405
      // Predicated region
      $region37: #{basic_block_forward.4} parent=35 // pred_check
        %p407 = pneg %p136
      $region38: #{basic_block_forward.4} parent=35 // pred_check_branch
        %409 = sbr.rel (%p407) target = $region40
      $region39: #{basic_block_forward.4} parent=35 // pred_region
        %s410 = smul.u32 8, %s20
      $region40: #{basic_block_forward.4} parent=35 // pred_fallthru
        _
    $region36: #{basic_block_forward.4} parent=5 // pred_fallthru
      _
    %p411 = scmp.le.s32.totalorder 2, %s10
    // Predicated region
    $region41: #{basic_block_forward.4} parent=5 // pred_check
      %p412 = pneg %p411
    $region42: #{basic_block_forward.4} parent=5 // pred_check_branch
      %414 = sbr.rel (%p412) target = $region44
    $region43: #{basic_block_forward.4} parent=5 // pred_region
      %s415 = ssub.s32 %s10, 2
      // Predicated region
      $region45: #{basic_block_forward.4} parent=43 // pred_check
        %p416 = pneg %p142
      $region46: #{basic_block_forward.4} parent=43 // pred_check_branch
        %418 = sbr.rel (%p416) target = $region48
      $region47: #{basic_block_forward.4} parent=43 // pred_region
        %s419 = smul.u32 8, %s22
        %p420 = scmp.lt.s32.totalorder %s21, 1
        %s421 = scalar_select %p420, %s21, 1
        %p422 = scmp.lt.s32.totalorder %s419, 7
        %s423 = scalar_select %p422, %s419, 7
        %s424 = smul.addr %s421, 8
        %s425 = sadd.s32 %s423, %s424
        %s426 = smul.addr %s425, 4
        %s427 = scalar_lea.vmem %s4, %s426
      $region48: #{basic_block_forward.4} parent=43 // pred_fallthru
        _
    $region44: #{basic_block_forward.4} parent=5 // pred_fallthru
      _
  $region6: #{basic_block_forward.4} parent=0 // loop_footer
    %s14 = sadd.s32 1, %s10
  $region7: #{basic_block_forward.4} parent=0 // loop_footer_branch
    %9 = sbr.rel target = $region3
  $region8: #{basic_block_forward.4} parent=0 // loop_exit
    _

// kernel: basic_block_forward.3
$region0: #{basic_block_forward.3}
  #allocation0 [shape = 'u32[]', space=smem, size = 0x4, offset = 0x4, fixed_abs, tag = 'smem constant byte address 0x4 - core index']
  #allocation1 [shape = 'u32[144,128]{1,0:T(1,128)}', space=vmem, size = 0x12000, scoped, tag = 'internal scratch']
  #allocation2 [shape = 'f32[64,128]{1,0:T(8,128)}', space=vmem, size = 0x8000, scoped, tag = 'scratch operand']
  %s0 = inlined_call_operand.vmem [shape: bf16[2,4,9,9,4], index: 0, kind: input, shape index: {}]
  %s1 = inlined_call_operand.vmem [shape: bf16[9,4,128], index: 1, kind: input, shape index: {}]
  %s2 = inlined_call_operand.vmem [shape: f32[1,128], index: 2, kind: input, shape index: {}]
  %s3 = inlined_call_operand.vmem [shape: f32[1,128], index: 3, kind: input, shape index: {}]
  %s4 = inlined_call_operand.vmem [shape: bf16[2,8,8,128], index: 4, kind: output, shape index: {}]
  %s5 = sld [smem:[#allocation0]]
  $region49: #{basic_block_forward.3} parent=0
    _
  %s7 = ssub.s32 1, %s5
  %s8 = scalar_select 0, %s7, %s5
  loop: start=0, step=1, limit=4
  $region2: #{basic_block_forward.3} parent=0 // loop_pre_header
    _
  $region3: #{basic_block_forward.3} parent=0 // loop_header
    %s10 = sphi 0, %s14
    %p11 = scmp.ge.s32.totalorder %s10, 4
    %s17 = sphi 0, %s29
    %s18 = sphi 0, %s25
    %s19 = sphi 0, %s17
    %s20 = sphi 0, %s18
    %s21 = sphi 0, %s19
    %s22 = sphi 0, %s20
    %s32 = sphi 0, %s34
    %s35 = sphi 0, %s32
    %s36 = sphi 0, %s35
    %s52 = sphi 0, %s36
    %s56 = sphi 0, %s56
    %s58 = sphi 0, %s56
    %s59 = sphi 0, %s58
    %s73 = sphi 0, %s59
    %s77 = sphi 0, %s77
    %s79 = sphi 0, %s77
    %s80 = sphi 0, %s79
    %s94 = sphi 0, %s80
    %s98 = sphi 0, %s98
    %s100 = sphi 0, %s98
    %s101 = sphi 0, %s100
    %s115 = sphi 0, %s101
    %s123 = sphi 0, %s125
    %s126 = sphi 0, %s123
    %s127 = sphi 0, %s126
    %s143 = sphi 0, %s127
  $region4: #{basic_block_forward.3} parent=0 // loop_header_branch
    %13 = sbr.rel (%p11) target = $region8
  $region5: #{basic_block_forward.3} parent=0 // loop_body
    %s15 = ssub.s32 %s10, 1
    %s16 = ssub.s32 %s10, 2
    %s23 = sadd.s32 1, %s18
    %p24 = scmp.ge.s32.totalorder %s23, 1
    %s25 = scalar_select %p24, 0, %s23
    %s26 = sadd.s32 1, %s17
    %s27 = scalar_select %p24, %s26, %s17
    %p28 = scmp.ge.s32.totalorder %s27, 2
    %s29 = scalar_select %p28, 0, %s27
    %s30 = ssub.s32 %s17, %s29
    %p31 = scmp.eq.s32.totalorder %s30, 0
    %s33 = sadd.s32 %s32, 1
    %s34 = scalar_select %p31, %s32, %s33
    %p37 = pneg %p31
    %p38 = scmp.eq.s32.totalorder %s10, 1
    %p39 = por %p37, %p38
    %p40 = scmp.ne.s32.totalorder %s32, %s35
    %p41 = scmp.eq.s32.totalorder %s10, 0
    %p42 = por %p40, %p41
    %p43 = scmp.ne.s32.totalorder %s32, %s35
    %p44 = scmp.eq.s32.totalorder %s15, 1
    %p45 = por %p43, %p44
    %p46 = scmp.ne.s32.totalorder %s35, %s36
    %p47 = scmp.eq.s32.totalorder %s15, 0
    %p48 = por %p46, %p47
    %p49 = scmp.ne.s32.totalorder %s35, %s36
    %p50 = scmp.eq.s32.totalorder %s16, 1
    %p51 = por %p49, %p50
    %p53 = scmp.ne.s32.totalorder %s36, %s52
    %p54 = scmp.eq.s32.totalorder %s16, 0
    %p55 = por %p53, %p54
    %s57 = sadd.s32 %s56, 1
    %p60 = scmp.eq.s32.totalorder %s10, 1
    %p61 = scmp.ne.s32.totalorder %s56, %s58
    %p62 = scmp.eq.s32.totalorder %s10, 0
    %p63 = por %p61, %p62
    %p64 = scmp.ne.s32.totalorder %s56, %s58
    %p65 = scmp.eq.s32.totalorder %s15, 1
    %p66 = por %p64, %p65
    %p67 = scmp.ne.s32.totalorder %s58, %s59
    %p68 = scmp.eq.s32.totalorder %s15, 0
    %p69 = por %p67, %p68
    %p70 = scmp.ne.s32.totalorder %s58, %s59
    %p71 = scmp.eq.s32.totalorder %s16, 1
    %p72 = por %p70, %p71
    %p74 = scmp.ne.s32.totalorder %s59, %s73
    %p75 = scmp.eq.s32.totalorder %s16, 0
    %p76 = por %p74, %p75
    %s78 = sadd.s32 %s77, 1
    %p81 = scmp.eq.s32.totalorder %s10, 1
    %p82 = scmp.ne.s32.totalorder %s77, %s79
    %p83 = scmp.eq.s32.totalorder %s10, 0
    %p84 = por %p82, %p83
    %p85 = scmp.ne.s32.totalorder %s77, %s79
    %p86 = scmp.eq.s32.totalorder %s15, 1
    %p87 = por %p85, %p86
    %p88 = scmp.ne.s32.totalorder %s79, %s80
    %p89 = scmp.eq.s32.totalorder %s15, 0
    %p90 = por %p88, %p89
    %p91 = scmp.ne.s32.totalorder %s79, %s80
    %p92 = scmp.eq.s32.totalorder %s16, 1
    %p93 = por %p91, %p92
    %p95 = scmp.ne.s32.totalorder %s80, %s94
    %p96 = scmp.eq.s32.totalorder %s16, 0
    %p97 = por %p95, %p96
    %s99 = sadd.s32 %s98, 1
    %p102 = scmp.eq.s32.totalorder %s10, 1
    %p103 = scmp.ne.s32.totalorder %s98, %s100
    %p104 = scmp.eq.s32.totalorder %s10, 0
    %p105 = por %p103, %p104
    %p106 = scmp.ne.s32.totalorder %s98, %s100
    %p107 = scmp.eq.s32.totalorder %s15, 1
    %p108 = por %p106, %p107
    %p109 = scmp.ne.s32.totalorder %s100, %s101
    %p110 = scmp.eq.s32.totalorder %s15, 0
    %p111 = por %p109, %p110
    %p112 = scmp.ne.s32.totalorder %s100, %s101
    %p113 = scmp.eq.s32.totalorder %s16, 1
    %p114 = por %p112, %p113
    %p116 = scmp.ne.s32.totalorder %s101, %s115
    %p117 = scmp.eq.s32.totalorder %s16, 0
    %p118 = por %p116, %p117
    %s119 = ssub.s32 %s17, %s29
    %s120 = ssub.s32 %s18, %s25
    %s121 = sor.u32 %s119, %s120
    %p122 = scmp.eq.s32.totalorder %s121, 0
    %s124 = sadd.s32 %s123, 1
    %s125 = scalar_select %p122, %s123, %s124
    %p128 = pneg %p122
    %p129 = scmp.eq.s32.totalorder %s10, 1
    %p130 = por %p128, %p129
    %p131 = scmp.ne.s32.totalorder %s123, %s126
    %p132 = scmp.eq.s32.totalorder %s10, 0
    %p133 = por %p131, %p132
    %p134 = scmp.ne.s32.totalorder %s123, %s126
    %p135 = scmp.eq.s32.totalorder %s15, 1
    %p136 = por %p134, %p135
    %p137 = scmp.ne.s32.totalorder %s126, %s127
    %p138 = scmp.eq.s32.totalorder %s15, 0
    %p139 = por %p137, %p138
    %p140 = scmp.ne.s32.totalorder %s126, %s127
    %p141 = scmp.eq.s32.totalorder %s16, 1
    %p142 = por %p140, %p141
    %p144 = scmp.ne.s32.totalorder %s127, %s143
    %p145 = scmp.eq.s32.totalorder %s16, 0
    %p146 = por %p144, %p145
    %p147 = scmp.le.s32.totalorder 1, %s10
    %p148 = scmp.lt.s32.totalorder %s10, 3
    %p149 = pnand %p147, %p148
    %p150 = pneg %p149
    // Predicated region
    $region9: #{basic_block_forward.3} parent=5 // pred_check
      _
    $region10: #{basic_block_forward.3} parent=5 // pred_check_branch
      %152 = sbr.rel (%p149) target = $region12
    $region11: #{basic_block_forward.3} parent=5 // pred_region
      %s153 = ssub.s32 %s10, 1
      // Predicated region
      $region13: #{basic_block_forward.3} parent=11 // pred_check
        %p154 = pneg %p69
      $region14: #{basic_block_forward.3} parent=11 // pred_check_branch
        %156 = sbr.rel (%p154) target = $region16
      $region15: #{basic_block_forward.3} parent=11 // pred_region
        _
      $region16: #{basic_block_forward.3} parent=11 // pred_fallthru
        _
      // Predicated region
      $region17: #{basic_block_forward.3} parent=11 // pred_check
        %p157 = pneg %p90
      $region18: #{basic_block_forward.3} parent=11 // pred_check_branch
        %159 = sbr.rel (%p157) target = $region20
      $region19: #{basic_block_forward.3} parent=11 // pred_region
        _
      $region20: #{basic_block_forward.3} parent=11 // pred_fallthru
        _
      // Predicated region
      $region21: #{basic_block_forward.3} parent=11 // pred_check
        %p160 = pneg %p111
      $region22: #{basic_block_forward.3} parent=11 // pred_check_branch
        %162 = sbr.rel (%p160) target = $region24
      $region23: #{basic_block_forward.3} parent=11 // pred_region
        _
      $region24: #{basic_block_forward.3} parent=11 // pred_fallthru
        _
    $region12: #{basic_block_forward.3} parent=5 // pred_fallthru
      _
    %p163 = scmp.lt.s32.totalorder %s10, 2
    // Predicated region
    $region25: #{basic_block_forward.3} parent=5 // pred_check
      %p164 = pneg %p163
    $region26: #{basic_block_forward.3} parent=5 // pred_check_branch
      %166 = sbr.rel (%p164) target = $region28
    $region27: #{basic_block_forward.3} parent=5 // pred_region
      // Predicated region
      $region29: #{basic_block_forward.3} parent=27 // pred_check
        %p167 = pneg %p42
      $region30: #{basic_block_forward.3} parent=27 // pred_check_branch
        %169 = sbr.rel (%p167) target = $region32
      $region31: #{basic_block_forward.3} parent=27 // pred_region
        %p170 = scmp.lt.s32.totalorder %s17, 1
        %s171 = scalar_select %p170, %s17, 1
        %s172 = smul.addr %s171, 72
        %s173 = smul.addr %s172, 4
        %s174 = scalar_lea.vmem %s0, %s173
      $region32: #{basic_block_forward.3} parent=27 // pred_fallthru
        _
    $region28: #{basic_block_forward.3} parent=5 // pred_fallthru
      _
    %p175 = scmp.le.s32.totalorder 1, %s10
    %p176 = scmp.lt.s32.totalorder %s10, 3
    %p177 = pnand %p175, %p176
    %p178 = pneg %p177
    // Predicated region
    $region33: #{basic_block_forward.3} parent=5 // pred_check
      _
    $region34: #{basic_block_forward.3} parent=5 // pred_check_branch
      %180 = sbr.rel (%p177) target = $region36
    $region35: #{basic_block_forward.3} parent=5 // pred_region
      %s181 = ssub.s32 %s10, 1
      %p182 = scmp.lt.s32.totalorder %s19, 1
      %s183 = scalar_select %p182, %s19, 1
      %s184 = smul.addr %s183, 72
      %s185 = smul.addr %s184, 4
      %s186 = scalar_lea.vmem %s0, %s185
      %p187 = pneg %p48
      %p188 = pneg %p45
      %p189 = pneg %p69
      %p190 = pneg %p66
      %p191 = pneg %p90
      %p192 = pneg %p87
      %p193 = pneg %p111
      %p194 = pneg %p108
      %p195 = pneg %p139
      %p196 = pneg %p136
      %s197 = smul.u32 8, %s20
      %p198 = scmp.lt.s32.totalorder %s19, 1
      %s199 = scalar_select %p198, %s19, 1
      %p200 = scmp.lt.s32.totalorder %s197, 7
      %s201 = scalar_select %p200, %s197, 7
      %s202 = smul.addr %s199, 8
      %s203 = sadd.s32 %s201, %s202
      %s204 = smul.addr %s203, 4
      %s205 = scalar_lea.vmem %s4, %s204
      %p206 = scmp.lt.s32.totalorder %s19, 1
      %s207 = scalar_select %p206, %s19, 1
      %s208 = smul.addr %s207, 72
      %s209 = smul.addr %s208, 4
      %s210 = scalar_lea.vmem %s0, %s209
      %s211 = smul.u32 8, %s20
      %p212 = scmp.lt.s32.totalorder %s19, 1
      %s213 = scalar_select %p212, %s19, 1
      %p214 = scmp.lt.s32.totalorder %s211, 7
      %s215 = scalar_select %p214, %s211, 7
      %s216 = smul.addr %s213, 8
      %s217 = sadd.s32 %s215, %s216
      %s218 = smul.addr %s217, 4
      %s219 = scalar_lea.vmem %s4, %s218
      %s220 = smul.u32 8, %s20
      %s222 = smul.u32 %s20, 8
      %s223 = smul.u32 %s222, 2
      %s224 = smul.addr %s223, 4
      %s225 = scalar_lea.vmem %s210, %s224
      %v226 = vld [vmem:[%s225] sm:$0xf]
      %v227 = vld [vmem:[%s225 + $0x8] sm:$0xf]
      %v228 = vld [vmem:[%s225 + $0x10] sm:$0xf]
      %v229 = vld [vmem:[%s225 + $0x18] sm:$0xf]
      %v230 = vld [vmem:[%s225 + $0x20] sm:$0xf]
      %v231 = vld [vmem:[%s225 + $0x28] sm:$0xf]
      %v232 = vld [vmem:[%s225 + $0x30] sm:$0xf]
      %v233 = vld [vmem:[%s225 + $0x38] sm:$0xf]
      %v234 = vld [vmem:[%s1] sm:$0x3]
      %v243 = vunpack.c.l.b16 %v226
      %v244 = vunpack.c.l.b16 %v227
      %v245 = vunpack.c.l.b16 %v228
      %v246 = vunpack.c.l.b16 %v229
      %v247 = vunpack.c.l.b16 %v230
      %v248 = vunpack.c.l.b16 %v231
      %v249 = vunpack.c.l.b16 %v232
      %v250 = vunpack.c.l.b16 %v233
      %v251 = vpack.c.b16 %v244, %v243
      %v252 = vpack.c.b16 %v246, %v245
      %v253 = vpack.c.b16 %v248, %v247
      %v254 = vpack.c.b16 %v250, %v249
      %vm255 = vcmask 31744
      %v257 = vsel %vm255, %v251, 0
      %v260 = vsel %vm255, %v252, 0
      %v263 = vsel %vm255, %v253, 0
      %v266 = vsel %vm255, %v254, 0
      %vm268 = vcmask 1041408
      %v270 = vsel %vm268, %v234, 0
      %272 = vmatprep.subr.bf16.mxu0 0
      %273 = vmatpush1.bf16.msra.mxu0 0
      %274 = vmatprep.subr.bf16.mxu0 0
      %275 = vmatpush1.bf16.msra.mxu0 0
      %276 = vmatprep.subr.bf16.mxu0 0
      %277 = vmatpush1.bf16.msra.mxu0 0
      %278 = vmatprep.subr.bf16.mxu0 0
      %279 = vmatpush1.bf16.msra.mxu0 0
      %280 = vmatprep.subr.bf16.mxu0 0
      %281 = vmatpush1.bf16.msra.mxu0 0
      %282 = vmatprep.subr.bf16.mxu0 0
      %283 = vmatpush1.bf16.msra.mxu0 0
      %284 = vmatprep.subr.bf16.mxu0 0
      %285 = vmatpush1.bf16.msra.mxu0 0
      %286 = vmatprep.subr.bf16.mxu0 0
      %287 = vmatpush1.bf16.msra.mxu0 %v270
      %288 = vmatprep.subr.bf16.mxu0 0
      %289 = vmatpush2.bf16.msra.mxu0 0
      %290 = vmatprep.subr.bf16.mxu0 0
      %291 = vmatpush2.bf16.msra.mxu0 0
      %292 = vmatprep.subr.bf16.mxu0 0
      %293 = vmatpush2.bf16.msra.mxu0 0
      %294 = vmatprep.subr.bf16.mxu0 0
      %295 = vmatpush2.bf16.msra.mxu0 0
      %296 = vmatprep.subr.bf16.mxu0 0
      %297 = vmatpush2.bf16.msra.mxu0 0
      %298 = vmatprep.subr.bf16.mxu0 0
      %299 = vmatpush2.bf16.msra.mxu0 0
      %300 = vmatprep.subr.bf16.mxu0 0
      %301 = vmatpush2.bf16.msra.mxu0 0
      %302 = vmatprep.subr.bf16.mxu0 0
      %303 = vmatpush2.bf16.msra.mxu0 0
      %304 = vmatprep.mubr.bf16.mxu0 0
      %305 = vmatmul.mubr.bf16.gmra.mxu0 %v257
      %v306 = vpop.f32.mrf.mxu0
      %v307 = vadd.f32 0.0, %v306
      %v308 = vpop.f32.mrf.mxu0
      %v309 = vpop.f32.mrf.mxu0
      %v310 = vadd.f32 0.0, %v309
      %v311 = vpop.f32.mrf.mxu0
      %312 = vmatprep.mubr.bf16.mxu0 0
      %313 = vmatmul.mubr.bf16.gmra.mxu0 %v260
      %v314 = vpop.f32.mrf.mxu0
      %v315 = vadd.f32 0.0, %v314
      %v316 = vpop.f32.mrf.mxu0
      %v317 = vpop.f32.mrf.mxu0
      %v318 = vadd.f32 0.0, %v317
      %v319 = vpop.f32.mrf.mxu0
      %320 = vmatprep.mubr.bf16.mxu0 0
      %321 = vmatmul.mubr.bf16.gmra.mxu0 %v263
      %v322 = vpop.f32.mrf.mxu0
      %v323 = vadd.f32 0.0, %v322
      %v324 = vpop.f32.mrf.mxu0
      %v325 = vpop.f32.mrf.mxu0
      %v326 = vadd.f32 0.0, %v325
      %v327 = vpop.f32.mrf.mxu0
      %328 = vmatprep.mubr.bf16.mxu0 0
      %329 = vmatmul.mubr.bf16.gmra.mxu0 %v266
      %v330 = vpop.f32.mrf.mxu0
      %v331 = vadd.f32 0.0, %v330
      %v332 = vpop.f32.mrf.mxu0
      %v333 = vpop.f32.mrf.mxu0
      %v334 = vadd.f32 0.0, %v333
      %v335 = vpop.f32.mrf.mxu0
      %336 = vdwg.mxu0
      %337 = vst [vmem:[#allocation2] sm:$0xff] %v307
      %338 = vst [vmem:[#allocation2 + $0x8] sm:$0xff] %v310
      %339 = vst [vmem:[#allocation2 + $0x10] sm:$0xff] %v315
      %340 = vst [vmem:[#allocation2 + $0x18] sm:$0xff] %v318
      %341 = vst [vmem:[#allocation2 + $0x20] sm:$0xff] %v323
      %342 = vst [vmem:[#allocation2 + $0x28] sm:$0xff] %v326
      %343 = vst [vmem:[#allocation2 + $0x30] sm:$0xff] %v331
      %344 = vst [vmem:[#allocation2 + $0x38] sm:$0xff] %v334
      %s345 = sadd.s32 %s223, 18
      %s346 = smul.addr %s345, 4
      %s347 = scalar_lea.vmem %s210, %s346
      %v348 = vld [vmem:[%s347] sm:$0xf]
      %v349 = vld [vmem:[%s347 + $0x8] sm:$0xf]
      %v350 = vld [vmem:[%s347 + $0x10] sm:$0xf]
      %v351 = vld [vmem:[%s347 + $0x18] sm:$0xf]
      %v352 = vld [vmem:[%s347 + $0x20] sm:$0xf]
      %v353 = vld [vmem:[%s347 + $0x28] sm:$0xf]
      %v354 = vld [vmem:[%s347 + $0x30] sm:$0xf]
      %v355 = vld [vmem:[%s347 + $0x38] sm:$0xf]
      %s356 = scalar_lea.vmem %s1, 2
      %v357 = vld [vmem:[%s356] sm:$0x3]
      %v366 = vunpack.c.l.b16 %v348
      %v367 = vunpack.c.l.b16 %v349
      %v368 = vunpack.c.l.b16 %v350
      %v369 = vunpack.c.l.b16 %v351
      %v370 = vunpack.c.l.b16 %v352
      %v371 = vunpack.c.l.b16 %v353
      %v372 = vunpack.c.l.b16 %v354
      %v373 = vunpack.c.l.b16 %v355
      %v374 = vpack.c.b16 %v367, %v366
      %v375 = vpack.c.b16 %v369, %v368
      %v376 = vpack.c.b16 %v371, %v370
      %v377 = vpack.c.b16 %v373, %v372
      %v379 = vsel %vm255, %v374, 0
      %v382 = vsel %vm255, %v375, 0
      %v385 = vsel %vm255, %v376, 0
      %v388 = vsel %vm255, %v377, 0
      %v391 = vsel %vm268, %v357, 0
      %393 = vmatprep.subr.bf16.mxu0 0
      %394 = vmatpush1.bf16.msra.mxu0 0
      %395 = vmatprep.subr.bf16.mxu0 0
      %396 = vmatpush1.bf16.msra.mxu0 0
      %397 = vmatprep.subr.bf16.mxu0 0
      %398 = vmatpush1.bf16.msra.mxu0 0
      %399 = vmatprep.subr.bf16.mxu0 0
      %400 = vmatpush1.bf16.msra.mxu0 0
      %401 = vmatprep.subr.bf16.mxu0 0
      %402 = vmatpush1.bf16.msra.mxu0 0
      %403 = vmatprep.subr.bf16.mxu0 0
      %404 = vmatpush1.bf16.msra.mxu0 0
      %405 = vmatprep.subr.bf16.mxu0 0
      %406 = vmatpush1.bf16.msra.mxu0 0
      %407 = vmatprep.subr.bf16.mxu0 0
      %408 = vmatpush1.bf16.msra.mxu0 %v391
      %409 = vmatprep.subr.bf16.mxu0 0
      %410 = vmatpush2.bf16.msra.mxu0 0
      %411 = vmatprep.subr.bf16.mxu0 0
      %412 = vmatpush2.bf16.msra.mxu0 0
      %413 = vmatprep.subr.bf16.mxu0 0
      %414 = vmatpush2.bf16.msra.mxu0 0
      %415 = vmatprep.subr.bf16.mxu0 0
      %416 = vmatpush2.bf16.msra.mxu0 0
      %417 = vmatprep.subr.bf16.mxu0 0
      %418 = vmatpush2.bf16.msra.mxu0 0
      %419 = vmatprep.subr.bf16.mxu0 0
      %420 = vmatpush2.bf16.msra.mxu0 0
      %421 = vmatprep.subr.bf16.mxu0 0
      %422 = vmatpush2.bf16.msra.mxu0 0
      %423 = vmatprep.subr.bf16.mxu0 0
      %424 = vmatpush2.bf16.msra.mxu0 0
      %425 = vmatprep.mubr.bf16.mxu0 0
      %426 = vmatmul.mubr.bf16.gmra.mxu0 %v379
      %v427 = vpop.f32.mrf.mxu0
      %v428 = vadd.f32 0.0, %v427
      %v429 = vpop.f32.mrf.mxu0
      %v430 = vpop.f32.mrf.mxu0
      %v431 = vadd.f32 0.0, %v430
      %v432 = vpop.f32.mrf.mxu0
      %433 = vmatprep.mubr.bf16.mxu0 0
      %434 = vmatmul.mubr.bf16.gmra.mxu0 %v382
      %v435 = vpop.f32.mrf.mxu0
      %v436 = vadd.f32 0.0, %v435
      %v437 = vpop.f32.mrf.mxu0
      %v438 = vpop.f32.mrf.mxu0
      %v439 = vadd.f32 0.0, %v438
      %v440 = vpop.f32.mrf.mxu0
      %441 = vmatprep.mubr.bf16.mxu0 0
      %442 = vmatmul.mubr.bf16.gmra.mxu0 %v385
      %v443 = vpop.f32.mrf.mxu0
      %v444 = vadd.f32 0.0, %v443
      %v445 = vpop.f32.mrf.mxu0
      %v446 = vpop.f32.mrf.mxu0
      %v447 = vadd.f32 0.0, %v446
      %v448 = vpop.f32.mrf.mxu0
      %449 = vmatprep.mubr.bf16.mxu0 0
      %450 = vmatmul.mubr.bf16.gmra.mxu0 %v388
      %v451 = vpop.f32.mrf.mxu0
      %v452 = vadd.f32 0.0, %v451
      %v453 = vpop.f32.mrf.mxu0
      %v454 = vpop.f32.mrf.mxu0
      %v455 = vadd.f32 0.0, %v454
      %v456 = vpop.f32.mrf.mxu0
      %457 = vdwg.mxu0
      %v458 = vld [vmem:[#allocation2] sm:$0xff]
      %v459 = vld [vmem:[#allocation2 + $0x8] sm:$0xff]
      %v460 = vld [vmem:[#allocation2 + $0x10] sm:$0xff]
      %v461 = vld [vmem:[#allocation2 + $0x18] sm:$0xff]
      %v462 = vld [vmem:[#allocation2 + $0x20] sm:$0xff]
      %v463 = vld [vmem:[#allocation2 + $0x28] sm:$0xff]
      %v464 = vld [vmem:[#allocation2 + $0x30] sm:$0xff]
      %v465 = vld [vmem:[#allocation2 + $0x38] sm:$0xff]
      %v466 = vadd.f32 %v458, %v428
      %v467 = vadd.f32 %v459, %v431
      %v468 = vadd.f32 %v460, %v436
      %v469 = vadd.f32 %v461, %v439
      %v470 = vadd.f32 %v462, %v444
      %v471 = vadd.f32 %v463, %v447
      %v472 = vadd.f32 %v464, %v452
      %v473 = vadd.f32 %v465, %v455
      %474 = vst [vmem:[#allocation2] sm:$0xff] %v466
      %475 = vst [vmem:[#allocation2 + $0x8] sm:$0xff] %v467
      %476 = vst [vmem:[#allocation2 + $0x10] sm:$0xff] %v468
      %477 = vst [vmem:[#allocation2 + $0x18] sm:$0xff] %v469
      %478 = vst [vmem:[#allocation2 + $0x20] sm:$0xff] %v470
      %479 = vst [vmem:[#allocation2 + $0x28] sm:$0xff] %v471
      %480 = vst [vmem:[#allocation2 + $0x30] sm:$0xff] %v472
      %481 = vst [vmem:[#allocation2 + $0x38] sm:$0xff] %v473
      %v482 = vld [vmem:[%s225] sm:$0xf]
      %v483 = vld [vmem:[%s225 + $0x4] sm:$0x1]
      %v484 = vld [vmem:[%s225 + $0x8] sm:$0xf]
      %v485 = vld [vmem:[%s225 + $0xc] sm:$0x1]
      %v486 = vld [vmem:[%s225 + $0x10] sm:$0xf]
      %v487 = vld [vmem:[%s225 + $0x14] sm:$0x1]
      %v488 = vld [vmem:[%s225 + $0x18] sm:$0xf]
      %v489 = vld [vmem:[%s225 + $0x1c] sm:$0x1]
      %v490 = vld [vmem:[%s225 + $0x20] sm:$0xf]
      %v491 = vld [vmem:[%s225 + $0x24] sm:$0x1]
      %v492 = vld [vmem:[%s225 + $0x28] sm:$0xf]
      %v493 = vld [vmem:[%s225 + $0x2c] sm:$0x1]
      %v494 = vld [vmem:[%s225 + $0x30] sm:$0xf]
      %v495 = vld [vmem:[%s225 + $0x34] sm:$0x1]
      %v496 = vld [vmem:[%s225 + $0x38] sm:$0xf]
      %v497 = vld [vmem:[%s225 + $0x3c] sm:$0x1]
      %vm498 = vsmask.f32 3328
      %vm499 = vsmask.f32 7440
      %vm500 = vmor %vm498, %vm499
      %v502 = vshrl.u32 %v482, 16
      %v504 = vrot.slane %v502, 4
      %v505 = vshll.u32 %v482, 16
      %v507 = vrot.slane %v505, 5
      %v508 = vor.u32 %v504, %v507
      %v509 = vrot.slane %v508, 4
      %v511 = vshll.u32 %v483, 16
      %v513 = vrot.slane %v511, 5
      %v514 = vsel %vm500, %v509, %v513
      %v516 = vshrl.u32 %v484, 16
      %v518 = vrot.slane %v516, 4
      %v519 = vshll.u32 %v484, 16
      %v521 = vrot.slane %v519, 5
      %v522 = vor.u32 %v518, %v521
      %v523 = vrot.slane %v522, 4
      %v525 = vshll.u32 %v485, 16
      %v527 = vrot.slane %v525, 5
      %v528 = vsel %vm500, %v523, %v527
      %v530 = vshrl.u32 %v486, 16
      %v532 = vrot.slane %v530, 4
      %v533 = vshll.u32 %v486, 16
      %v535 = vrot.slane %v533, 5
      %v536 = vor.u32 %v532, %v535
      %v537 = vrot.slane %v536, 4
      %v539 = vshll.u32 %v487, 16
      %v541 = vrot.slane %v539, 5
      %v542 = vsel %vm500, %v537, %v541
      %v544 = vshrl.u32 %v488, 16
      %v546 = vrot.slane %v544, 4
      %v547 = vshll.u32 %v488, 16
      %v549 = vrot.slane %v547, 5
      %v550 = vor.u32 %v546, %v549
      %v551 = vrot.slane %v550, 4
      %v553 = vshll.u32 %v489, 16
      %v555 = vrot.slane %v553, 5
      %v556 = vsel %vm500, %v551, %v555
      %v558 = vshrl.u32 %v490, 16
      %v560 = vrot.slane %v558, 4
      %v561 = vshll.u32 %v490, 16
      %v563 = vrot.slane %v561, 5
      %v564 = vor.u32 %v560, %v563
      %v565 = vrot.slane %v564, 4
      %v567 = vshll.u32 %v491, 16
      %v569 = vrot.slane %v567, 5
      %v570 = vsel %vm500, %v565, %v569
      %v572 = vshrl.u32 %v492, 16
      %v574 = vrot.slane %v572, 4
      %v575 = vshll.u32 %v492, 16
      %v577 = vrot.slane %v575, 5
      %v578 = vor.u32 %v574, %v577
      %v579 = vrot.slane %v578, 4
      %v581 = vshll.u32 %v493, 16
      %v583 = vrot.slane %v581, 5
      %v584 = vsel %vm500, %v579, %v583
      %v586 = vshrl.u32 %v494, 16
      %v588 = vrot.slane %v586, 4
      %v589 = vshll.u32 %v494, 16
      %v591 = vrot.slane %v589, 5
      %v592 = vor.u32 %v588, %v591
      %v593 = vrot.slane %v592, 4
      %v595 = vshll.u32 %v495, 16
      %v597 = vrot.slane %v595, 5
      %v598 = vsel %vm500, %v593, %v597
      %v600 = vshrl.u32 %v496, 16
      %v602 = vrot.slane %v600, 4
      %v603 = vshll.u32 %v496, 16
      %v605 = vrot.slane %v603, 5
      %v606 = vor.u32 %v602, %v605
      %v607 = vrot.slane %v606, 4
      %v609 = vshll.u32 %v497, 16
      %v611 = vrot.slane %v609, 5
      %v612 = vsel %vm500, %v607, %v611
      %s613 = scalar_lea.vmem %s1, 4
      %v614 = vld [vmem:[%s613] sm:$0x3]
      %v615 = vunpack.c.l.b16 %v514
      %v616 = vunpack.c.l.b16 %v528
      %v617 = vunpack.c.l.b16 %v542
      %v618 = vunpack.c.l.b16 %v556
      %v619 = vunpack.c.l.b16 %v570
      %v620 = vunpack.c.l.b16 %v584
      %v621 = vunpack.c.l.b16 %v598
      %v622 = vunpack.c.l.b16 %v612
      %v623 = vpack.c.b16 %v616, %v615
      %v624 = vpack.c.b16 %v618, %v617
      %v625 = vpack.c.b16 %v620, %v619
      %v626 = vpack.c.b16 %v622, %v621
      %v628 = vsel %vm255, %v623, 0
      %v631 = vsel %vm255, %v624, 0
      %v634 = vsel %vm255, %v625, 0
      %v637 = vsel %vm255, %v626, 0
      %v640 = vsel %vm268, %v614, 0
      %642 = vmatprep.subr.bf16.mxu0 0
      %643 = vmatpush1.bf16.msra.mxu0 0
      %644 = vmatprep.subr.bf16.mxu0 0
      %645 = vmatpush1.bf16.msra.mxu0 0
      %646 = vmatprep.subr.bf16.mxu0 0
      %647 = vmatpush1.bf16.msra.mxu0 0
      %648 = vmatprep.subr.bf16.mxu0 0
      %649 = vmatpush1.bf16.msra.mxu0 0
      %650 = vmatprep.subr.bf16.mxu0 0
      %651 = vmatpush1.bf16.msra.mxu0 0
      %652 = vmatprep.subr.bf16.mxu0 0
      %653 = vmatpush1.bf16.msra.mxu0 0
      %654 = vmatprep.subr.bf16.mxu0 0
      %655 = vmatpush1.bf16.msra.mxu0 0
      %656 = vmatprep.subr.bf16.mxu0 0
      %657 = vmatpush1.bf16.msra.mxu0 %v640
      %658 = vmatprep.subr.bf16.mxu0 0
      %659 = vmatpush2.bf16.msra.mxu0 0
      %660 = vmatprep.subr.bf16.mxu0 0
      %661 = vmatpush2.bf16.msra.mxu0 0
      %662 = vmatprep.subr.bf16.mxu0 0
      %663 = vmatpush2.bf16.msra.mxu0 0
      %664 = vmatprep.subr.bf16.mxu0 0
      %665 = vmatpush2.bf16.msra.mxu0 0
      %666 = vmatprep.subr.bf16.mxu0 0
      %667 = vmatpush2.bf16.msra.mxu0 0
      %668 = vmatprep.subr.bf16.mxu0 0
      %669 = vmatpush2.bf16.msra.mxu0 0
      %670 = vmatprep.subr.bf16.mxu0 0
      %671 = vmatpush2.bf16.msra.mxu0 0
      %672 = vmatprep.subr.bf16.mxu0 0
      %673 = vmatpush2.bf16.msra.mxu0 0
      %674 = vmatprep.mubr.bf16.mxu0 0
      %675 = vmatmul.mubr.bf16.gmra.mxu0 %v628
      %v676 = vpop.f32.mrf.mxu0
      %v677 = vadd.f32 0.0, %v676
      %v678 = vpop.f32.mrf.mxu0
      %v679 = vpop.f32.mrf.mxu0
      %v680 = vadd.f32 0.0, %v679
      %v681 = vpop.f32.mrf.mxu0
      %682 = vmatprep.mubr.bf16.mxu0 0
      %683 = vmatmul.mubr.bf16.gmra.mxu0 %v631
      %v684 = vpop.f32.mrf.mxu0
      %v685 = vadd.f32 0.0, %v684
      %v686 = vpop.f32.mrf.mxu0
      %v687 = vpop.f32.mrf.mxu0
      %v688 = vadd.f32 0.0, %v687
      %v689 = vpop.f32.mrf.mxu0
      %690 = vmatprep.mubr.bf16.mxu0 0
      %691 = vmatmul.mubr.bf16.gmra.mxu0 %v634
      %v692 = vpop.f32.mrf.mxu0
      %v693 = vadd.f32 0.0, %v692
      %v694 = vpop.f32.mrf.mxu0
      %v695 = vpop.f32.mrf.mxu0
      %v696 = vadd.f32 0.0, %v695
      %v697 = vpop.f32.mrf.mxu0
      %698 = vmatprep.mubr.bf16.mxu0 0
      %699 = vmatmul.mubr.bf16.gmra.mxu0 %v637
      %v700 = vpop.f32.mrf.mxu0
      %v701 = vadd.f32 0.0, %v700
      %v702 = vpop.f32.mrf.mxu0
      %v703 = vpop.f32.mrf.mxu0
      %v704 = vadd.f32 0.0, %v703
      %v705 = vpop.f32.mrf.mxu0
      %706 = vdwg.mxu0
      %v707 = vld [vmem:[#allocation2] sm:$0xff]
      %v708 = vld [vmem:[#allocation2 + $0x8] sm:$0xff]
      %v709 = vld [vmem:[#allocation2 + $0x10] sm:$0xff]
      %v710 = vld [vmem:[#allocation2 + $0x18] sm:$0xff]
      %v711 = vld [vmem:[#allocation2 + $0x20] sm:$0xff]
      %v712 = vld [vmem:[#allocation2 + $0x28] sm:$0xff]
      %v713 = vld [vmem:[#allocation2 + $0x30] sm:$0xff]
      %v714 = vld [vmem:[#allocation2 + $0x38] sm:$0xff]
      %v715 = vadd.f32 %v707, %v677
      %v716 = vadd.f32 %v708, %v680
      %v717 = vadd.f32 %v709, %v685
      %v718 = vadd.f32 %v710, %v688
      %v719 = vadd.f32 %v711, %v693
      %v720 = vadd.f32 %v712, %v696
      %v721 = vadd.f32 %v713, %v701
      %v722 = vadd.f32 %v714, %v704
      %723 = vst [vmem:[#allocation2] sm:$0xff] %v715
      %724 = vst [vmem:[#allocation2 + $0x8] sm:$0xff] %v716
      %725 = vst [vmem:[#allocation2 + $0x10] sm:$0xff] %v717
      %726 = vst [vmem:[#allocation2 + $0x18] sm:$0xff] %v718
      %727 = vst [vmem:[#allocation2 + $0x20] sm:$0xff] %v719
      %728 = vst [vmem:[#allocation2 + $0x28] sm:$0xff] %v720
      %729 = vst [vmem:[#allocation2 + $0x30] sm:$0xff] %v721
      %730 = vst [vmem:[#allocation2 + $0x38] sm:$0xff] %v722
      %s731 = sadd.s32 %s223, 36
      %s732 = smul.addr %s731, 4
      %s733 = scalar_lea.vmem %s210, %s732
      %v734 = vld [vmem:[%s733] sm:$0xf]
      %v735 = vld [vmem:[%s733 + $0x8] sm:$0xf]
      %v736 = vld [vmem:[%s733 + $0x10] sm:$0xf]
      %v737 = vld [vmem:[%s733 + $0x18] sm:$0xf]
      %v738 = vld [vmem:[%s733 + $0x20] sm:$0xf]
      %v739 = vld [vmem:[%s733 + $0x28] sm:$0xf]
      %v740 = vld [vmem:[%s733 + $0x30] sm:$0xf]
      %v741 = vld [vmem:[%s733 + $0x38] sm:$0xf]
      %s742 = scalar_lea.vmem %s1, 6
      %v743 = vld [vmem:[%s742] sm:$0x3]
      %v752 = vunpack.c.l.b16 %v734
      %v753 = vunpack.c.l.b16 %v735
      %v754 = vunpack.c.l.b16 %v736
      %v755 = vunpack.c.l.b16 %v737
      %v756 = vunpack.c.l.b16 %v738
      %v757 = vunpack.c.l.b16 %v739
      %v758 = vunpack.c.l.b16 %v740
      %v759 = vunpack.c.l.b16 %v741
      %v760 = vpack.c.b16 %v753, %v752
      %v761 = vpack.c.b16 %v755, %v754
      %v762 = vpack.c.b16 %v757, %v756
      %v763 = vpack.c.b16 %v759, %v758
      %v765 = vsel %vm255, %v760, 0
      %v768 = vsel %vm255, %v761, 0
      %v771 = vsel %vm255, %v762, 0
      %v774 = vsel %vm255, %v763, 0
      %v777 = vsel %vm268, %v743, 0
      %779 = vmatprep.subr.bf16.mxu0 0
      %780 = vmatpush1.bf16.msra.mxu0 0
      %781 = vmatprep.subr.bf16.mxu0 0
      %782 = vmatpush1.bf16.msra.mxu0 0
      %783 = vmatprep.subr.bf16.mxu0 0
      %784 = vmatpush1.bf16.msra.mxu0 0
      %785 = vmatprep.subr.bf16.mxu0 0
      %786 = vmatpush1.bf16.msra.mxu0 0
      %787 = vmatprep.subr.bf16.mxu0 0
      %788 = vmatpush1.bf16.msra.mxu0 0
      %789 = vmatprep.subr.bf16.mxu0 0
      %790 = vmatpush1.bf16.msra.mxu0 0
      %791 = vmatprep.subr.bf16.mxu0 0
      %792 = vmatpush1.bf16.msra.mxu0 0
      %793 = vmatprep.subr.bf16.mxu0 0
      %794 = vmatpush1.bf16.msra.mxu0 %v777
      %795 = vmatprep.subr.bf16.mxu0 0
      %796 = vmatpush2.bf16.msra.mxu0 0
      %797 = vmatprep.subr.bf16.mxu0 0
      %798 = vmatpush2.bf16.msra.mxu0 0
      %799 = vmatprep.subr.bf16.mxu0 0
      %800 = vmatpush2.bf16.msra.mxu0 0
      %801 = vmatprep.subr.bf16.mxu0 0
      %802 = vmatpush2.bf16.msra.mxu0 0
      %803 = vmatprep.subr.bf16.mxu0 0
      %804 = vmatpush2.bf16.msra.mxu0 0
      %805 = vmatprep.subr.bf16.mxu0 0
      %806 = vmatpush2.bf16.msra.mxu0 0
      %807 = vmatprep.subr.bf16.mxu0 0
      %808 = vmatpush2.bf16.msra.mxu0 0
      %809 = vmatprep.subr.bf16.mxu0 0
      %810 = vmatpush2.bf16.msra.mxu0 0
      %811 = vmatprep.mubr.bf16.mxu0 0
      %812 = vmatmul.mubr.bf16.gmra.mxu0 %v765
      %v813 = vpop.f32.mrf.mxu0
      %v814 = vadd.f32 0.0, %v813
      %v815 = vpop.f32.mrf.mxu0
      %v816 = vpop.f32.mrf.mxu0
      %v817 = vadd.f32 0.0, %v816
      %v818 = vpop.f32.mrf.mxu0
      %819 = vmatprep.mubr.bf16.mxu0 0
      %820 = vmatmul.mubr.bf16.gmra.mxu0 %v768
      %v821 = vpop.f32.mrf.mxu0
      %v822 = vadd.f32 0.0, %v821
      %v823 = vpop.f32.mrf.mxu0
      %v824 = vpop.f32.mrf.mxu0
      %v825 = vadd.f32 0.0, %v824
      %v826 = vpop.f32.mrf.mxu0
      %827 = vmatprep.mubr.bf16.mxu0 0
      %828 = vmatmul.mubr.bf16.gmra.mxu0 %v771
      %v829 = vpop.f32.mrf.mxu0
      %v830 = vadd.f32 0.0, %v829
      %v831 = vpop.f32.mrf.mxu0
      %v832 = vpop.f32.mrf.mxu0
      %v833 = vadd.f32 0.0, %v832
      %v834 = vpop.f32.mrf.mxu0
      %835 = vmatprep.mubr.bf16.mxu0 0
      %836 = vmatmul.mubr.bf16.gmra.mxu0 %v774
      %v837 = vpop.f32.mrf.mxu0
      %v838 = vadd.f32 0.0, %v837
      %v839 = vpop.f32.mrf.mxu0
      %v840 = vpop.f32.mrf.mxu0
      %v841 = vadd.f32 0.0, %v840
      %v842 = vpop.f32.mrf.mxu0
      %843 = vdwg.mxu0
      %v844 = vld [vmem:[#allocation2] sm:$0xff]
      %v845 = vld [vmem:[#allocation2 + $0x8] sm:$0xff]
      %v846 = vld [vmem:[#allocation2 + $0x10] sm:$0xff]
      %v847 = vld [vmem:[#allocation2 + $0x18] sm:$0xff]
      %v848 = vld [vmem:[#allocation2 + $0x20] sm:$0xff]
      %v849 = vld [vmem:[#allocation2 + $0x28] sm:$0xff]
      %v850 = vld [vmem:[#allocation2 + $0x30] sm:$0xff]
      %v851 = vld [vmem:[#allocation2 + $0x38] sm:$0xff]
      %v852 = vadd.f32 %v844, %v814
      %v853 = vadd.f32 %v845, %v817
      %v854 = vadd.f32 %v846, %v822
      %v855 = vadd.f32 %v847, %v825
      %v856 = vadd.f32 %v848, %v830
      %v857 = vadd.f32 %v849, %v833
      %v858 = vadd.f32 %v850, %v838
      %v859 = vadd.f32 %v851, %v841
      %860 = vst [vmem:[#allocation2] sm:$0xff] %v852
      %861 = vst [vmem:[#allocation2 + $0x8] sm:$0xff] %v853
      %862 = vst [vmem:[#allocation2 + $0x10] sm:$0xff] %v854
      %863 = vst [vmem:[#allocation2 + $0x18] sm:$0xff] %v855
      %864 = vst [vmem:[#allocation2 + $0x20] sm:$0xff] %v856
      %865 = vst [vmem:[#allocation2 + $0x28] sm:$0xff] %v857
      %866 = vst [vmem:[#allocation2 + $0x30] sm:$0xff] %v858
      %867 = vst [vmem:[#allocation2 + $0x38] sm:$0xff] %v859
      %s868 = sadd.s32 %s223, 54
      %s869 = smul.addr %s868, 4
      %s870 = scalar_lea.vmem %s210, %s869
      %v871 = vld [vmem:[%s870] sm:$0xf]
      %v872 = vld [vmem:[%s870 + $0x8] sm:$0xf]
      %v873 = vld [vmem:[%s870 + $0x10] sm:$0xf]
      %v874 = vld [vmem:[%s870 + $0x18] sm:$0xf]
      %v875 = vld [vmem:[%s870 + $0x20] sm:$0xf]
      %v876 = vld [vmem:[%s870 + $0x28] sm:$0xf]
      %v877 = vld [vmem:[%s870 + $0x30] sm:$0xf]
      %v878 = vld [vmem:[%s870 + $0x38] sm:$0xf]
      %s879 = scalar_lea.vmem %s1, 8
      %v880 = vld [vmem:[%s879] sm:$0x3]
      %v889 = vunpack.c.l.b16 %v871
      %v890 = vunpack.c.l.b16 %v872
      %v891 = vunpack.c.l.b16 %v873
      %v892 = vunpack.c.l.b16 %v874
      %v893 = vunpack.c.l.b16 %v875
      %v894 = vunpack.c.l.b16 %v876
      %v895 = vunpack.c.l.b16 %v877
      %v896 = vunpack.c.l.b16 %v878
      %v897 = vpack.c.b16 %v890, %v889
      %v898 = vpack.c.b16 %v892, %v891
      %v899 = vpack.c.b16 %v894, %v893
      %v900 = vpack.c.b16 %v896, %v895
      %v902 = vsel %vm255, %v897, 0
      %v905 = vsel %vm255, %v898, 0
      %v908 = vsel %vm255, %v899, 0
      %v911 = vsel %vm255, %v900, 0
      %v914 = vsel %vm268, %v880, 0
      %916 = vmatprep.subr.bf16.mxu0 0
      %917 = vmatpush1.bf16.msra.mxu0 0
      %918 = vmatprep.subr.bf16.mxu0 0
      %919 = vmatpush1.bf16.msra.mxu0 0
      %920 = vmatprep.subr.bf16.mxu0 0
      %921 = vmatpush1.bf16.msra.mxu0 0
      %922 = vmatprep.subr.bf16.mxu0 0
      %923 = vmatpush1.bf16.msra.mxu0 0
      %924 = vmatprep.subr.bf16.mxu0 0
      %925 = vmatpush1.bf16.msra.mxu0 0
      %926 = vmatprep.subr.bf16.mxu0 0
      %927 = vmatpush1.bf16.msra.mxu0 0
      %928 = vmatprep.subr.bf16.mxu0 0
      %929 = vmatpush1.bf16.msra.mxu0 0
      %930 = vmatprep.subr.bf16.mxu0 0
      %931 = vmatpush1.bf16.msra.mxu0 %v914
      %932 = vmatprep.subr.bf16.mxu0 0
      %933 = vmatpush2.bf16.msra.mxu0 0
      %934 = vmatprep.subr.bf16.mxu0 0
      %935 = vmatpush2.bf16.msra.mxu0 0
      %936 = vmatprep.subr.bf16.mxu0 0
      %937 = vmatpush2.bf16.msra.mxu0 0
      %938 = vmatprep.subr.bf16.mxu0 0
      %939 = vmatpush2.bf16.msra.mxu0 0
      %940 = vmatprep.subr.bf16.mxu0 0
      %941 = vmatpush2.bf16.msra.mxu0 0
      %942 = vmatprep.subr.bf16.mxu0 0
      %943 = vmatpush2.bf16.msra.mxu0 0
      %944 = vmatprep.subr.bf16.mxu0 0
      %945 = vmatpush2.bf16.msra.mxu0 0
      %946 = vmatprep.subr.bf16.mxu0 0
      %947 = vmatpush2.bf16.msra.mxu0 0
      %948 = vmatprep.mubr.bf16.mxu0 0
      %949 = vmatmul.mubr.bf16.gmra.mxu0 %v902
      %v950 = vpop.f32.mrf.mxu0
      %v951 = vadd.f32 0.0, %v950
      %v952 = vpop.f32.mrf.mxu0
      %v953 = vpop.f32.mrf.mxu0
      %v954 = vadd.f32 0.0, %v953
      %v955 = vpop.f32.mrf.mxu0
      %956 = vmatprep.mubr.bf16.mxu0 0
      %957 = vmatmul.mubr.bf16.gmra.mxu0 %v905
      %v958 = vpop.f32.mrf.mxu0
      %v959 = vadd.f32 0.0, %v958
      %v960 = vpop.f32.mrf.mxu0
      %v961 = vpop.f32.mrf.mxu0
      %v962 = vadd.f32 0.0, %v961
      %v963 = vpop.f32.mrf.mxu0
      %964 = vmatprep.mubr.bf16.mxu0 0
      %965 = vmatmul.mubr.bf16.gmra.mxu0 %v908
      %v966 = vpop.f32.mrf.mxu0
      %v967 = vadd.f32 0.0, %v966
      %v968 = vpop.f32.mrf.mxu0
      %v969 = vpop.f32.mrf.mxu0
      %v970 = vadd.f32 0.0, %v969
      %v971 = vpop.f32.mrf.mxu0
      %972 = vmatprep.mubr.bf16.mxu0 0
      %973 = vmatmul.mubr.bf16.gmra.mxu0 %v911
      %v974 = vpop.f32.mrf.mxu0
      %v975 = vadd.f32 0.0, %v974
      %v976 = vpop.f32.mrf.mxu0
      %v977 = vpop.f32.mrf.mxu0
      %v978 = vadd.f32 0.0, %v977
      %v979 = vpop.f32.mrf.mxu0
      %980 = vdwg.mxu0
      %v981 = vld [vmem:[#allocation2] sm:$0xff]
      %v982 = vld [vmem:[#allocation2 + $0x8] sm:$0xff]
      %v983 = vld [vmem:[#allocation2 + $0x10] sm:$0xff]
      %v984 = vld [vmem:[#allocation2 + $0x18] sm:$0xff]
      %v985 = vld [vmem:[#allocation2 + $0x20] sm:$0xff]
      %v986 = vld [vmem:[#allocation2 + $0x28] sm:$0xff]
      %v987 = vld [vmem:[#allocation2 + $0x30] sm:$0xff]
      %v988 = vld [vmem:[#allocation2 + $0x38] sm:$0xff]
      %v989 = vadd.f32 %v981, %v951
      %v990 = vadd.f32 %v982, %v954
      %v991 = vadd.f32 %v983, %v959
      %v992 = vadd.f32 %v984, %v962
      %v993 = vadd.f32 %v985, %v967
      %v994 = vadd.f32 %v986, %v970
      %v995 = vadd.f32 %v987, %v975
      %v996 = vadd.f32 %v988, %v978
      %997 = vst [vmem:[#allocation2] sm:$0xff] %v989
      %998 = vst [vmem:[#allocation2 + $0x8] sm:$0xff] %v990
      %999 = vst [vmem:[#allocation2 + $0x10] sm:$0xff] %v991
      %1000 = vst [vmem:[#allocation2 + $0x18] sm:$0xff] %v992
      %1001 = vst [vmem:[#allocation2 + $0x20] sm:$0xff] %v993
      %1002 = vst [vmem:[#allocation2 + $0x28] sm:$0xff] %v994
      %1003 = vst [vmem:[#allocation2 + $0x30] sm:$0xff] %v995
      %1004 = vst [vmem:[#allocation2 + $0x38] sm:$0xff] %v996
      %v1005 = vld [vmem:[%s733] sm:$0xf]
      %v1006 = vld [vmem:[%s733 + $0x4] sm:$0x1]
      %v1007 = vld [vmem:[%s733 + $0x8] sm:$0xf]
      %v1008 = vld [vmem:[%s733 + $0xc] sm:$0x1]
      %v1009 = vld [vmem:[%s733 + $0x10] sm:$0xf]
      %v1010 = vld [vmem:[%s733 + $0x14] sm:$0x1]
      %v1011 = vld [vmem:[%s733 + $0x18] sm:$0xf]
      %v1012 = vld [vmem:[%s733 + $0x1c] sm:$0x1]
      %v1013 = vld [vmem:[%s733 + $0x20] sm:$0xf]
      %v1014 = vld [vmem:[%s733 + $0x24] sm:$0x1]
      %v1015 = vld [vmem:[%s733 + $0x28] sm:$0xf]
      %v1016 = vld [vmem:[%s733 + $0x2c] sm:$0x1]
      %v1017 = vld [vmem:[%s733 + $0x30] sm:$0xf]
      %v1018 = vld [vmem:[%s733 + $0x34] sm:$0x1]
      %v1019 = vld [vmem:[%s733 + $0x38] sm:$0xf]
      %v1020 = vld [vmem:[%s733 + $0x3c] sm:$0x1]
      %v1022 = vshrl.u32 %v1005, 16
      %v1024 = vrot.slane %v1022, 4
      %v1025 = vshll.u32 %v1005, 16
      %v1027 = vrot.slane %v1025, 5
      %v1028 = vor.u32 %v1024, %v1027
      %v1029 = vrot.slane %v1028, 4
      %v1031 = vshll.u32 %v1006, 16
      %v1033 = vrot.slane %v1031, 5
      %v1034 = vsel %vm500, %v1029, %v1033
      %v1036 = vshrl.u32 %v1007, 16
      %v1038 = vrot.slane %v1036, 4
      %v1039 = vshll.u32 %v1007, 16
      %v1041 = vrot.slane %v1039, 5
      %v1042 = vor.u32 %v1038, %v1041
      %v1043 = vrot.slane %v1042, 4
      %v1045 = vshll.u32 %v1008, 16
      %v1047 = vrot.slane %v1045, 5
      %v1048 = vsel %vm500, %v1043, %v1047
      %v1050 = vshrl.u32 %v1009, 16
      %v1052 = vrot.slane %v1050, 4
      %v1053 = vshll.u32 %v1009, 16
      %v1055 = vrot.slane %v1053, 5
      %v1056 = vor.u32 %v1052, %v1055
      %v1057 = vrot.slane %v1056, 4
      %v1059 = vshll.u32 %v1010, 16
      %v1061 = vrot.slane %v1059, 5
      %v1062 = vsel %vm500, %v1057, %v1061
      %v1064 = vshrl.u32 %v1011, 16
      %v1066 = vrot.slane %v1064, 4
      %v1067 = vshll.u32 %v1011, 16
      %v1069 = vrot.slane %v1067, 5
      %v1070 = vor.u32 %v1066, %v1069
      %v1071 = vrot.slane %v1070, 4
      %v1073 = vshll.u32 %v1012, 16
      %v1075 = vrot.slane %v1073, 5
      %v1076 = vsel %vm500, %v1071, %v1075
      %v1078 = vshrl.u32 %v1013, 16
      %v1080 = vrot.slane %v1078, 4
      %v1081 = vshll.u32 %v1013, 16
      %v1083 = vrot.slane %v1081, 5
      %v1084 = vor.u32 %v1080, %v1083
      %v1085 = vrot.slane %v1084, 4
      %v1087 = vshll.u32 %v1014, 16
      %v1089 = vrot.slane %v1087, 5
      %v1090 = vsel %vm500, %v1085, %v1089
      %v1092 = vshrl.u32 %v1015, 16
      %v1094 = vrot.slane %v1092, 4
      %v1095 = vshll.u32 %v1015, 16
      %v1097 = vrot.slane %v1095, 5
      %v1098 = vor.u32 %v1094, %v1097
      %v1099 = vrot.slane %v1098, 4
      %v1101 = vshll.u32 %v1016, 16
      %v1103 = vrot.slane %v1101, 5
      %v1104 = vsel %vm500, %v1099, %v1103
      %v1106 = vshrl.u32 %v1017, 16
      %v1108 = vrot.slane %v1106, 4
      %v1109 = vshll.u32 %v1017, 16
      %v1111 = vrot.slane %v1109, 5
      %v1112 = vor.u32 %v1108, %v1111
      %v1113 = vrot.slane %v1112, 4
      %v1115 = vshll.u32 %v1018, 16
      %v1117 = vrot.slane %v1115, 5
      %v1118 = vsel %vm500, %v1113, %v1117
      %v1120 = vshrl.u32 %v1019, 16
      %v1122 = vrot.slane %v1120, 4
      %v1123 = vshll.u32 %v1019, 16
      %v1125 = vrot.slane %v1123, 5
      %v1126 = vor.u32 %v1122, %v1125
      %v1127 = vrot.slane %v1126, 4
      %v1129 = vshll.u32 %v1020, 16
      %v1131 = vrot.slane %v1129, 5
      %v1132 = vsel %vm500, %v1127, %v1131
      %s1133 = scalar_lea.vmem %s1, 10
      %v1134 = vld [vmem:[%s1133] sm:$0x3]
      %v1135 = vunpack.c.l.b16 %v1034
      %v1136 = vunpack.c.l.b16 %v1048
      %v1137 = vunpack.c.l.b16 %v1062
      %v1138 = vunpack.c.l.b16 %v1076
      %v1139 = vunpack.c.l.b16 %v1090
      %v1140 = vunpack.c.l.b16 %v1104
      %v1141 = vunpack.c.l.b16 %v1118
      %v1142 = vunpack.c.l.b16 %v1132
      %v1143 = vpack.c.b16 %v1136, %v1135
      %v1144 = vpack.c.b16 %v1138, %v1137
      %v1145 = vpack.c.b16 %v1140, %v1139
      %v1146 = vpack.c.b16 %v1142, %v1141
      %v1148 = vsel %vm255, %v1143, 0
      %v1151 = vsel %vm255, %v1144, 0
      %v1154 = vsel %vm255, %v1145, 0
      %v1157 = vsel %vm255, %v1146, 0
      %v1160 = vsel %vm268, %v1134, 0
      %1162 = vmatprep.subr.bf16.mxu0 0
      %1163 = vmatpush1.bf16.msra.mxu0 0
      %1164 = vmatprep.subr.bf16.mxu0 0
      %1165 = vmatpush1.bf16.msra.mxu0 0
      %1166 = vmatprep.subr.bf16.mxu0 0
      %1167 = vmatpush1.bf16.msra.mxu0 0
      %1168 = vmatprep.subr.bf16.mxu0 0
      %1169 = vmatpush1.bf16.msra.mxu0 0
      %1170 = vmatprep.subr.bf16.mxu0 0
      %1171 = vmatpush1.bf16.msra.mxu0 0
      %1172 = vmatprep.subr.bf16.mxu0 0
      %1173 = vmatpush1.bf16.msra.mxu0 0
      %1174 = vmatprep.subr.bf16.mxu0 0
      %1175 = vmatpush1.bf16.msra.mxu0 0
      %1176 = vmatprep.subr.bf16.mxu0 0
      %1177 = vmatpush1.bf16.msra.mxu0 %v1160
      %1178 = vmatprep.subr.bf16.mxu0 0
      %1179 = vmatpush2.bf16.msra.mxu0 0
      %1180 = vmatprep.subr.bf16.mxu0 0
      %1181 = vmatpush2.bf16.msra.mxu0 0
      %1182 = vmatprep.subr.bf16.mxu0 0
      %1183 = vmatpush2.bf16.msra.mxu0 0
      %1184 = vmatprep.subr.bf16.mxu0 0
      %1185 = vmatpush2.bf16.msra.mxu0 0
      %1186 = vmatprep.subr.bf16.mxu0 0
      %1187 = vmatpush2.bf16.msra.mxu0 0
      %1188 = vmatprep.subr.bf16.mxu0 0
      %1189 = vmatpush2.bf16.msra.mxu0 0
      %1190 = vmatprep.subr.bf16.mxu0 0
      %1191 = vmatpush2.bf16.msra.mxu0 0
      %1192 = vmatprep.subr.bf16.mxu0 0
      %1193 = vmatpush2.bf16.msra.mxu0 0
      %1194 = vmatprep.mubr.bf16.mxu0 0
      %1195 = vmatmul.mubr.bf16.gmra.mxu0 %v1148
      %v1196 = vpop.f32.mrf.mxu0
      %v1197 = vadd.f32 0.0, %v1196
      %v1198 = vpop.f32.mrf.mxu0
      %v1199 = vpop.f32.mrf.mxu0
      %v1200 = vadd.f32 0.0, %v1199
      %v1201 = vpop.f32.mrf.mxu0
      %1202 = vmatprep.mubr.bf16.mxu0 0
      %1203 = vmatmul.mubr.bf16.gmra.mxu0 %v1151
      %v1204 = vpop.f32.mrf.mxu0
      %v1205 = vadd.f32 0.0, %v1204
      %v1206 = vpop.f32.mrf.mxu0
      %v1207 = vpop.f32.mrf.mxu0
      %v1208 = vadd.f32 0.0, %v1207
      %v1209 = vpop.f32.mrf.mxu0
      %1210 = vmatprep.mubr.bf16.mxu0 0
      %1211 = vmatmul.mubr.bf16.gmra.mxu0 %v1154
      %v1212 = vpop.f32.mrf.mxu0
      %v1213 = vadd.f32 0.0, %v1212
      %v1214 = vpop.f32.mrf.mxu0
      %v1215 = vpop.f32.mrf.mxu0
      %v1216 = vadd.f32 0.0, %v1215
      %v1217 = vpop.f32.mrf.mxu0
      %1218 = vmatprep.mubr.bf16.mxu0 0
      %1219 = vmatmul.mubr.bf16.gmra.mxu0 %v1157
      %v1220 = vpop.f32.mrf.mxu0
      %v1221 = vadd.f32 0.0, %v1220
      %v1222 = vpop.f32.mrf.mxu0
      %v1223 = vpop.f32.mrf.mxu0
      %v1224 = vadd.f32 0.0, %v1223
      %v1225 = vpop.f32.mrf.mxu0
      %1226 = vdwg.mxu0
      %v1227 = vld [vmem:[#allocation2] sm:$0xff]
      %v1228 = vld [vmem:[#allocation2 + $0x8] sm:$0xff]
      %v1229 = vld [vmem:[#allocation2 + $0x10] sm:$0xff]
      %v1230 = vld [vmem:[#allocation2 + $0x18] sm:$0xff]
      %v1231 = vld [vmem:[#allocation2 + $0x20] sm:$0xff]
      %v1232 = vld [vmem:[#allocation2 + $0x28] sm:$0xff]
      %v1233 = vld [vmem:[#allocation2 + $0x30] sm:$0xff]
      %v1234 = vld [vmem:[#allocation2 + $0x38] sm:$0xff]
      %v1235 = vadd.f32 %v1227, %v1197
      %v1236 = vadd.f32 %v1228, %v1200
      %v1237 = vadd.f32 %v1229, %v1205
      %v1238 = vadd.f32 %v1230, %v1208
      %v1239 = vadd.f32 %v1231, %v1213
      %v1240 = vadd.f32 %v1232, %v1216
      %v1241 = vadd.f32 %v1233, %v1221
      %v1242 = vadd.f32 %v1234, %v1224
      %1243 = vst [vmem:[#allocation2] sm:$0xff] %v1235
      %1244 = vst [vmem:[#allocation2 + $0x8] sm:$0xff] %v1236
      %1245 = vst [vmem:[#allocation2 + $0x10] sm:$0xff] %v1237
      %1246 = vst [vmem:[#allocation2 + $0x18] sm:$0xff] %v1238
      %1247 = vst [vmem:[#allocation2 + $0x20] sm:$0xff] %v1239
      %1248 = vst [vmem:[#allocation2 + $0x28] sm:$0xff] %v1240
      %1249 = vst [vmem:[#allocation2 + $0x30] sm:$0xff] %v1241
      %1250 = vst [vmem:[#allocation2 + $0x38] sm:$0xff] %v1242
      %s1251 = sadd.s32 %s222, 1
      %s1252 = smul.u32 %s1251, 2
      %s1253 = smul.addr %s1252, 4
      %s1254 = scalar_lea.vmem %s210, %s1253
      %v1255 = vld [vmem:[%s1254] sm:$0xf]
      %v1256 = vld [vmem:[%s1254 + $0x8] sm:$0xf]
      %v1257 = vld [vmem:[%s1254 + $0x10] sm:$0xf]
      %v1258 = vld [vmem:[%s1254 + $0x18] sm:$0xf]
      %v1259 = vld [vmem:[%s1254 + $0x20] sm:$0xf]
      %v1260 = vld [vmem:[%s1254 + $0x28] sm:$0xf]
      %v1261 = vld [vmem:[%s1254 + $0x30] sm:$0xf]
      %v1262 = vld [vmem:[%s1254 + $0x38] sm:$0xf]
      %s1263 = scalar_lea.vmem %s1, 12
      %v1264 = vld [vmem:[%s1263] sm:$0x3]
      %v1273 = vunpack.c.l.b16 %v1255
      %v1274 = vunpack.c.l.b16 %v1256
      %v1275 = vunpack.c.l.b16 %v1257
      %v1276 = vunpack.c.l.b16 %v1258
      %v1277 = vunpack.c.l.b16 %v1259
      %v1278 = vunpack.c.l.b16 %v1260
      %v1279 = vunpack.c.l.b16 %v1261
      %v1280 = vunpack.c.l.b16 %v1262
      %v1281 = vpack.c.b16 %v1274, %v1273
      %v1282 = vpack.c.b16 %v1276, %v1275
      %v1283 = vpack.c.b16 %v1278, %v1277
      %v1284 = vpack.c.b16 %v1280, %v1279
      %v1286 = vsel %vm255, %v1281, 0
      %v1289 = vsel %vm255, %v1282, 0
      %v1292 = vsel %vm255, %v1283, 0
      %v1295 = vsel %vm255, %v1284, 0
      %v1298 = vsel %vm268, %v1264, 0
      %1300 = vmatprep.subr.bf16.mxu0 0
      %1301 = vmatpush1.bf16.msra.mxu0 0
      %1302 = vmatprep.subr.bf16.mxu0 0
      %1303 = vmatpush1.bf16.msra.mxu0 0
      %1304 = vmatprep.subr.bf16.mxu0 0
      %1305 = vmatpush1.bf16.msra.mxu0 0
      %1306 = vmatprep.subr.bf16.mxu0 0
      %1307 = vmatpush1.bf16.msra.mxu0 0
      %1308 = vmatprep.subr.bf16.mxu0 0
      %1309 = vmatpush1.bf16.msra.mxu0 0
      %1310 = vmatprep.subr.bf16.mxu0 0
      %1311 = vmatpush1.bf16.msra.mxu0 0
      %1312 = vmatprep.subr.bf16.mxu0 0
      %1313 = vmatpush1.bf16.msra.mxu0 0
      %1314 = vmatprep.subr.bf16.mxu0 0
      %1315 = vmatpush1.bf16.msra.mxu0 %v1298
      %1316 = vmatprep.subr.bf16.mxu0 0
      %1317 = vmatpush2.bf16.msra.mxu0 0
      %1318 = vmatprep.subr.bf16.mxu0 0
      %1319 = vmatpush2.bf16.msra.mxu0 0
      %1320 = vmatprep.subr.bf16.mxu0 0
      %1321 = vmatpush2.bf16.msra.mxu0 0
      %1322 = vmatprep.subr.bf16.mxu0 0
      %1323 = vmatpush2.bf16.msra.mxu0 0
      %1324 = vmatprep.subr.bf16.mxu0 0
      %1325 = vmatpush2.bf16.msra.mxu0 0
      %1326 = vmatprep.subr.bf16.mxu0 0
      %1327 = vmatpush2.bf16.msra.mxu0 0
      %1328 = vmatprep.subr.bf16.mxu0 0
      %1329 = vmatpush2.bf16.msra.mxu0 0
      %1330 = vmatprep.subr.bf16.mxu0 0
      %1331 = vmatpush2.bf16.msra.mxu0 0
      %1332 = vmatprep.mubr.bf16.mxu0 0
      %1333 = vmatmul.mubr.bf16.gmra.mxu0 %v1286
      %v1334 = vpop.f32.mrf.mxu0
      %v1335 = vadd.f32 0.0, %v1334
      %v1336 = vpop.f32.mrf.mxu0
      %v1337 = vpop.f32.mrf.mxu0
      %v1338 = vadd.f32 0.0, %v1337
      %v1339 = vpop.f32.mrf.mxu0
      %1340 = vmatprep.mubr.bf16.mxu0 0
      %1341 = vmatmul.mubr.bf16.gmra.mxu0 %v1289
      %v1342 = vpop.f32.mrf.mxu0
      %v1343 = vadd.f32 0.0, %v1342
      %v1344 = vpop.f32.mrf.mxu0
      %v1345 = vpop.f32.mrf.mxu0
      %v1346 = vadd.f32 0.0, %v1345
      %v1347 = vpop.f32.mrf.mxu0
      %1348 = vmatprep.mubr.bf16.mxu0 0
      %1349 = vmatmul.mubr.bf16.gmra.mxu0 %v1292
      %v1350 = vpop.f32.mrf.mxu0
      %v1351 = vadd.f32 0.0, %v1350
      %v1352 = vpop.f32.mrf.mxu0
      %v1353 = vpop.f32.mrf.mxu0
      %v1354 = vadd.f32 0.0, %v1353
      %v1355 = vpop.f32.mrf.mxu0
      %1356 = vmatprep.mubr.bf16.mxu0 0
      %1357 = vmatmul.mubr.bf16.gmra.mxu0 %v1295
      %v1358 = vpop.f32.mrf.mxu0
      %v1359 = vadd.f32 0.0, %v1358
      %v1360 = vpop.f32.mrf.mxu0
      %v1361 = vpop.f32.mrf.mxu0
      %v1362 = vadd.f32 0.0, %v1361
      %v1363 = vpop.f32.mrf.mxu0
      %1364 = vdwg.mxu0
      %v1365 = vld [vmem:[#allocation2] sm:$0xff]
      %v1366 = vld [vmem:[#allocation2 + $0x8] sm:$0xff]
      %v1367 = vld [vmem:[#allocation2 + $0x10] sm:$0xff]
      %v1368 = vld [vmem:[#allocation2 + $0x18] sm:$0xff]
      %v1369 = vld [vmem:[#allocation2 + $0x20] sm:$0xff]
      %v1370 = vld [vmem:[#allocation2 + $0x28] sm:$0xff]
      %v1371 = vld [vmem:[#allocation2 + $0x30] sm:$0xff]
      %v1372 = vld [vmem:[#allocation2 + $0x38] sm:$0xff]
      %v1373 = vadd.f32 %v1365, %v1335
      %v1374 = vadd.f32 %v1366, %v1338
      %v1375 = vadd.f32 %v1367, %v1343
      %v1376 = vadd.f32 %v1368, %v1346
      %v1377 = vadd.f32 %v1369, %v1351
      %v1378 = vadd.f32 %v1370, %v1354
      %v1379 = vadd.f32 %v1371, %v1359
      %v1380 = vadd.f32 %v1372, %v1362
      %1381 = vst [vmem:[#allocation2] sm:$0xff] %v1373
      %1382 = vst [vmem:[#allocation2 + $0x8] sm:$0xff] %v1374
      %1383 = vst [vmem:[#allocation2 + $0x10] sm:$0xff] %v1375
      %1384 = vst [vmem:[#allocation2 + $0x18] sm:$0xff] %v1376
      %1385 = vst [vmem:[#allocation2 + $0x20] sm:$0xff] %v1377
      %1386 = vst [vmem:[#allocation2 + $0x28] sm:$0xff] %v1378
      %1387 = vst [vmem:[#allocation2 + $0x30] sm:$0xff] %v1379
      %1388 = vst [vmem:[#allocation2 + $0x38] sm:$0xff] %v1380
      %s1389 = sadd.s32 %s1252, 18
      %s1390 = smul.addr %s1389, 4
      %s1391 = scalar_lea.vmem %s210, %s1390
      %v1392 = vld [vmem:[%s1391] sm:$0xf]
      %v1393 = vld [vmem:[%s1391 + $0x8] sm:$0xf]
      %v1394 = vld [vmem:[%s1391 + $0x10] sm:$0xf]
      %v1395 = vld [vmem:[%s1391 + $0x18] sm:$0xf]
      %v1396 = vld [vmem:[%s1391 + $0x20] sm:$0xf]
      %v1397 = vld [vmem:[%s1391 + $0x28] sm:$0xf]
      %v1398 = vld [vmem:[%s1391 + $0x30] sm:$0xf]
      %v1399 = vld [vmem:[%s1391 + $0x38] sm:$0xf]
      %s1400 = scalar_lea.vmem %s1, 14
      %v1401 = vld [vmem:[%s1400] sm:$0x3]
      %v1410 = vunpack.c.l.b16 %v1392
      %v1411 = vunpack.c.l.b16 %v1393
      %v1412 = vunpack.c.l.b16 %v1394
      %v1413 = vunpack.c.l.b16 %v1395
      %v1414 = vunpack.c.l.b16 %v1396
      %v1415 = vunpack.c.l.b16 %v1397
      %v1416 = vunpack.c.l.b16 %v1398
      %v1417 = vunpack.c.l.b16 %v1399
      %v1418 = vpack.c.b16 %v1411, %v1410
      %v1419 = vpack.c.b16 %v1413, %v1412
      %v1420 = vpack.c.b16 %v1415, %v1414
      %v1421 = vpack.c.b16 %v1417, %v1416
      %v1423 = vsel %vm255, %v1418, 0
      %v1426 = vsel %vm255, %v1419, 0
      %v1429 = vsel %vm255, %v1420, 0
      %v1432 = vsel %vm255, %v1421, 0
      %v1435 = vsel %vm268, %v1401, 0
      %1437 = vmatprep.subr.bf16.mxu0 0
      %1438 = vmatpush1.bf16.msra.mxu0 0
      %1439 = vmatprep.subr.bf16.mxu0 0
      %1440 = vmatpush1.bf16.msra.mxu0 0
      %1441 = vmatprep.subr.bf16.mxu0 0
      %1442 = vmatpush1.bf16.msra.mxu0 0
      %1443 = vmatprep.subr.bf16.mxu0 0
      %1444 = vmatpush1.bf16.msra.mxu0 0
      %1445 = vmatprep.subr.bf16.mxu0 0
      %1446 = vmatpush1.bf16.msra.mxu0 0
      %1447 = vmatprep.subr.bf16.mxu0 0
      %1448 = vmatpush1.bf16.msra.mxu0 0
      %1449 = vmatprep.subr.bf16.mxu0 0
      %1450 = vmatpush1.bf16.msra.mxu0 0
      %1451 = vmatprep.subr.bf16.mxu0 0
      %1452 = vmatpush1.bf16.msra.mxu0 %v1435
      %1453 = vmatprep.subr.bf16.mxu0 0
      %1454 = vmatpush2.bf16.msra.mxu0 0
      %1455 = vmatprep.subr.bf16.mxu0 0
      %1456 = vmatpush2.bf16.msra.mxu0 0
      %1457 = vmatprep.subr.bf16.mxu0 0
      %1458 = vmatpush2.bf16.msra.mxu0 0
      %1459 = vmatprep.subr.bf16.mxu0 0
      %1460 = vmatpush2.bf16.msra.mxu0 0
      %1461 = vmatprep.subr.bf16.mxu0 0
      %1462 = vmatpush2.bf16.msra.mxu0 0
      %1463 = vmatprep.subr.bf16.mxu0 0
      %1464 = vmatpush2.bf16.msra.mxu0 0
      %1465 = vmatprep.subr.bf16.mxu0 0
      %1466 = vmatpush2.bf16.msra.mxu0 0
      %1467 = vmatprep.subr.bf16.mxu0 0
      %1468 = vmatpush2.bf16.msra.mxu0 0
      %1469 = vmatprep.mubr.bf16.mxu0 0
      %1470 = vmatmul.mubr.bf16.gmra.mxu0 %v1423
      %v1471 = vpop.f32.mrf.mxu0
      %v1472 = vadd.f32 0.0, %v1471
      %v1473 = vpop.f32.mrf.mxu0
      %v1474 = vpop.f32.mrf.mxu0
      %v1475 = vadd.f32 0.0, %v1474
      %v1476 = vpop.f32.mrf.mxu0
      %1477 = vmatprep.mubr.bf16.mxu0 0
      %1478 = vmatmul.mubr.bf16.gmra.mxu0 %v1426
      %v1479 = vpop.f32.mrf.mxu0
      %v1480 = vadd.f32 0.0, %v1479
      %v1481 = vpop.f32.mrf.mxu0
      %v1482 = vpop.f32.mrf.mxu0
      %v1483 = vadd.f32 0.0, %v1482
      %v1484 = vpop.f32.mrf.mxu0
      %1485 = vmatprep.mubr.bf16.mxu0 0
      %1486 = vmatmul.mubr.bf16.gmra.mxu0 %v1429
      %v1487 = vpop.f32.mrf.mxu0
      %v1488 = vadd.f32 0.0, %v1487
      %v1489 = vpop.f32.mrf.mxu0
      %v1490 = vpop.f32.mrf.mxu0
      %v1491 = vadd.f32 0.0, %v1490
      %v1492 = vpop.f32.mrf.mxu0
      %1493 = vmatprep.mubr.bf16.mxu0 0
      %1494 = vmatmul.mubr.bf16.gmra.mxu0 %v1432
      %v1495 = vpop.f32.mrf.mxu0
      %v1496 = vadd.f32 0.0, %v1495
      %v1497 = vpop.f32.mrf.mxu0
      %v1498 = vpop.f32.mrf.mxu0
      %v1499 = vadd.f32 0.0, %v1498
      %v1500 = vpop.f32.mrf.mxu0
      %1501 = vdwg.mxu0
      %v1502 = vld [vmem:[#allocation2] sm:$0xff]
      %v1503 = vld [vmem:[#allocation2 + $0x8] sm:$0xff]
      %v1504 = vld [vmem:[#allocation2 + $0x10] sm:$0xff]
      %v1505 = vld [vmem:[#allocation2 + $0x18] sm:$0xff]
      %v1506 = vld [vmem:[#allocation2 + $0x20] sm:$0xff]
      %v1507 = vld [vmem:[#allocation2 + $0x28] sm:$0xff]
      %v1508 = vld [vmem:[#allocation2 + $0x30] sm:$0xff]
      %v1509 = vld [vmem:[#allocation2 + $0x38] sm:$0xff]
      %v1510 = vadd.f32 %v1502, %v1472
      %v1511 = vadd.f32 %v1503, %v1475
      %v1512 = vadd.f32 %v1504, %v1480
      %v1513 = vadd.f32 %v1505, %v1483
      %v1514 = vadd.f32 %v1506, %v1488
      %v1515 = vadd.f32 %v1507, %v1491
      %v1516 = vadd.f32 %v1508, %v1496
      %v1517 = vadd.f32 %v1509, %v1499
      %1518 = vst [vmem:[#allocation2] sm:$0xff] %v1510
      %1519 = vst [vmem:[#allocation2 + $0x8] sm:$0xff] %v1511
      %1520 = vst [vmem:[#allocation2 + $0x10] sm:$0xff] %v1512
      %1521 = vst [vmem:[#allocation2 + $0x18] sm:$0xff] %v1513
      %1522 = vst [vmem:[#allocation2 + $0x20] sm:$0xff] %v1514
      %1523 = vst [vmem:[#allocation2 + $0x28] sm:$0xff] %v1515
      %1524 = vst [vmem:[#allocation2 + $0x30] sm:$0xff] %v1516
      %1525 = vst [vmem:[#allocation2 + $0x38] sm:$0xff] %v1517
      %v1526 = vld [vmem:[%s1254] sm:$0xf]
      %v1527 = vld [vmem:[%s1254 + $0x4] sm:$0x1]
      %v1528 = vld [vmem:[%s1254 + $0x8] sm:$0xf]
      %v1529 = vld [vmem:[%s1254 + $0xc] sm:$0x1]
      %v1530 = vld [vmem:[%s1254 + $0x10] sm:$0xf]
      %v1531 = vld [vmem:[%s1254 + $0x14] sm:$0x1]
      %v1532 = vld [vmem:[%s1254 + $0x18] sm:$0xf]
      %v1533 = vld [vmem:[%s1254 + $0x1c] sm:$0x1]
      %v1534 = vld [vmem:[%s1254 + $0x20] sm:$0xf]
      %v1535 = vld [vmem:[%s1254 + $0x24] sm:$0x1]
      %v1536 = vld [vmem:[%s1254 + $0x28] sm:$0xf]
      %v1537 = vld [vmem:[%s1254 + $0x2c] sm:$0x1]
      %v1538 = vld [vmem:[%s1254 + $0x30] sm:$0xf]
      %v1539 = vld [vmem:[%s1254 + $0x34] sm:$0x1]
      %v1540 = vld [vmem:[%s1254 + $0x38] sm:$0xf]
      %v1541 = vld [vmem:[%s1254 + $0x3c] sm:$0x1]
      %v1543 = vshrl.u32 %v1526, 16
      %v1545 = vrot.slane %v1543, 4
      %v1546 = vshll.u32 %v1526, 16
      %v1548 = vrot.slane %v1546, 5
      %v1549 = vor.u32 %v1545, %v1548
      %v1550 = vrot.slane %v1549, 4
      %v1552 = vshll.u32 %v1527, 16
      %v1554 = vrot.slane %v1552, 5
      %v1555 = vsel %vm500, %v1550, %v1554
      %v1557 = vshrl.u32 %v1528, 16
      %v1559 = vrot.slane %v1557, 4
      %v1560 = vshll.u32 %v1528, 16
      %v1562 = vrot.slane %v1560, 5
      %v1563 = vor.u32 %v1559, %v1562
      %v1564 = vrot.slane %v1563, 4
      %v1566 = vshll.u32 %v1529, 16
      %v1568 = vrot.slane %v1566, 5
      %v1569 = vsel %vm500, %v1564, %v1568
      %v1571 = vshrl.u32 %v1530, 16
      %v1573 = vrot.slane %v1571, 4
      %v1574 = vshll.u32 %v1530, 16
      %v1576 = vrot.slane %v1574, 5
      %v1577 = vor.u32 %v1573, %v1576
      %v1578 = vrot.slane %v1577, 4
      %v1580 = vshll.u32 %v1531, 16
      %v1582 = vrot.slane %v1580, 5
      %v1583 = vsel %vm500, %v1578, %v1582
      %v1585 = vshrl.u32 %v1532, 16
      %v1587 = vrot.slane %v1585, 4
      %v1588 = vshll.u32 %v1532, 16
      %v1590 = vrot.slane %v1588, 5
      %v1591 = vor.u32 %v1587, %v1590
      %v1592 = vrot.slane %v1591, 4
      %v1594 = vshll.u32 %v1533, 16
      %v1596 = vrot.slane %v1594, 5
      %v1597 = vsel %vm500, %v1592, %v1596
      %v1599 = vshrl.u32 %v1534, 16
      %v1601 = vrot.slane %v1599, 4
      %v1602 = vshll.u32 %v1534, 16
      %v1604 = vrot.slane %v1602, 5
      %v1605 = vor.u32 %v1601, %v1604
      %v1606 = vrot.slane %v1605, 4
      %v1608 = vshll.u32 %v1535, 16
      %v1610 = vrot.slane %v1608, 5
      %v1611 = vsel %vm500, %v1606, %v1610
      %v1613 = vshrl.u32 %v1536, 16
      %v1615 = vrot.slane %v1613, 4
      %v1616 = vshll.u32 %v1536, 16
      %v1618 = vrot.slane %v1616, 5
      %v1619 = vor.u32 %v1615, %v1618
      %v1620 = vrot.slane %v1619, 4
      %v1622 = vshll.u32 %v1537, 16
      %v1624 = vrot.slane %v1622, 5
      %v1625 = vsel %vm500, %v1620, %v1624
      %v1627 = vshrl.u32 %v1538, 16
      %v1629 = vrot.slane %v1627, 4
      %v1630 = vshll.u32 %v1538, 16
      %v1632 = vrot.slane %v1630, 5
      %v1633 = vor.u32 %v1629, %v1632
      %v1634 = vrot.slane %v1633, 4
      %v1636 = vshll.u32 %v1539, 16
      %v1638 = vrot.slane %v1636, 5
      %v1639 = vsel %vm500, %v1634, %v1638
      %v1641 = vshrl.u32 %v1540, 16
      %v1643 = vrot.slane %v1641, 4
      %v1644 = vshll.u32 %v1540, 16
      %v1646 = vrot.slane %v1644, 5
      %v1647 = vor.u32 %v1643, %v1646
      %v1648 = vrot.slane %v1647, 4
      %v1650 = vshll.u32 %v1541, 16
      %v1652 = vrot.slane %v1650, 5
      %v1653 = vsel %vm500, %v1648, %v1652
      %s1654 = scalar_lea.vmem %s1, 16
      %v1655 = vld [vmem:[%s1654] sm:$0x3]
      %v1656 = vunpack.c.l.b16 %v1555
      %v1657 = vunpack.c.l.b16 %v1569
      %v1658 = vunpack.c.l.b16 %v1583
      %v1659 = vunpack.c.l.b16 %v1597
      %v1660 = vunpack.c.l.b16 %v1611
      %v1661 = vunpack.c.l.b16 %v1625
      %v1662 = vunpack.c.l.b16 %v1639
      %v1663 = vunpack.c.l.b16 %v1653
      %v1664 = vpack.c.b16 %v1657, %v1656
      %v1665 = vpack.c.b16 %v1659, %v1658
      %v1666 = vpack.c.b16 %v1661, %v1660
      %v1667 = vpack.c.b16 %v1663, %v1662
      %v1669 = vsel %vm255, %v1664, 0
      %v1672 = vsel %vm255, %v1665, 0
      %v1675 = vsel %vm255, %v1666, 0
      %v1678 = vsel %vm255, %v1667, 0
      %v1681 = vsel %vm268, %v1655, 0
      %1683 = vmatprep.subr.bf16.mxu0 0
      %1684 = vmatpush1.bf16.msra.mxu0 0
      %1685 = vmatprep.subr.bf16.mxu0 0
      %1686 = vmatpush1.bf16.msra.mxu0 0
      %1687 = vmatprep.subr.bf16.mxu0 0
      %1688 = vmatpush1.bf16.msra.mxu0 0
      %1689 = vmatprep.subr.bf16.mxu0 0
      %1690 = vmatpush1.bf16.msra.mxu0 0
      %1691 = vmatprep.subr.bf16.mxu0 0
      %1692 = vmatpush1.bf16.msra.mxu0 0
      %1693 = vmatprep.subr.bf16.mxu0 0
      %1694 = vmatpush1.bf16.msra.mxu0 0
      %1695 = vmatprep.subr.bf16.mxu0 0
      %1696 = vmatpush1.bf16.msra.mxu0 0
      %1697 = vmatprep.subr.bf16.mxu0 0
      %1698 = vmatpush1.bf16.msra.mxu0 %v1681
      %1699 = vmatprep.subr.bf16.mxu0 0
      %1700 = vmatpush2.bf16.msra.mxu0 0
      %1701 = vmatprep.subr.bf16.mxu0 0
      %1702 = vmatpush2.bf16.msra.mxu0 0
      %1703 = vmatprep.subr.bf16.mxu0 0
      %1704 = vmatpush2.bf16.msra.mxu0 0
      %1705 = vmatprep.subr.bf16.mxu0 0
      %1706 = vmatpush2.bf16.msra.mxu0 0
      %1707 = vmatprep.subr.bf16.mxu0 0
      %1708 = vmatpush2.bf16.msra.mxu0 0
      %1709 = vmatprep.subr.bf16.mxu0 0
      %1710 = vmatpush2.bf16.msra.mxu0 0
      %1711 = vmatprep.subr.bf16.mxu0 0
      %1712 = vmatpush2.bf16.msra.mxu0 0
      %1713 = vmatprep.subr.bf16.mxu0 0
      %1714 = vmatpush2.bf16.msra.mxu0 0
      %1715 = vmatprep.mubr.bf16.mxu0 0
      %1716 = vmatmul.mubr.bf16.gmra.mxu0 %v1669
      %v1717 = vpop.f32.mrf.mxu0
      %v1718 = vadd.f32 0.0, %v1717
      %v1719 = vpop.f32.mrf.mxu0
      %v1720 = vpop.f32.mrf.mxu0
      %v1721 = vadd.f32 0.0, %v1720
      %v1722 = vpop.f32.mrf.mxu0
      %1723 = vmatprep.mubr.bf16.mxu0 0
      %1724 = vmatmul.mubr.bf16.gmra.mxu0 %v1672
      %v1725 = vpop.f32.mrf.mxu0
      %v1726 = vadd.f32 0.0, %v1725
      %v1727 = vpop.f32.mrf.mxu0
      %v1728 = vpop.f32.mrf.mxu0
      %v1729 = vadd.f32 0.0, %v1728
      %v1730 = vpop.f32.mrf.mxu0
      %1731 = vmatprep.mubr.bf16.mxu0 0
      %1732 = vmatmul.mubr.bf16.gmra.mxu0 %v1675
      %v1733 = vpop.f32.mrf.mxu0
      %v1734 = vadd.f32 0.0, %v1733
      %v1735 = vpop.f32.mrf.mxu0
      %v1736 = vpop.f32.mrf.mxu0
      %v1737 = vadd.f32 0.0, %v1736
      %v1738 = vpop.f32.mrf.mxu0
      %1739 = vmatprep.mubr.bf16.mxu0 0
      %1740 = vmatmul.mubr.bf16.gmra.mxu0 %v1678
      %v1741 = vpop.f32.mrf.mxu0
      %v1742 = vadd.f32 0.0, %v1741
      %v1743 = vpop.f32.mrf.mxu0
      %v1744 = vpop.f32.mrf.mxu0
      %v1745 = vadd.f32 0.0, %v1744
      %v1746 = vpop.f32.mrf.mxu0
      %1747 = vdwg.mxu0
      %v1748 = vld [vmem:[#allocation2] sm:$0xff]
      %v1749 = vld [vmem:[#allocation2 + $0x8] sm:$0xff]
      %v1750 = vld [vmem:[#allocation2 + $0x10] sm:$0xff]
      %v1751 = vld [vmem:[#allocation2 + $0x18] sm:$0xff]
      %v1752 = vld [vmem:[#allocation2 + $0x20] sm:$0xff]
      %v1753 = vld [vmem:[#allocation2 + $0x28] sm:$0xff]
      %v1754 = vld [vmem:[#allocation2 + $0x30] sm:$0xff]
      %v1755 = vld [vmem:[#allocation2 + $0x38] sm:$0xff]
      %v1756 = vadd.f32 %v1748, %v1718
      %v1757 = vadd.f32 %v1749, %v1721
      %v1758 = vadd.f32 %v1750, %v1726
      %v1759 = vadd.f32 %v1751, %v1729
      %v1760 = vadd.f32 %v1752, %v1734
      %v1761 = vadd.f32 %v1753, %v1737
      %v1762 = vadd.f32 %v1754, %v1742
      %v1763 = vadd.f32 %v1755, %v1745
      %1764 = vst [vmem:[#allocation2] sm:$0xff] %v1756
      %1765 = vst [vmem:[#allocation2 + $0x8] sm:$0xff] %v1757
      %1766 = vst [vmem:[#allocation2 + $0x10] sm:$0xff] %v1758
      %1767 = vst [vmem:[#allocation2 + $0x18] sm:$0xff] %v1759
      %1768 = vst [vmem:[#allocation2 + $0x20] sm:$0xff] %v1760
      %1769 = vst [vmem:[#allocation2 + $0x28] sm:$0xff] %v1761
      %1770 = vst [vmem:[#allocation2 + $0x30] sm:$0xff] %v1762
      %1771 = vst [vmem:[#allocation2 + $0x38] sm:$0xff] %v1763
      %v1772 = vld [vmem:[#allocation2] sm:$0xff]
      %v1773 = vld [vmem:[#allocation2 + $0x8] sm:$0xff]
      %v1774 = vld [vmem:[#allocation2 + $0x10] sm:$0xff]
      %v1775 = vld [vmem:[#allocation2 + $0x18] sm:$0xff]
      %v1776 = vld [vmem:[#allocation2 + $0x20] sm:$0xff]
      %v1777 = vld [vmem:[#allocation2 + $0x28] sm:$0xff]
      %v1778 = vld [vmem:[#allocation2 + $0x30] sm:$0xff]
      %v1779 = vld [vmem:[#allocation2 + $0x38] sm:$0xff]
      %v1780 = vld [vmem:[%s2] sm:$0x1]
      %v1782 = vlaneseq
      %v1783 = vshrl.u32 %v1782, 7
      %v1784 = vsub.s32 0, %v1783
      %v1785 = vrot.slane %v1780, %v1784
      %v1787 = vmul.f32 %v1772, %v1785
      %v1788 = vmul.f32 %v1773, %v1785
      %v1789 = vmul.f32 %v1774, %v1785
      %v1790 = vmul.f32 %v1775, %v1785
      %v1791 = vmul.f32 %v1776, %v1785
      %v1792 = vmul.f32 %v1777, %v1785
      %v1793 = vmul.f32 %v1778, %v1785
      %v1794 = vmul.f32 %v1779, %v1785
      %v1795 = vld [vmem:[%s3] sm:$0x1]
      %v1797 = vlaneseq
      %v1798 = vshrl.u32 %v1797, 7
      %v1799 = vsub.s32 0, %v1798
      %v1800 = vrot.slane %v1795, %v1799
      %v1802 = vadd.f32 %v1787, %v1800
      %v1803 = vadd.f32 %v1788, %v1800
      %v1804 = vadd.f32 %v1789, %v1800
      %v1805 = vadd.f32 %v1790, %v1800
      %v1806 = vadd.f32 %v1791, %v1800
      %v1807 = vadd.f32 %v1792, %v1800
      %v1808 = vadd.f32 %v1793, %v1800
      %v1809 = vadd.f32 %v1794, %v1800
      %v1810 = vmax.f32 %v1802, 0.0
      %v1811 = vmax.f32 %v1803, 0.0
      %v1812 = vmax.f32 %v1804, 0.0
      %v1813 = vmax.f32 %v1805, 0.0
      %v1814 = vmax.f32 %v1806, 0.0
      %v1815 = vmax.f32 %v1807, 0.0
      %v1816 = vmax.f32 %v1808, 0.0
      %v1817 = vmax.f32 %v1809, 0.0
      %v1818 = vpack.c.bf16 %v1810, %v1810
      %v1819 = vpack.c.bf16 %v1811, %v1811
      %v1820 = vpack.c.bf16 %v1812, %v1812
      %v1821 = vpack.c.bf16 %v1813, %v1813
      %v1822 = vpack.c.bf16 %v1814, %v1814
      %v1823 = vpack.c.bf16 %v1815, %v1815
      %v1824 = vpack.c.bf16 %v1816, %v1816
      %v1825 = vpack.c.bf16 %v1817, %v1817
      %1826 = vst [vmem:[%s219] sm:$0xf] %v1818
      %1827 = vst [vmem:[%s219 + $0x4] sm:$0xf] %v1819
      %1828 = vst [vmem:[%s219 + $0x8] sm:$0xf] %v1820
      %1829 = vst [vmem:[%s219 + $0xc] sm:$0xf] %v1821
      %1830 = vst [vmem:[%s219 + $0x10] sm:$0xf] %v1822
      %1831 = vst [vmem:[%s219 + $0x14] sm:$0xf] %v1823
      %1832 = vst [vmem:[%s219 + $0x18] sm:$0xf] %v1824
      %1833 = vst [vmem:[%s219 + $0x1c] sm:$0xf] %v1825
      %s1834 = smul.u32 8, %s20
      %p1835 = scmp.lt.s32.totalorder %s19, 1
      %s1836 = scalar_select %p1835, %s19, 1
      %p1837 = scmp.lt.s32.totalorder %s1834, 7
      %s1838 = scalar_select %p1837, %s1834, 7
      %s1839 = smul.addr %s1836, 8
      %s1840 = sadd.s32 %s1838, %s1839
      %s1841 = smul.addr %s1840, 4
      %s1842 = scalar_lea.vmem %s4, %s1841
      // Predicated region
      $region37: #{basic_block_forward.3} parent=35 // pred_check
        %p1843 = pneg %p136
      $region38: #{basic_block_forward.3} parent=35 // pred_check_branch
        %1845 = sbr.rel (%p1843) target = $region40
      $region39: #{basic_block_forward.3} parent=35 // pred_region
        %s1846 = smul.u32 8, %s20
      $region40: #{basic_block_forward.3} parent=35 // pred_fallthru
        _
    $region36: #{basic_block_forward.3} parent=5 // pred_fallthru
      _
    %p1847 = scmp.le.s32.totalorder 2, %s10
    // Predicated region
    $region41: #{basic_block_forward.3} parent=5 // pred_check
      %p1848 = pneg %p1847
    $region42: #{basic_block_forward.3} parent=5 // pred_check_branch
      %1850 = sbr.rel (%p1848) target = $region44
    $region43: #{basic_block_forward.3} parent=5 // pred_region
      %s1851 = ssub.s32 %s10, 2
      // Predicated region
      $region45: #{basic_block_forward.3} parent=43 // pred_check
        %p1852 = pneg %p142
      $region46: #{basic_block_forward.3} parent=43 // pred_check_branch
        %1854 = sbr.rel (%p1852) target = $region48
      $region47: #{basic_block_forward.3} parent=43 // pred_region
        %s1855 = smul.u32 8, %s22
        %p1856 = scmp.lt.s32.totalorder %s21, 1
        %s1857 = scalar_select %p1856, %s21, 1
        %p1858 = scmp.lt.s32.totalorder %s1855, 7
        %s1859 = scalar_select %p1858, %s1855, 7
        %s1860 = smul.addr %s1857, 8
        %s1861 = sadd.s32 %s1859, %s1860
        %s1862 = smul.addr %s1861, 4
        %s1863 = scalar_lea.vmem %s4, %s1862
      $region48: #{basic_block_forward.3} parent=43 // pred_fallthru
        _
    $region44: #{basic_block_forward.3} parent=5 // pred_fallthru
      _
  $region6: #{basic_block_forward.3} parent=0 // loop_footer
    %s14 = sadd.s32 1, %s10
  $region7: #{basic_block_forward.3} parent=0 // loop_footer_branch
    %9 = sbr.rel target = $region3
  $region8: #{basic_block_forward.3} parent=0 // loop_exit
    _

// kernel: basic_block_forward.5
$region0: #{basic_block_forward.5}
  #allocation0 [shape = 'u32[]', space=smem, size = 0x4, offset = 0x4, fixed_abs, tag = 'smem constant byte address 0x4 - core index']
  #allocation1 [shape = 'u32[144,128]{1,0:T(1,128)}', space=vmem, size = 0x12000, scoped, tag = 'internal scratch']
  #allocation2 [shape = 'f32[64,128]{1,0:T(8,128)}', space=vmem, size = 0x8000, scoped, tag = 'scratch operand']
  %s0 = inlined_call_operand.vmem [shape: bf16[2,1,10,10,128], index: 0, kind: input, shape index: {}]
  %s1 = inlined_call_operand.vmem [shape: bf16[9,128,128], index: 1, kind: input, shape index: {}]
  %s2 = inlined_call_operand.vmem [shape: f32[1,128], index: 2, kind: input, shape index: {}]
  %s3 = inlined_call_operand.vmem [shape: f32[1,128], index: 3, kind: input, shape index: {}]
  %s4 = inlined_call_operand.vmem [shape: bf16[2,8,8,128], index: 4, kind: input, shape index: {}]
  %s5 = inlined_call_operand.vmem [shape: f32[2,8,8,128], index: 5, kind: output, shape index: {}]
  %s6 = sld [smem:[#allocation0]]
  $region53: #{basic_block_forward.5} parent=0
    _
  %s8 = ssub.s32 1, %s6
  %s9 = scalar_select 0, %s8, %s6
  loop: start=0, step=1, limit=4
  $region2: #{basic_block_forward.5} parent=0 // loop_pre_header
    _
  $region3: #{basic_block_forward.5} parent=0 // loop_header
    %s11 = sphi 0, %s15
    %p12 = scmp.ge.s32.totalorder %s11, 4
    %s18 = sphi 0, %s30
    %s19 = sphi 0, %s26
    %s20 = sphi 0, %s18
    %s21 = sphi 0, %s19
    %s22 = sphi 0, %s20
    %s23 = sphi 0, %s21
    %s33 = sphi 0, %s35
    %s36 = sphi 0, %s33
    %s37 = sphi 0, %s36
    %s53 = sphi 0, %s37
    %s57 = sphi 0, %s57
    %s59 = sphi 0, %s57
    %s60 = sphi 0, %s59
    %s74 = sphi 0, %s60
    %s78 = sphi 0, %s78
    %s80 = sphi 0, %s78
    %s81 = sphi 0, %s80
    %s95 = sphi 0, %s81
    %s99 = sphi 0, %s99
    %s101 = sphi 0, %s99
    %s102 = sphi 0, %s101
    %s116 = sphi 0, %s102
    %s124 = sphi 0, %s126
    %s127 = sphi 0, %s124
    %s128 = sphi 0, %s127
    %s144 = sphi 0, %s128
    %s152 = sphi 0, %s154
    %s155 = sphi 0, %s152
    %s156 = sphi 0, %s155
    %s172 = sphi 0, %s156
  $region4: #{basic_block_forward.5} parent=0 // loop_header_branch
    %14 = sbr.rel (%p12) target = $region8
  $region5: #{basic_block_forward.5} parent=0 // loop_body
    %s16 = ssub.s32 %s11, 1
    %s17 = ssub.s32 %s11, 2
    %s24 = sadd.s32 1, %s19
    %p25 = scmp.ge.s32.totalorder %s24, 1
    %s26 = scalar_select %p25, 0, %s24
    %s27 = sadd.s32 1, %s18
    %s28 = scalar_select %p25, %s27, %s18
    %p29 = scmp.ge.s32.totalorder %s28, 2
    %s30 = scalar_select %p29, 0, %s28
    %s31 = ssub.s32 %s18, %s30
    %p32 = scmp.eq.s32.totalorder %s31, 0
    %s34 = sadd.s32 %s33, 1
    %s35 = scalar_select %p32, %s33, %s34
    %p38 = pneg %p32
    %p39 = scmp.eq.s32.totalorder %s11, 1
    %p40 = por %p38, %p39
    %p41 = scmp.ne.s32.totalorder %s33, %s36
    %p42 = scmp.eq.s32.totalorder %s11, 0
    %p43 = por %p41, %p42
    %p44 = scmp.ne.s32.totalorder %s33, %s36
    %p45 = scmp.eq.s32.totalorder %s16, 1
    %p46 = por %p44, %p45
    %p47 = scmp.ne.s32.totalorder %s36, %s37
    %p48 = scmp.eq.s32.totalorder %s16, 0
    %p49 = por %p47, %p48
    %p50 = scmp.ne.s32.totalorder %s36, %s37
    %p51 = scmp.eq.s32.totalorder %s17, 1
    %p52 = por %p50, %p51
    %p54 = scmp.ne.s32.totalorder %s37, %s53
    %p55 = scmp.eq.s32.totalorder %s17, 0
    %p56 = por %p54, %p55
    %s58 = sadd.s32 %s57, 1
    %p61 = scmp.eq.s32.totalorder %s11, 1
    %p62 = scmp.ne.s32.totalorder %s57, %s59
    %p63 = scmp.eq.s32.totalorder %s11, 0
    %p64 = por %p62, %p63
    %p65 = scmp.ne.s32.totalorder %s57, %s59
    %p66 = scmp.eq.s32.totalorder %s16, 1
    %p67 = por %p65, %p66
    %p68 = scmp.ne.s32.totalorder %s59, %s60
    %p69 = scmp.eq.s32.totalorder %s16, 0
    %p70 = por %p68, %p69
    %p71 = scmp.ne.s32.totalorder %s59, %s60
    %p72 = scmp.eq.s32.totalorder %s17, 1
    %p73 = por %p71, %p72
    %p75 = scmp.ne.s32.totalorder %s60, %s74
    %p76 = scmp.eq.s32.totalorder %s17, 0
    %p77 = por %p75, %p76
    %s79 = sadd.s32 %s78, 1
    %p82 = scmp.eq.s32.totalorder %s11, 1
    %p83 = scmp.ne.s32.totalorder %s78, %s80
    %p84 = scmp.eq.s32.totalorder %s11, 0
    %p85 = por %p83, %p84
    %p86 = scmp.ne.s32.totalorder %s78, %s80
    %p87 = scmp.eq.s32.totalorder %s16, 1
    %p88 = por %p86, %p87
    %p89 = scmp.ne.s32.totalorder %s80, %s81
    %p90 = scmp.eq.s32.totalorder %s16, 0
    %p91 = por %p89, %p90
    %p92 = scmp.ne.s32.totalorder %s80, %s81
    %p93 = scmp.eq.s32.totalorder %s17, 1
    %p94 = por %p92, %p93
    %p96 = scmp.ne.s32.totalorder %s81, %s95
    %p97 = scmp.eq.s32.totalorder %s17, 0
    %p98 = por %p96, %p97
    %s100 = sadd.s32 %s99, 1
    %p103 = scmp.eq.s32.totalorder %s11, 1
    %p104 = scmp.ne.s32.totalorder %s99, %s101
    %p105 = scmp.eq.s32.totalorder %s11, 0
    %p106 = por %p104, %p105
    %p107 = scmp.ne.s32.totalorder %s99, %s101
    %p108 = scmp.eq.s32.totalorder %s16, 1
    %p109 = por %p107, %p108
    %p110 = scmp.ne.s32.totalorder %s101, %s102
    %p111 = scmp.eq.s32.totalorder %s16, 0
    %p112 = por %p110, %p111
    %p113 = scmp.ne.s32.totalorder %s101, %s102
    %p114 = scmp.eq.s32.totalorder %s17, 1
    %p115 = por %p113, %p114
    %p117 = scmp.ne.s32.totalorder %s102, %s116
    %p118 = scmp.eq.s32.totalorder %s17, 0
    %p119 = por %p117, %p118
    %s120 = ssub.s32 %s18, %s30
    %s121 = ssub.s32 %s19, %s26
    %s122 = sor.u32 %s120, %s121
    %p123 = scmp.eq.s32.totalorder %s122, 0
    %s125 = sadd.s32 %s124, 1
    %s126 = scalar_select %p123, %s124, %s125
    %p129 = pneg %p123
    %p130 = scmp.eq.s32.totalorder %s11, 1
    %p131 = por %p129, %p130
    %p132 = scmp.ne.s32.totalorder %s124, %s127
    %p133 = scmp.eq.s32.totalorder %s11, 0
    %p134 = por %p132, %p133
    %p135 = scmp.ne.s32.totalorder %s124, %s127
    %p136 = scmp.eq.s32.totalorder %s16, 1
    %p137 = por %p135, %p136
    %p138 = scmp.ne.s32.totalorder %s127, %s128
    %p139 = scmp.eq.s32.totalorder %s16, 0
    %p140 = por %p138, %p139
    %p141 = scmp.ne.s32.totalorder %s127, %s128
    %p142 = scmp.eq.s32.totalorder %s17, 1
    %p143 = por %p141, %p142
    %p145 = scmp.ne.s32.totalorder %s128, %s144
    %p146 = scmp.eq.s32.totalorder %s17, 0
    %p147 = por %p145, %p146
    %s148 = ssub.s32 %s18, %s30
    %s149 = ssub.s32 %s19, %s26
    %s150 = sor.u32 %s148, %s149
    %p151 = scmp.eq.s32.totalorder %s150, 0
    %s153 = sadd.s32 %s152, 1
    %s154 = scalar_select %p151, %s152, %s153
    %p157 = pneg %p151
    %p158 = scmp.eq.s32.totalorder %s11, 1
    %p159 = por %p157, %p158
    %p160 = scmp.ne.s32.totalorder %s152, %s155
    %p161 = scmp.eq.s32.totalorder %s11, 0
    %p162 = por %p160, %p161
    %p163 = scmp.ne.s32.totalorder %s152, %s155
    %p164 = scmp.eq.s32.totalorder %s16, 1
    %p165 = por %p163, %p164
    %p166 = scmp.ne.s32.totalorder %s155, %s156
    %p167 = scmp.eq.s32.totalorder %s16, 0
    %p168 = por %p166, %p167
    %p169 = scmp.ne.s32.totalorder %s155, %s156
    %p170 = scmp.eq.s32.totalorder %s17, 1
    %p171 = por %p169, %p170
    %p173 = scmp.ne.s32.totalorder %s156, %s172
    %p174 = scmp.eq.s32.totalorder %s17, 0
    %p175 = por %p173, %p174
    %p176 = scmp.le.s32.totalorder 1, %s11
    %p177 = scmp.lt.s32.totalorder %s11, 3
    %p178 = pnand %p176, %p177
    %p179 = pneg %p178
    // Predicated region
    $region9: #{basic_block_forward.5} parent=5 // pred_check
      _
    $region10: #{basic_block_forward.5} parent=5 // pred_check_branch
      %181 = sbr.rel (%p178) target = $region12
    $region11: #{basic_block_forward.5} parent=5 // pred_region
      %s182 = ssub.s32 %s11, 1
      // Predicated region
      $region13: #{basic_block_forward.5} parent=11 // pred_check
        %p183 = pneg %p70
      $region14: #{basic_block_forward.5} parent=11 // pred_check_branch
        %185 = sbr.rel (%p183) target = $region16
      $region15: #{basic_block_forward.5} parent=11 // pred_region
        _
      $region16: #{basic_block_forward.5} parent=11 // pred_fallthru
        _
      // Predicated region
      $region17: #{basic_block_forward.5} parent=11 // pred_check
        %p186 = pneg %p91
      $region18: #{basic_block_forward.5} parent=11 // pred_check_branch
        %188 = sbr.rel (%p186) target = $region20
      $region19: #{basic_block_forward.5} parent=11 // pred_region
        _
      $region20: #{basic_block_forward.5} parent=11 // pred_fallthru
        _
      // Predicated region
      $region21: #{basic_block_forward.5} parent=11 // pred_check
        %p189 = pneg %p112
      $region22: #{basic_block_forward.5} parent=11 // pred_check_branch
        %191 = sbr.rel (%p189) target = $region24
      $region23: #{basic_block_forward.5} parent=11 // pred_region
        _
      $region24: #{basic_block_forward.5} parent=11 // pred_fallthru
        _
    $region12: #{basic_block_forward.5} parent=5 // pred_fallthru
      _
    %p192 = scmp.lt.s32.totalorder %s11, 2
    // Predicated region
    $region25: #{basic_block_forward.5} parent=5 // pred_check
      %p193 = pneg %p192
    $region26: #{basic_block_forward.5} parent=5 // pred_check_branch
      %195 = sbr.rel (%p193) target = $region28
    $region27: #{basic_block_forward.5} parent=5 // pred_region
      // Predicated region
      $region29: #{basic_block_forward.5} parent=27 // pred_check
        %p196 = pneg %p43
      $region30: #{basic_block_forward.5} parent=27 // pred_check_branch
        %198 = sbr.rel (%p196) target = $region32
      $region31: #{basic_block_forward.5} parent=27 // pred_region
        %p199 = scmp.lt.s32.totalorder %s18, 1
        %s200 = scalar_select %p199, %s18, 1
        %s201 = smul.addr %s200, 20
        %s202 = smul.addr %s201, 4
        %s203 = scalar_lea.vmem %s0, %s202
      $region32: #{basic_block_forward.5} parent=27 // pred_fallthru
        _
      // Predicated region
      $region33: #{basic_block_forward.5} parent=27 // pred_check
        %p204 = pneg %p134
      $region34: #{basic_block_forward.5} parent=27 // pred_check_branch
        %206 = sbr.rel (%p204) target = $region36
      $region35: #{basic_block_forward.5} parent=27 // pred_region
        %s207 = smul.u32 8, %s19
        %p208 = scmp.lt.s32.totalorder %s18, 1
        %s209 = scalar_select %p208, %s18, 1
        %p210 = scmp.lt.s32.totalorder %s207, 7
        %s211 = scalar_select %p210, %s207, 7
        %s212 = smul.addr %s209, 8
        %s213 = sadd.s32 %s211, %s212
        %s214 = smul.addr %s213, 4
        %s215 = scalar_lea.vmem %s4, %s214
        %s216 = smul.u32 8, %s19
      $region36: #{basic_block_forward.5} parent=27 // pred_fallthru
        _
    $region28: #{basic_block_forward.5} parent=5 // pred_fallthru
      _
    %p217 = scmp.le.s32.totalorder 1, %s11
    %p218 = scmp.lt.s32.totalorder %s11, 3
    %p219 = pnand %p217, %p218
    %p220 = pneg %p219
    // Predicated region
    $region37: #{basic_block_forward.5} parent=5 // pred_check
      _
    $region38: #{basic_block_forward.5} parent=5 // pred_check_branch
      %222 = sbr.rel (%p219) target = $region40
    $region39: #{basic_block_forward.5} parent=5 // pred_region
      %s223 = ssub.s32 %s11, 1
      %p224 = scmp.lt.s32.totalorder %s20, 1
      %s225 = scalar_select %p224, %s20, 1
      %s226 = smul.addr %s225, 20
      %s227 = smul.addr %s226, 4
      %s228 = scalar_lea.vmem %s0, %s227
      %p229 = pneg %p49
      %p230 = pneg %p46
      %p231 = pneg %p70
      %p232 = pneg %p67
      %p233 = pneg %p91
      %p234 = pneg %p88
      %p235 = pneg %p112
      %p236 = pneg %p109
      %s237 = smul.u32 8, %s21
      %p238 = scmp.lt.s32.totalorder %s20, 1
      %s239 = scalar_select %p238, %s20, 1
      %p240 = scmp.lt.s32.totalorder %s237, 7
      %s241 = scalar_select %p240, %s237, 7
      %s242 = smul.addr %s239, 8
      %s243 = sadd.s32 %s241, %s242
      %s244 = smul.addr %s243, 4
      %s245 = scalar_lea.vmem %s4, %s244
      %p246 = pneg %p140
      %p247 = pneg %p137
      %p248 = pneg %p168
      %p249 = pneg %p165
      %s250 = smul.u32 8, %s21
      %p251 = scmp.lt.s32.totalorder %s20, 1
      %s252 = scalar_select %p251, %s20, 1
      %p253 = scmp.lt.s32.totalorder %s250, 7
      %s254 = scalar_select %p253, %s250, 7
      %s255 = smul.addr %s252, 8
      %s256 = sadd.s32 %s254, %s255
      %s257 = smul.addr %s256, 8
      %s258 = scalar_lea.vmem %s5, %s257
      %p259 = scmp.lt.s32.totalorder %s20, 1
      %s260 = scalar_select %p259, %s20, 1
      %s261 = smul.addr %s260, 20
      %s262 = smul.addr %s261, 4
      %s263 = scalar_lea.vmem %s0, %s262
      %s264 = smul.u32 8, %s21
      %p265 = scmp.lt.s32.totalorder %s20, 1
      %s266 = scalar_select %p265, %s20, 1
      %p267 = scmp.lt.s32.totalorder %s264, 7
      %s268 = scalar_select %p267, %s264, 7
      %s269 = smul.addr %s266, 8
      %s270 = sadd.s32 %s268, %s269
      %s271 = smul.addr %s270, 4
      %s272 = scalar_lea.vmem %s4, %s271
      %s273 = smul.u32 8, %s21
      %s274 = smul.u32 8, %s21
      %p275 = scmp.lt.s32.totalorder %s20, 1
      %s276 = scalar_select %p275, %s20, 1
      %p277 = scmp.lt.s32.totalorder %s274, 7
      %s278 = scalar_select %p277, %s274, 7
      %s279 = smul.addr %s276, 8
      %s280 = sadd.s32 %s278, %s279
      %s281 = smul.addr %s280, 8
      %s282 = scalar_lea.vmem %s5, %s281
      %s283 = smul.u32 8, %s21
      %s285 = smul.u32 %s21, 8
      %s286 = smul.u32 %s285, 2
      %s287 = smul.addr %s286, 4
      %s288 = scalar_lea.vmem %s263, %s287
      %v289 = vld [vmem:[%s288] sm:$0xf]
      %v290 = vld [vmem:[%s288 + $0x8] sm:$0xf]
      %v291 = vld [vmem:[%s288 + $0x10] sm:$0xf]
      %v292 = vld [vmem:[%s288 + $0x18] sm:$0xf]
      %v293 = vld [vmem:[%s288 + $0x20] sm:$0xf]
      %v294 = vld [vmem:[%s288 + $0x28] sm:$0xf]
      %v295 = vld [vmem:[%s288 + $0x30] sm:$0xf]
      %v296 = vld [vmem:[%s288 + $0x38] sm:$0xf]
      %v297 = vld [vmem:[%s1] sm:$0xf]
      %v298 = vld [vmem:[%s1 + $0x4] sm:$0xf]
      %v299 = vld [vmem:[%s1 + $0x8] sm:$0xf]
      %v300 = vld [vmem:[%s1 + $0xc] sm:$0xf]
      %v301 = vld [vmem:[%s1 + $0x10] sm:$0xf]
      %v302 = vld [vmem:[%s1 + $0x14] sm:$0xf]
      %v303 = vld [vmem:[%s1 + $0x18] sm:$0xf]
      %v304 = vld [vmem:[%s1 + $0x1c] sm:$0xf]
      %v305 = vld [vmem:[%s1 + $0x20] sm:$0xf]
      %v306 = vld [vmem:[%s1 + $0x24] sm:$0xf]
      %v307 = vld [vmem:[%s1 + $0x28] sm:$0xf]
      %v308 = vld [vmem:[%s1 + $0x2c] sm:$0xf]
      %v309 = vld [vmem:[%s1 + $0x30] sm:$0xf]
      %v310 = vld [vmem:[%s1 + $0x34] sm:$0xf]
      %v311 = vld [vmem:[%s1 + $0x38] sm:$0xf]
      %v312 = vld [vmem:[%s1 + $0x3c] sm:$0xf]
      %v321 = vunpack.c.l.b16 %v289
      %v322 = vunpack.c.l.b16 %v290
      %v323 = vunpack.c.l.b16 %v291
      %v324 = vunpack.c.l.b16 %v292
      %v325 = vunpack.c.l.b16 %v293
      %v326 = vunpack.c.l.b16 %v294
      %v327 = vunpack.c.l.b16 %v295
      %v328 = vunpack.c.l.b16 %v296
      %v329 = vpack.c.b16 %v322, %v321
      %v330 = vpack.c.b16 %v324, %v323
      %v331 = vpack.c.b16 %v326, %v325
      %v332 = vpack.c.b16 %v328, %v327
      %v353 = vunpack.c.l.b16 %v297
      %v354 = vunpack.c.l.b16 %v298
      %v355 = vunpack.c.l.b16 %v299
      %v356 = vunpack.c.l.b16 %v300
      %v357 = vunpack.c.l.b16 %v301
      %v358 = vunpack.c.l.b16 %v302
      %v359 = vunpack.c.l.b16 %v303
      %v360 = vunpack.c.l.b16 %v304
      %v361 = vunpack.c.l.b16 %v305
      %v362 = vunpack.c.l.b16 %v306
      %v363 = vunpack.c.l.b16 %v307
      %v364 = vunpack.c.l.b16 %v308
      %v365 = vunpack.c.l.b16 %v309
      %v366 = vunpack.c.l.b16 %v310
      %v367 = vunpack.c.l.b16 %v311
      %v368 = vunpack.c.l.b16 %v312
      %v369 = vpack.c.b16 %v354, %v353
      %v370 = vpack.c.b16 %v356, %v355
      %v371 = vpack.c.b16 %v358, %v357
      %v372 = vpack.c.b16 %v360, %v359
      %v373 = vpack.c.b16 %v362, %v361
      %v374 = vpack.c.b16 %v364, %v363
      %v375 = vpack.c.b16 %v366, %v365
      %v376 = vpack.c.b16 %v368, %v367
      %385 = vmatprep.subr.bf16.mxu0 0
      %386 = vmatpush1.bf16.msra.mxu0 %v376
      %387 = vmatprep.subr.bf16.mxu0 0
      %388 = vmatpush1.bf16.msra.mxu0 %v375
      %389 = vmatprep.subr.bf16.mxu0 0
      %390 = vmatpush1.bf16.msra.mxu0 %v374
      %391 = vmatprep.subr.bf16.mxu0 0
      %392 = vmatpush1.bf16.msra.mxu0 %v373
      %393 = vmatprep.subr.bf16.mxu0 0
      %394 = vmatpush1.bf16.msra.mxu0 %v372
      %395 = vmatprep.subr.bf16.mxu0 0
      %396 = vmatpush1.bf16.msra.mxu0 %v371
      %397 = vmatprep.subr.bf16.mxu0 0
      %398 = vmatpush1.bf16.msra.mxu0 %v370
      %399 = vmatprep.subr.bf16.mxu0 0
      %400 = vmatpush1.bf16.msra.mxu0 %v369
      %401 = vmatprep.subr.bf16.mxu0 0
      %402 = vmatpush2.bf16.msra.mxu0 0
      %403 = vmatprep.subr.bf16.mxu0 0
      %404 = vmatpush2.bf16.msra.mxu0 0
      %405 = vmatprep.subr.bf16.mxu0 0
      %406 = vmatpush2.bf16.msra.mxu0 0
      %407 = vmatprep.subr.bf16.mxu0 0
      %408 = vmatpush2.bf16.msra.mxu0 0
      %409 = vmatprep.subr.bf16.mxu0 0
      %410 = vmatpush2.bf16.msra.mxu0 0
      %411 = vmatprep.subr.bf16.mxu0 0
      %412 = vmatpush2.bf16.msra.mxu0 0
      %413 = vmatprep.subr.bf16.mxu0 0
      %414 = vmatpush2.bf16.msra.mxu0 0
      %415 = vmatprep.subr.bf16.mxu0 0
      %416 = vmatpush2.bf16.msra.mxu0 0
      %417 = vmatprep.mubr.bf16.mxu0 0
      %418 = vmatmul.mubr.bf16.gmra.mxu0 %v329
      %v419 = vpop.f32.mrf.mxu0
      %v420 = vadd.f32 0.0, %v419
      %v421 = vpop.f32.mrf.mxu0
      %v422 = vpop.f32.mrf.mxu0
      %v423 = vadd.f32 0.0, %v422
      %v424 = vpop.f32.mrf.mxu0
      %425 = vmatprep.mubr.bf16.mxu0 0
      %426 = vmatmul.mubr.bf16.gmra.mxu0 %v330
      %v427 = vpop.f32.mrf.mxu0
      %v428 = vadd.f32 0.0, %v427
      %v429 = vpop.f32.mrf.mxu0
      %v430 = vpop.f32.mrf.mxu0
      %v431 = vadd.f32 0.0, %v430
      %v432 = vpop.f32.mrf.mxu0
      %433 = vmatprep.mubr.bf16.mxu0 0
      %434 = vmatmul.mubr.bf16.gmra.mxu0 %v331
      %v435 = vpop.f32.mrf.mxu0
      %v436 = vadd.f32 0.0, %v435
      %v437 = vpop.f32.mrf.mxu0
      %v438 = vpop.f32.mrf.mxu0
      %v439 = vadd.f32 0.0, %v438
      %v440 = vpop.f32.mrf.mxu0
      %441 = vmatprep.mubr.bf16.mxu0 0
      %442 = vmatmul.mubr.bf16.gmra.mxu0 %v332
      %v443 = vpop.f32.mrf.mxu0
      %v444 = vadd.f32 0.0, %v443
      %v445 = vpop.f32.mrf.mxu0
      %v446 = vpop.f32.mrf.mxu0
      %v447 = vadd.f32 0.0, %v446
      %v448 = vpop.f32.mrf.mxu0
      %449 = vdwg.mxu0
      %450 = vst [vmem:[#allocation2] sm:$0xff] %v420
      %451 = vst [vmem:[#allocation2 + $0x8] sm:$0xff] %v423
      %452 = vst [vmem:[#allocation2 + $0x10] sm:$0xff] %v428
      %453 = vst [vmem:[#allocation2 + $0x18] sm:$0xff] %v431
      %454 = vst [vmem:[#allocation2 + $0x20] sm:$0xff] %v436
      %455 = vst [vmem:[#allocation2 + $0x28] sm:$0xff] %v439
      %456 = vst [vmem:[#allocation2 + $0x30] sm:$0xff] %v444
      %457 = vst [vmem:[#allocation2 + $0x38] sm:$0xff] %v447
      %v458 = vld [vmem:[%s288] sm:$0xf]
      %v459 = vld [vmem:[%s288 + $0x4] sm:$0x1]
      %v460 = vld [vmem:[%s288 + $0x8] sm:$0xf]
      %v461 = vld [vmem:[%s288 + $0xc] sm:$0x1]
      %v462 = vld [vmem:[%s288 + $0x10] sm:$0xf]
      %v463 = vld [vmem:[%s288 + $0x14] sm:$0x1]
      %v464 = vld [vmem:[%s288 + $0x18] sm:$0xf]
      %v465 = vld [vmem:[%s288 + $0x1c] sm:$0x1]
      %v466 = vld [vmem:[%s288 + $0x20] sm:$0xf]
      %v467 = vld [vmem:[%s288 + $0x24] sm:$0x1]
      %v468 = vld [vmem:[%s288 + $0x28] sm:$0xf]
      %v469 = vld [vmem:[%s288 + $0x2c] sm:$0x1]
      %v470 = vld [vmem:[%s288 + $0x30] sm:$0xf]
      %v471 = vld [vmem:[%s288 + $0x34] sm:$0x1]
      %v472 = vld [vmem:[%s288 + $0x38] sm:$0xf]
      %v473 = vld [vmem:[%s288 + $0x3c] sm:$0x1]
      %vm474 = vsmask.f32 3328
      %vm475 = vsmask.f32 7440
      %vm476 = vmor %vm474, %vm475
      %v478 = vshrl.u32 %v458, 16
      %v480 = vrot.slane %v478, 4
      %v481 = vshll.u32 %v458, 16
      %v483 = vrot.slane %v481, 5
      %v484 = vor.u32 %v480, %v483
      %v485 = vrot.slane %v484, 4
      %v487 = vshll.u32 %v459, 16
      %v489 = vrot.slane %v487, 5
      %v490 = vsel %vm476, %v485, %v489
      %v492 = vshrl.u32 %v460, 16
      %v494 = vrot.slane %v492, 4
      %v495 = vshll.u32 %v460, 16
      %v497 = vrot.slane %v495, 5
      %v498 = vor.u32 %v494, %v497
      %v499 = vrot.slane %v498, 4
      %v501 = vshll.u32 %v461, 16
      %v503 = vrot.slane %v501, 5
      %v504 = vsel %vm476, %v499, %v503
      %v506 = vshrl.u32 %v462, 16
      %v508 = vrot.slane %v506, 4
      %v509 = vshll.u32 %v462, 16
      %v511 = vrot.slane %v509, 5
      %v512 = vor.u32 %v508, %v511
      %v513 = vrot.slane %v512, 4
      %v515 = vshll.u32 %v463, 16
      %v517 = vrot.slane %v515, 5
      %v518 = vsel %vm476, %v513, %v517
      %v520 = vshrl.u32 %v464, 16
      %v522 = vrot.slane %v520, 4
      %v523 = vshll.u32 %v464, 16
      %v525 = vrot.slane %v523, 5
      %v526 = vor.u32 %v522, %v525
      %v527 = vrot.slane %v526, 4
      %v529 = vshll.u32 %v465, 16
      %v531 = vrot.slane %v529, 5
      %v532 = vsel %vm476, %v527, %v531
      %v534 = vshrl.u32 %v466, 16
      %v536 = vrot.slane %v534, 4
      %v537 = vshll.u32 %v466, 16
      %v539 = vrot.slane %v537, 5
      %v540 = vor.u32 %v536, %v539
      %v541 = vrot.slane %v540, 4
      %v543 = vshll.u32 %v467, 16
      %v545 = vrot.slane %v543, 5
      %v546 = vsel %vm476, %v541, %v545
      %v548 = vshrl.u32 %v468, 16
      %v550 = vrot.slane %v548, 4
      %v551 = vshll.u32 %v468, 16
      %v553 = vrot.slane %v551, 5
      %v554 = vor.u32 %v550, %v553
      %v555 = vrot.slane %v554, 4
      %v557 = vshll.u32 %v469, 16
      %v559 = vrot.slane %v557, 5
      %v560 = vsel %vm476, %v555, %v559
      %v562 = vshrl.u32 %v470, 16
      %v564 = vrot.slane %v562, 4
      %v565 = vshll.u32 %v470, 16
      %v567 = vrot.slane %v565, 5
      %v568 = vor.u32 %v564, %v567
      %v569 = vrot.slane %v568, 4
      %v571 = vshll.u32 %v471, 16
      %v573 = vrot.slane %v571, 5
      %v574 = vsel %vm476, %v569, %v573
      %v576 = vshrl.u32 %v472, 16
      %v578 = vrot.slane %v576, 4
      %v579 = vshll.u32 %v472, 16
      %v581 = vrot.slane %v579, 5
      %v582 = vor.u32 %v578, %v581
      %v583 = vrot.slane %v582, 4
      %v585 = vshll.u32 %v473, 16
      %v587 = vrot.slane %v585, 5
      %v588 = vsel %vm476, %v583, %v587
      %s589 = scalar_lea.vmem %s1, 64
      %v590 = vld [vmem:[%s589] sm:$0xf]
      %v591 = vld [vmem:[%s589 + $0x4] sm:$0xf]
      %v592 = vld [vmem:[%s589 + $0x8] sm:$0xf]
      %v593 = vld [vmem:[%s589 + $0xc] sm:$0xf]
      %v594 = vld [vmem:[%s589 + $0x10] sm:$0xf]
      %v595 = vld [vmem:[%s589 + $0x14] sm:$0xf]
      %v596 = vld [vmem:[%s589 + $0x18] sm:$0xf]
      %v597 = vld [vmem:[%s589 + $0x1c] sm:$0xf]
      %v598 = vld [vmem:[%s589 + $0x20] sm:$0xf]
      %v599 = vld [vmem:[%s589 + $0x24] sm:$0xf]
      %v600 = vld [vmem:[%s589 + $0x28] sm:$0xf]
      %v601 = vld [vmem:[%s589 + $0x2c] sm:$0xf]
      %v602 = vld [vmem:[%s589 + $0x30] sm:$0xf]
      %v603 = vld [vmem:[%s589 + $0x34] sm:$0xf]
      %v604 = vld [vmem:[%s589 + $0x38] sm:$0xf]
      %v605 = vld [vmem:[%s589 + $0x3c] sm:$0xf]
      %v606 = vunpack.c.l.b16 %v490
      %v607 = vunpack.c.l.b16 %v504
      %v608 = vunpack.c.l.b16 %v518
      %v609 = vunpack.c.l.b16 %v532
      %v610 = vunpack.c.l.b16 %v546
      %v611 = vunpack.c.l.b16 %v560
      %v612 = vunpack.c.l.b16 %v574
      %v613 = vunpack.c.l.b16 %v588
      %v614 = vpack.c.b16 %v607, %v606
      %v615 = vpack.c.b16 %v609, %v608
      %v616 = vpack.c.b16 %v611, %v610
      %v617 = vpack.c.b16 %v613, %v612
      %v638 = vunpack.c.l.b16 %v590
      %v639 = vunpack.c.l.b16 %v591
      %v640 = vunpack.c.l.b16 %v592
      %v641 = vunpack.c.l.b16 %v593
      %v642 = vunpack.c.l.b16 %v594
      %v643 = vunpack.c.l.b16 %v595
      %v644 = vunpack.c.l.b16 %v596
      %v645 = vunpack.c.l.b16 %v597
      %v646 = vunpack.c.l.b16 %v598
      %v647 = vunpack.c.l.b16 %v599
      %v648 = vunpack.c.l.b16 %v600
      %v649 = vunpack.c.l.b16 %v601
      %v650 = vunpack.c.l.b16 %v602
      %v651 = vunpack.c.l.b16 %v603
      %v652 = vunpack.c.l.b16 %v604
      %v653 = vunpack.c.l.b16 %v605
      %v654 = vpack.c.b16 %v639, %v638
      %v655 = vpack.c.b16 %v641, %v640
      %v656 = vpack.c.b16 %v643, %v642
      %v657 = vpack.c.b16 %v645, %v644
      %v658 = vpack.c.b16 %v647, %v646
      %v659 = vpack.c.b16 %v649, %v648
      %v660 = vpack.c.b16 %v651, %v650
      %v661 = vpack.c.b16 %v653, %v652
      %670 = vmatprep.subr.bf16.mxu0 0
      %671 = vmatpush1.bf16.msra.mxu0 %v661
      %672 = vmatprep.subr.bf16.mxu0 0
      %673 = vmatpush1.bf16.msra.mxu0 %v660
      %674 = vmatprep.subr.bf16.mxu0 0
      %675 = vmatpush1.bf16.msra.mxu0 %v659
      %676 = vmatprep.subr.bf16.mxu0 0
      %677 = vmatpush1.bf16.msra.mxu0 %v658
      %678 = vmatprep.subr.bf16.mxu0 0
      %679 = vmatpush1.bf16.msra.mxu0 %v657
      %680 = vmatprep.subr.bf16.mxu0 0
      %681 = vmatpush1.bf16.msra.mxu0 %v656
      %682 = vmatprep.subr.bf16.mxu0 0
      %683 = vmatpush1.bf16.msra.mxu0 %v655
      %684 = vmatprep.subr.bf16.mxu0 0
      %685 = vmatpush1.bf16.msra.mxu0 %v654
      %686 = vmatprep.subr.bf16.mxu0 0
      %687 = vmatpush2.bf16.msra.mxu0 0
      %688 = vmatprep.subr.bf16.mxu0 0
      %689 = vmatpush2.bf16.msra.mxu0 0
      %690 = vmatprep.subr.bf16.mxu0 0
      %691 = vmatpush2.bf16.msra.mxu0 0
      %692 = vmatprep.subr.bf16.mxu0 0
      %693 = vmatpush2.bf16.msra.mxu0 0
      %694 = vmatprep.subr.bf16.mxu0 0
      %695 = vmatpush2.bf16.msra.mxu0 0
      %696 = vmatprep.subr.bf16.mxu0 0
      %697 = vmatpush2.bf16.msra.mxu0 0
      %698 = vmatprep.subr.bf16.mxu0 0
      %699 = vmatpush2.bf16.msra.mxu0 0
      %700 = vmatprep.subr.bf16.mxu0 0
      %701 = vmatpush2.bf16.msra.mxu0 0
      %702 = vmatprep.mubr.bf16.mxu0 0
      %703 = vmatmul.mubr.bf16.gmra.mxu0 %v614
      %v704 = vpop.f32.mrf.mxu0
      %v705 = vadd.f32 0.0, %v704
      %v706 = vpop.f32.mrf.mxu0
      %v707 = vpop.f32.mrf.mxu0
      %v708 = vadd.f32 0.0, %v707
      %v709 = vpop.f32.mrf.mxu0
      %710 = vmatprep.mubr.bf16.mxu0 0
      %711 = vmatmul.mubr.bf16.gmra.mxu0 %v615
      %v712 = vpop.f32.mrf.mxu0
      %v713 = vadd.f32 0.0, %v712
      %v714 = vpop.f32.mrf.mxu0
      %v715 = vpop.f32.mrf.mxu0
      %v716 = vadd.f32 0.0, %v715
      %v717 = vpop.f32.mrf.mxu0
      %718 = vmatprep.mubr.bf16.mxu0 0
      %719 = vmatmul.mubr.bf16.gmra.mxu0 %v616
      %v720 = vpop.f32.mrf.mxu0
      %v721 = vadd.f32 0.0, %v720
      %v722 = vpop.f32.mrf.mxu0
      %v723 = vpop.f32.mrf.mxu0
      %v724 = vadd.f32 0.0, %v723
      %v725 = vpop.f32.mrf.mxu0
      %726 = vmatprep.mubr.bf16.mxu0 0
      %727 = vmatmul.mubr.bf16.gmra.mxu0 %v617
      %v728 = vpop.f32.mrf.mxu0
      %v729 = vadd.f32 0.0, %v728
      %v730 = vpop.f32.mrf.mxu0
      %v731 = vpop.f32.mrf.mxu0
      %v732 = vadd.f32 0.0, %v731
      %v733 = vpop.f32.mrf.mxu0
      %734 = vdwg.mxu0
      %v735 = vld [vmem:[#allocation2] sm:$0xff]
      %v736 = vld [vmem:[#allocation2 + $0x8] sm:$0xff]
      %v737 = vld [vmem:[#allocation2 + $0x10] sm:$0xff]
      %v738 = vld [vmem:[#allocation2 + $0x18] sm:$0xff]
      %v739 = vld [vmem:[#allocation2 + $0x20] sm:$0xff]
      %v740 = vld [vmem:[#allocation2 + $0x28] sm:$0xff]
      %v741 = vld [vmem:[#allocation2 + $0x30] sm:$0xff]
      %v742 = vld [vmem:[#allocation2 + $0x38] sm:$0xff]
      %v743 = vadd.f32 %v735, %v705
      %v744 = vadd.f32 %v736, %v708
      %v745 = vadd.f32 %v737, %v713
      %v746 = vadd.f32 %v738, %v716
      %v747 = vadd.f32 %v739, %v721
      %v748 = vadd.f32 %v740, %v724
      %v749 = vadd.f32 %v741, %v729
      %v750 = vadd.f32 %v742, %v732
      %751 = vst [vmem:[#allocation2] sm:$0xff] %v743
      %752 = vst [vmem:[#allocation2 + $0x8] sm:$0xff] %v744
      %753 = vst [vmem:[#allocation2 + $0x10] sm:$0xff] %v745
      %754 = vst [vmem:[#allocation2 + $0x18] sm:$0xff] %v746
      %755 = vst [vmem:[#allocation2 + $0x20] sm:$0xff] %v747
      %756 = vst [vmem:[#allocation2 + $0x28] sm:$0xff] %v748
      %757 = vst [vmem:[#allocation2 + $0x30] sm:$0xff] %v749
      %758 = vst [vmem:[#allocation2 + $0x38] sm:$0xff] %v750
      %v759 = vld [vmem:[%s288] sm:$0xe]
      %v760 = vld [vmem:[%s288 + $0x4] sm:$0x1]
      %v761 = vld [vmem:[%s288 + $0x8] sm:$0xe]
      %v762 = vld [vmem:[%s288 + $0xc] sm:$0x1]
      %v763 = vld [vmem:[%s288 + $0x10] sm:$0xe]
      %v764 = vld [vmem:[%s288 + $0x14] sm:$0x1]
      %v765 = vld [vmem:[%s288 + $0x18] sm:$0xe]
      %v766 = vld [vmem:[%s288 + $0x1c] sm:$0x1]
      %v767 = vld [vmem:[%s288 + $0x20] sm:$0xe]
      %v768 = vld [vmem:[%s288 + $0x24] sm:$0x1]
      %v769 = vld [vmem:[%s288 + $0x28] sm:$0xe]
      %v770 = vld [vmem:[%s288 + $0x2c] sm:$0x1]
      %v771 = vld [vmem:[%s288 + $0x30] sm:$0xe]
      %v772 = vld [vmem:[%s288 + $0x34] sm:$0x1]
      %v773 = vld [vmem:[%s288 + $0x38] sm:$0xe]
      %v774 = vld [vmem:[%s288 + $0x3c] sm:$0x1]
      %vm791 = vcmask 1042432
      %vm792 = vcmask 1046532
      %vm793 = vmor %vm791, %vm792
      %v794 = vrot.slane %v759, 5
      %v795 = vrot.slane %v794, 4
      %v796 = vrot.slane %v760, 5
      %v797 = vsel %vm793, %v795, %v796
      %v798 = vrot.slane %v761, 5
      %v799 = vrot.slane %v798, 4
      %v800 = vrot.slane %v762, 5
      %v801 = vsel %vm793, %v799, %v800
      %v802 = vrot.slane %v763, 5
      %v803 = vrot.slane %v802, 4
      %v804 = vrot.slane %v764, 5
      %v805 = vsel %vm793, %v803, %v804
      %v806 = vrot.slane %v765, 5
      %v807 = vrot.slane %v806, 4
      %v808 = vrot.slane %v766, 5
      %v809 = vsel %vm793, %v807, %v808
      %v810 = vrot.slane %v767, 5
      %v811 = vrot.slane %v810, 4
      %v812 = vrot.slane %v768, 5
      %v813 = vsel %vm793, %v811, %v812
      %v814 = vrot.slane %v769, 5
      %v815 = vrot.slane %v814, 4
      %v816 = vrot.slane %v770, 5
      %v817 = vsel %vm793, %v815, %v816
      %v818 = vrot.slane %v771, 5
      %v819 = vrot.slane %v818, 4
      %v820 = vrot.slane %v772, 5
      %v821 = vsel %vm793, %v819, %v820
      %v822 = vrot.slane %v773, 5
      %v823 = vrot.slane %v822, 4
      %v824 = vrot.slane %v774, 5
      %v825 = vsel %vm793, %v823, %v824
      %s826 = scalar_lea.vmem %s1, 128
      %v827 = vld [vmem:[%s826] sm:$0xf]
      %v828 = vld [vmem:[%s826 + $0x4] sm:$0xf]
      %v829 = vld [vmem:[%s826 + $0x8] sm:$0xf]
      %v830 = vld [vmem:[%s826 + $0xc] sm:$0xf]
      %v831 = vld [vmem:[%s826 + $0x10] sm:$0xf]
      %v832 = vld [vmem:[%s826 + $0x14] sm:$0xf]
      %v833 = vld [vmem:[%s826 + $0x18] sm:$0xf]
      %v834 = vld [vmem:[%s826 + $0x1c] sm:$0xf]
      %v835 = vld [vmem:[%s826 + $0x20] sm:$0xf]
      %v836 = vld [vmem:[%s826 + $0x24] sm:$0xf]
      %v837 = vld [vmem:[%s826 + $0x28] sm:$0xf]
      %v838 = vld [vmem:[%s826 + $0x2c] sm:$0xf]
      %v839 = vld [vmem:[%s826 + $0x30] sm:$0xf]
      %v840 = vld [vmem:[%s826 + $0x34] sm:$0xf]
      %v841 = vld [vmem:[%s826 + $0x38] sm:$0xf]
      %v842 = vld [vmem:[%s826 + $0x3c] sm:$0xf]
      %v843 = vunpack.c.l.b16 %v797
      %v844 = vunpack.c.l.b16 %v801
      %v845 = vunpack.c.l.b16 %v805
      %v846 = vunpack.c.l.b16 %v809
      %v847 = vunpack.c.l.b16 %v813
      %v848 = vunpack.c.l.b16 %v817
      %v849 = vunpack.c.l.b16 %v821
      %v850 = vunpack.c.l.b16 %v825
      %v851 = vpack.c.b16 %v844, %v843
      %v852 = vpack.c.b16 %v846, %v845
      %v853 = vpack.c.b16 %v848, %v847
      %v854 = vpack.c.b16 %v850, %v849
      %v875 = vunpack.c.l.b16 %v827
      %v876 = vunpack.c.l.b16 %v828
      %v877 = vunpack.c.l.b16 %v829
      %v878 = vunpack.c.l.b16 %v830
      %v879 = vunpack.c.l.b16 %v831
      %v880 = vunpack.c.l.b16 %v832
      %v881 = vunpack.c.l.b16 %v833
      %v882 = vunpack.c.l.b16 %v834
      %v883 = vunpack.c.l.b16 %v835
      %v884 = vunpack.c.l.b16 %v836
      %v885 = vunpack.c.l.b16 %v837
      %v886 = vunpack.c.l.b16 %v838
      %v887 = vunpack.c.l.b16 %v839
      %v888 = vunpack.c.l.b16 %v840
      %v889 = vunpack.c.l.b16 %v841
      %v890 = vunpack.c.l.b16 %v842
      %v891 = vpack.c.b16 %v876, %v875
      %v892 = vpack.c.b16 %v878, %v877
      %v893 = vpack.c.b16 %v880, %v879
      %v894 = vpack.c.b16 %v882, %v881
      %v895 = vpack.c.b16 %v884, %v883
      %v896 = vpack.c.b16 %v886, %v885
      %v897 = vpack.c.b16 %v888, %v887
      %v898 = vpack.c.b16 %v890, %v889
      %907 = vmatprep.subr.bf16.mxu0 0
      %908 = vmatpush1.bf16.msra.mxu0 %v898
      %909 = vmatprep.subr.bf16.mxu0 0
      %910 = vmatpush1.bf16.msra.mxu0 %v897
      %911 = vmatprep.subr.bf16.mxu0 0
      %912 = vmatpush1.bf16.msra.mxu0 %v896
      %913 = vmatprep.subr.bf16.mxu0 0
      %914 = vmatpush1.bf16.msra.mxu0 %v895
      %915 = vmatprep.subr.bf16.mxu0 0
      %916 = vmatpush1.bf16.msra.mxu0 %v894
      %917 = vmatprep.subr.bf16.mxu0 0
      %918 = vmatpush1.bf16.msra.mxu0 %v893
      %919 = vmatprep.subr.bf16.mxu0 0
      %920 = vmatpush1.bf16.msra.mxu0 %v892
      %921 = vmatprep.subr.bf16.mxu0 0
      %922 = vmatpush1.bf16.msra.mxu0 %v891
      %923 = vmatprep.subr.bf16.mxu0 0
      %924 = vmatpush2.bf16.msra.mxu0 0
      %925 = vmatprep.subr.bf16.mxu0 0
      %926 = vmatpush2.bf16.msra.mxu0 0
      %927 = vmatprep.subr.bf16.mxu0 0
      %928 = vmatpush2.bf16.msra.mxu0 0
      %929 = vmatprep.subr.bf16.mxu0 0
      %930 = vmatpush2.bf16.msra.mxu0 0
      %931 = vmatprep.subr.bf16.mxu0 0
      %932 = vmatpush2.bf16.msra.mxu0 0
      %933 = vmatprep.subr.bf16.mxu0 0
      %934 = vmatpush2.bf16.msra.mxu0 0
      %935 = vmatprep.subr.bf16.mxu0 0
      %936 = vmatpush2.bf16.msra.mxu0 0
      %937 = vmatprep.subr.bf16.mxu0 0
      %938 = vmatpush2.bf16.msra.mxu0 0
      %939 = vmatprep.mubr.bf16.mxu0 0
      %940 = vmatmul.mubr.bf16.gmra.mxu0 %v851
      %v941 = vpop.f32.mrf.mxu0
      %v942 = vadd.f32 0.0, %v941
      %v943 = vpop.f32.mrf.mxu0
      %v944 = vpop.f32.mrf.mxu0
      %v945 = vadd.f32 0.0, %v944
      %v946 = vpop.f32.mrf.mxu0
      %947 = vmatprep.mubr.bf16.mxu0 0
      %948 = vmatmul.mubr.bf16.gmra.mxu0 %v852
      %v949 = vpop.f32.mrf.mxu0
      %v950 = vadd.f32 0.0, %v949
      %v951 = vpop.f32.mrf.mxu0
      %v952 = vpop.f32.mrf.mxu0
      %v953 = vadd.f32 0.0, %v952
      %v954 = vpop.f32.mrf.mxu0
      %955 = vmatprep.mubr.bf16.mxu0 0
      %956 = vmatmul.mubr.bf16.gmra.mxu0 %v853
      %v957 = vpop.f32.mrf.mxu0
      %v958 = vadd.f32 0.0, %v957
      %v959 = vpop.f32.mrf.mxu0
      %v960 = vpop.f32.mrf.mxu0
      %v961 = vadd.f32 0.0, %v960
      %v962 = vpop.f32.mrf.mxu0
      %963 = vmatprep.mubr.bf16.mxu0 0
      %964 = vmatmul.mubr.bf16.gmra.mxu0 %v854
      %v965 = vpop.f32.mrf.mxu0
      %v966 = vadd.f32 0.0, %v965
      %v967 = vpop.f32.mrf.mxu0
      %v968 = vpop.f32.mrf.mxu0
      %v969 = vadd.f32 0.0, %v968
      %v970 = vpop.f32.mrf.mxu0
      %971 = vdwg.mxu0
      %v972 = vld [vmem:[#allocation2] sm:$0xff]
      %v973 = vld [vmem:[#allocation2 + $0x8] sm:$0xff]
      %v974 = vld [vmem:[#allocation2 + $0x10] sm:$0xff]
      %v975 = vld [vmem:[#allocation2 + $0x18] sm:$0xff]
      %v976 = vld [vmem:[#allocation2 + $0x20] sm:$0xff]
      %v977 = vld [vmem:[#allocation2 + $0x28] sm:$0xff]
      %v978 = vld [vmem:[#allocation2 + $0x30] sm:$0xff]
      %v979 = vld [vmem:[#allocation2 + $0x38] sm:$0xff]
      %v980 = vadd.f32 %v972, %v942
      %v981 = vadd.f32 %v973, %v945
      %v982 = vadd.f32 %v974, %v950
      %v983 = vadd.f32 %v975, %v953
      %v984 = vadd.f32 %v976, %v958
      %v985 = vadd.f32 %v977, %v961
      %v986 = vadd.f32 %v978, %v966
      %v987 = vadd.f32 %v979, %v969
      %988 = vst [vmem:[#allocation2] sm:$0xff] %v980
      %989 = vst [vmem:[#allocation2 + $0x8] sm:$0xff] %v981
      %990 = vst [vmem:[#allocation2 + $0x10] sm:$0xff] %v982
      %991 = vst [vmem:[#allocation2 + $0x18] sm:$0xff] %v983
      %992 = vst [vmem:[#allocation2 + $0x20] sm:$0xff] %v984
      %993 = vst [vmem:[#allocation2 + $0x28] sm:$0xff] %v985
      %994 = vst [vmem:[#allocation2 + $0x30] sm:$0xff] %v986
      %995 = vst [vmem:[#allocation2 + $0x38] sm:$0xff] %v987
      %s996 = sadd.s32 %s285, 1
      %s997 = smul.u32 %s996, 2
      %s998 = smul.addr %s997, 4
      %s999 = scalar_lea.vmem %s263, %s998
      %v1000 = vld [vmem:[%s999] sm:$0xf]
      %v1001 = vld [vmem:[%s999 + $0x8] sm:$0xf]
      %v1002 = vld [vmem:[%s999 + $0x10] sm:$0xf]
      %v1003 = vld [vmem:[%s999 + $0x18] sm:$0xf]
      %v1004 = vld [vmem:[%s999 + $0x20] sm:$0xf]
      %v1005 = vld [vmem:[%s999 + $0x28] sm:$0xf]
      %v1006 = vld [vmem:[%s999 + $0x30] sm:$0xf]
      %v1007 = vld [vmem:[%s999 + $0x38] sm:$0xf]
      %s1008 = scalar_lea.vmem %s1, 192
      %v1009 = vld [vmem:[%s1008] sm:$0xf]
      %v1010 = vld [vmem:[%s1008 + $0x4] sm:$0xf]
      %v1011 = vld [vmem:[%s1008 + $0x8] sm:$0xf]
      %v1012 = vld [vmem:[%s1008 + $0xc] sm:$0xf]
      %v1013 = vld [vmem:[%s1008 + $0x10] sm:$0xf]
      %v1014 = vld [vmem:[%s1008 + $0x14] sm:$0xf]
      %v1015 = vld [vmem:[%s1008 + $0x18] sm:$0xf]
      %v1016 = vld [vmem:[%s1008 + $0x1c] sm:$0xf]
      %v1017 = vld [vmem:[%s1008 + $0x20] sm:$0xf]
      %v1018 = vld [vmem:[%s1008 + $0x24] sm:$0xf]
      %v1019 = vld [vmem:[%s1008 + $0x28] sm:$0xf]
      %v1020 = vld [vmem:[%s1008 + $0x2c] sm:$0xf]
      %v1021 = vld [vmem:[%s1008 + $0x30] sm:$0xf]
      %v1022 = vld [vmem:[%s1008 + $0x34] sm:$0xf]
      %v1023 = vld [vmem:[%s1008 + $0x38] sm:$0xf]
      %v1024 = vld [vmem:[%s1008 + $0x3c] sm:$0xf]
      %v1033 = vunpack.c.l.b16 %v1000
      %v1034 = vunpack.c.l.b16 %v1001
      %v1035 = vunpack.c.l.b16 %v1002
      %v1036 = vunpack.c.l.b16 %v1003
      %v1037 = vunpack.c.l.b16 %v1004
      %v1038 = vunpack.c.l.b16 %v1005
      %v1039 = vunpack.c.l.b16 %v1006
      %v1040 = vunpack.c.l.b16 %v1007
      %v1041 = vpack.c.b16 %v1034, %v1033
      %v1042 = vpack.c.b16 %v1036, %v1035
      %v1043 = vpack.c.b16 %v1038, %v1037
      %v1044 = vpack.c.b16 %v1040, %v1039
      %v1065 = vunpack.c.l.b16 %v1009
      %v1066 = vunpack.c.l.b16 %v1010
      %v1067 = vunpack.c.l.b16 %v1011
      %v1068 = vunpack.c.l.b16 %v1012
      %v1069 = vunpack.c.l.b16 %v1013
      %v1070 = vunpack.c.l.b16 %v1014
      %v1071 = vunpack.c.l.b16 %v1015
      %v1072 = vunpack.c.l.b16 %v1016
      %v1073 = vunpack.c.l.b16 %v1017
      %v1074 = vunpack.c.l.b16 %v1018
      %v1075 = vunpack.c.l.b16 %v1019
      %v1076 = vunpack.c.l.b16 %v1020
      %v1077 = vunpack.c.l.b16 %v1021
      %v1078 = vunpack.c.l.b16 %v1022
      %v1079 = vunpack.c.l.b16 %v1023
      %v1080 = vunpack.c.l.b16 %v1024
      %v1081 = vpack.c.b16 %v1066, %v1065
      %v1082 = vpack.c.b16 %v1068, %v1067
      %v1083 = vpack.c.b16 %v1070, %v1069
      %v1084 = vpack.c.b16 %v1072, %v1071
      %v1085 = vpack.c.b16 %v1074, %v1073
      %v1086 = vpack.c.b16 %v1076, %v1075
      %v1087 = vpack.c.b16 %v1078, %v1077
      %v1088 = vpack.c.b16 %v1080, %v1079
      %1097 = vmatprep.subr.bf16.mxu0 0
      %1098 = vmatpush1.bf16.msra.mxu0 %v1088
      %1099 = vmatprep.subr.bf16.mxu0 0
      %1100 = vmatpush1.bf16.msra.mxu0 %v1087
      %1101 = vmatprep.subr.bf16.mxu0 0
      %1102 = vmatpush1.bf16.msra.mxu0 %v1086
      %1103 = vmatprep.subr.bf16.mxu0 0
      %1104 = vmatpush1.bf16.msra.mxu0 %v1085
      %1105 = vmatprep.subr.bf16.mxu0 0
      %1106 = vmatpush1.bf16.msra.mxu0 %v1084
      %1107 = vmatprep.subr.bf16.mxu0 0
      %1108 = vmatpush1.bf16.msra.mxu0 %v1083
      %1109 = vmatprep.subr.bf16.mxu0 0
      %1110 = vmatpush1.bf16.msra.mxu0 %v1082
      %1111 = vmatprep.subr.bf16.mxu0 0
      %1112 = vmatpush1.bf16.msra.mxu0 %v1081
      %1113 = vmatprep.subr.bf16.mxu0 0
      %1114 = vmatpush2.bf16.msra.mxu0 0
      %1115 = vmatprep.subr.bf16.mxu0 0
      %1116 = vmatpush2.bf16.msra.mxu0 0
      %1117 = vmatprep.subr.bf16.mxu0 0
      %1118 = vmatpush2.bf16.msra.mxu0 0
      %1119 = vmatprep.subr.bf16.mxu0 0
      %1120 = vmatpush2.bf16.msra.mxu0 0
      %1121 = vmatprep.subr.bf16.mxu0 0
      %1122 = vmatpush2.bf16.msra.mxu0 0
      %1123 = vmatprep.subr.bf16.mxu0 0
      %1124 = vmatpush2.bf16.msra.mxu0 0
      %1125 = vmatprep.subr.bf16.mxu0 0
      %1126 = vmatpush2.bf16.msra.mxu0 0
      %1127 = vmatprep.subr.bf16.mxu0 0
      %1128 = vmatpush2.bf16.msra.mxu0 0
      %1129 = vmatprep.mubr.bf16.mxu0 0
      %1130 = vmatmul.mubr.bf16.gmra.mxu0 %v1041
      %v1131 = vpop.f32.mrf.mxu0
      %v1132 = vadd.f32 0.0, %v1131
      %v1133 = vpop.f32.mrf.mxu0
      %v1134 = vpop.f32.mrf.mxu0
      %v1135 = vadd.f32 0.0, %v1134
      %v1136 = vpop.f32.mrf.mxu0
      %1137 = vmatprep.mubr.bf16.mxu0 0
      %1138 = vmatmul.mubr.bf16.gmra.mxu0 %v1042
      %v1139 = vpop.f32.mrf.mxu0
      %v1140 = vadd.f32 0.0, %v1139
      %v1141 = vpop.f32.mrf.mxu0
      %v1142 = vpop.f32.mrf.mxu0
      %v1143 = vadd.f32 0.0, %v1142
      %v1144 = vpop.f32.mrf.mxu0
      %1145 = vmatprep.mubr.bf16.mxu0 0
      %1146 = vmatmul.mubr.bf16.gmra.mxu0 %v1043
      %v1147 = vpop.f32.mrf.mxu0
      %v1148 = vadd.f32 0.0, %v1147
      %v1149 = vpop.f32.mrf.mxu0
      %v1150 = vpop.f32.mrf.mxu0
      %v1151 = vadd.f32 0.0, %v1150
      %v1152 = vpop.f32.mrf.mxu0
      %1153 = vmatprep.mubr.bf16.mxu0 0
      %1154 = vmatmul.mubr.bf16.gmra.mxu0 %v1044
      %v1155 = vpop.f32.mrf.mxu0
      %v1156 = vadd.f32 0.0, %v1155
      %v1157 = vpop.f32.mrf.mxu0
      %v1158 = vpop.f32.mrf.mxu0
      %v1159 = vadd.f32 0.0, %v1158
      %v1160 = vpop.f32.mrf.mxu0
      %1161 = vdwg.mxu0
      %v1162 = vld [vmem:[#allocation2] sm:$0xff]
      %v1163 = vld [vmem:[#allocation2 + $0x8] sm:$0xff]
      %v1164 = vld [vmem:[#allocation2 + $0x10] sm:$0xff]
      %v1165 = vld [vmem:[#allocation2 + $0x18] sm:$0xff]
      %v1166 = vld [vmem:[#allocation2 + $0x20] sm:$0xff]
      %v1167 = vld [vmem:[#allocation2 + $0x28] sm:$0xff]
      %v1168 = vld [vmem:[#allocation2 + $0x30] sm:$0xff]
      %v1169 = vld [vmem:[#allocation2 + $0x38] sm:$0xff]
      %v1170 = vadd.f32 %v1162, %v1132
      %v1171 = vadd.f32 %v1163, %v1135
      %v1172 = vadd.f32 %v1164, %v1140
      %v1173 = vadd.f32 %v1165, %v1143
      %v1174 = vadd.f32 %v1166, %v1148
      %v1175 = vadd.f32 %v1167, %v1151
      %v1176 = vadd.f32 %v1168, %v1156
      %v1177 = vadd.f32 %v1169, %v1159
      %1178 = vst [vmem:[#allocation2] sm:$0xff] %v1170
      %1179 = vst [vmem:[#allocation2 + $0x8] sm:$0xff] %v1171
      %1180 = vst [vmem:[#allocation2 + $0x10] sm:$0xff] %v1172
      %1181 = vst [vmem:[#allocation2 + $0x18] sm:$0xff] %v1173
      %1182 = vst [vmem:[#allocation2 + $0x20] sm:$0xff] %v1174
      %1183 = vst [vmem:[#allocation2 + $0x28] sm:$0xff] %v1175
      %1184 = vst [vmem:[#allocation2 + $0x30] sm:$0xff] %v1176
      %1185 = vst [vmem:[#allocation2 + $0x38] sm:$0xff] %v1177
      %v1186 = vld [vmem:[%s999] sm:$0xf]
      %v1187 = vld [vmem:[%s999 + $0x4] sm:$0x1]
      %v1188 = vld [vmem:[%s999 + $0x8] sm:$0xf]
      %v1189 = vld [vmem:[%s999 + $0xc] sm:$0x1]
      %v1190 = vld [vmem:[%s999 + $0x10] sm:$0xf]
      %v1191 = vld [vmem:[%s999 + $0x14] sm:$0x1]
      %v1192 = vld [vmem:[%s999 + $0x18] sm:$0xf]
      %v1193 = vld [vmem:[%s999 + $0x1c] sm:$0x1]
      %v1194 = vld [vmem:[%s999 + $0x20] sm:$0xf]
      %v1195 = vld [vmem:[%s999 + $0x24] sm:$0x1]
      %v1196 = vld [vmem:[%s999 + $0x28] sm:$0xf]
      %v1197 = vld [vmem:[%s999 + $0x2c] sm:$0x1]
      %v1198 = vld [vmem:[%s999 + $0x30] sm:$0xf]
      %v1199 = vld [vmem:[%s999 + $0x34] sm:$0x1]
      %v1200 = vld [vmem:[%s999 + $0x38] sm:$0xf]
      %v1201 = vld [vmem:[%s999 + $0x3c] sm:$0x1]
      %v1203 = vshrl.u32 %v1186, 16
      %v1205 = vrot.slane %v1203, 4
      %v1206 = vshll.u32 %v1186, 16
      %v1208 = vrot.slane %v1206, 5
      %v1209 = vor.u32 %v1205, %v1208
      %v1210 = vrot.slane %v1209, 4
      %v1212 = vshll.u32 %v1187, 16
      %v1214 = vrot.slane %v1212, 5
      %v1215 = vsel %vm476, %v1210, %v1214
      %v1217 = vshrl.u32 %v1188, 16
      %v1219 = vrot.slane %v1217, 4
      %v1220 = vshll.u32 %v1188, 16
      %v1222 = vrot.slane %v1220, 5
      %v1223 = vor.u32 %v1219, %v1222
      %v1224 = vrot.slane %v1223, 4
      %v1226 = vshll.u32 %v1189, 16
      %v1228 = vrot.slane %v1226, 5
      %v1229 = vsel %vm476, %v1224, %v1228
      %v1231 = vshrl.u32 %v1190, 16
      %v1233 = vrot.slane %v1231, 4
      %v1234 = vshll.u32 %v1190, 16
      %v1236 = vrot.slane %v1234, 5
      %v1237 = vor.u32 %v1233, %v1236
      %v1238 = vrot.slane %v1237, 4
      %v1240 = vshll.u32 %v1191, 16
      %v1242 = vrot.slane %v1240, 5
      %v1243 = vsel %vm476, %v1238, %v1242
      %v1245 = vshrl.u32 %v1192, 16
      %v1247 = vrot.slane %v1245, 4
      %v1248 = vshll.u32 %v1192, 16
      %v1250 = vrot.slane %v1248, 5
      %v1251 = vor.u32 %v1247, %v1250
      %v1252 = vrot.slane %v1251, 4
      %v1254 = vshll.u32 %v1193, 16
      %v1256 = vrot.slane %v1254, 5
      %v1257 = vsel %vm476, %v1252, %v1256
      %v1259 = vshrl.u32 %v1194, 16
      %v1261 = vrot.slane %v1259, 4
      %v1262 = vshll.u32 %v1194, 16
      %v1264 = vrot.slane %v1262, 5
      %v1265 = vor.u32 %v1261, %v1264
      %v1266 = vrot.slane %v1265, 4
      %v1268 = vshll.u32 %v1195, 16
      %v1270 = vrot.slane %v1268, 5
      %v1271 = vsel %vm476, %v1266, %v1270
      %v1273 = vshrl.u32 %v1196, 16
      %v1275 = vrot.slane %v1273, 4
      %v1276 = vshll.u32 %v1196, 16
      %v1278 = vrot.slane %v1276, 5
      %v1279 = vor.u32 %v1275, %v1278
      %v1280 = vrot.slane %v1279, 4
      %v1282 = vshll.u32 %v1197, 16
      %v1284 = vrot.slane %v1282, 5
      %v1285 = vsel %vm476, %v1280, %v1284
      %v1287 = vshrl.u32 %v1198, 16
      %v1289 = vrot.slane %v1287, 4
      %v1290 = vshll.u32 %v1198, 16
      %v1292 = vrot.slane %v1290, 5
      %v1293 = vor.u32 %v1289, %v1292
      %v1294 = vrot.slane %v1293, 4
      %v1296 = vshll.u32 %v1199, 16
      %v1298 = vrot.slane %v1296, 5
      %v1299 = vsel %vm476, %v1294, %v1298
      %v1301 = vshrl.u32 %v1200, 16
      %v1303 = vrot.slane %v1301, 4
      %v1304 = vshll.u32 %v1200, 16
      %v1306 = vrot.slane %v1304, 5
      %v1307 = vor.u32 %v1303, %v1306
      %v1308 = vrot.slane %v1307, 4
      %v1310 = vshll.u32 %v1201, 16
      %v1312 = vrot.slane %v1310, 5
      %v1313 = vsel %vm476, %v1308, %v1312
      %s1314 = scalar_lea.vmem %s1, 256
      %v1315 = vld [vmem:[%s1314] sm:$0xf]
      %v1316 = vld [vmem:[%s1314 + $0x4] sm:$0xf]
      %v1317 = vld [vmem:[%s1314 + $0x8] sm:$0xf]
      %v1318 = vld [vmem:[%s1314 + $0xc] sm:$0xf]
      %v1319 = vld [vmem:[%s1314 + $0x10] sm:$0xf]
      %v1320 = vld [vmem:[%s1314 + $0x14] sm:$0xf]
      %v1321 = vld [vmem:[%s1314 + $0x18] sm:$0xf]
      %v1322 = vld [vmem:[%s1314 + $0x1c] sm:$0xf]
      %v1323 = vld [vmem:[%s1314 + $0x20] sm:$0xf]
      %v1324 = vld [vmem:[%s1314 + $0x24] sm:$0xf]
      %v1325 = vld [vmem:[%s1314 + $0x28] sm:$0xf]
      %v1326 = vld [vmem:[%s1314 + $0x2c] sm:$0xf]
      %v1327 = vld [vmem:[%s1314 + $0x30] sm:$0xf]
      %v1328 = vld [vmem:[%s1314 + $0x34] sm:$0xf]
      %v1329 = vld [vmem:[%s1314 + $0x38] sm:$0xf]
      %v1330 = vld [vmem:[%s1314 + $0x3c] sm:$0xf]
      %v1331 = vunpack.c.l.b16 %v1215
      %v1332 = vunpack.c.l.b16 %v1229
      %v1333 = vunpack.c.l.b16 %v1243
      %v1334 = vunpack.c.l.b16 %v1257
      %v1335 = vunpack.c.l.b16 %v1271
      %v1336 = vunpack.c.l.b16 %v1285
      %v1337 = vunpack.c.l.b16 %v1299
      %v1338 = vunpack.c.l.b16 %v1313
      %v1339 = vpack.c.b16 %v1332, %v1331
      %v1340 = vpack.c.b16 %v1334, %v1333
      %v1341 = vpack.c.b16 %v1336, %v1335
      %v1342 = vpack.c.b16 %v1338, %v1337
      %v1363 = vunpack.c.l.b16 %v1315
      %v1364 = vunpack.c.l.b16 %v1316
      %v1365 = vunpack.c.l.b16 %v1317
      %v1366 = vunpack.c.l.b16 %v1318
      %v1367 = vunpack.c.l.b16 %v1319
      %v1368 = vunpack.c.l.b16 %v1320
      %v1369 = vunpack.c.l.b16 %v1321
      %v1370 = vunpack.c.l.b16 %v1322
      %v1371 = vunpack.c.l.b16 %v1323
      %v1372 = vunpack.c.l.b16 %v1324
      %v1373 = vunpack.c.l.b16 %v1325
      %v1374 = vunpack.c.l.b16 %v1326
      %v1375 = vunpack.c.l.b16 %v1327
      %v1376 = vunpack.c.l.b16 %v1328
      %v1377 = vunpack.c.l.b16 %v1329
      %v1378 = vunpack.c.l.b16 %v1330
      %v1379 = vpack.c.b16 %v1364, %v1363
      %v1380 = vpack.c.b16 %v1366, %v1365
      %v1381 = vpack.c.b16 %v1368, %v1367
      %v1382 = vpack.c.b16 %v1370, %v1369
      %v1383 = vpack.c.b16 %v1372, %v1371
      %v1384 = vpack.c.b16 %v1374, %v1373
      %v1385 = vpack.c.b16 %v1376, %v1375
      %v1386 = vpack.c.b16 %v1378, %v1377
      %1395 = vmatprep.subr.bf16.mxu0 0
      %1396 = vmatpush1.bf16.msra.mxu0 %v1386
      %1397 = vmatprep.subr.bf16.mxu0 0
      %1398 = vmatpush1.bf16.msra.mxu0 %v1385
      %1399 = vmatprep.subr.bf16.mxu0 0
      %1400 = vmatpush1.bf16.msra.mxu0 %v1384
      %1401 = vmatprep.subr.bf16.mxu0 0
      %1402 = vmatpush1.bf16.msra.mxu0 %v1383
      %1403 = vmatprep.subr.bf16.mxu0 0
      %1404 = vmatpush1.bf16.msra.mxu0 %v1382
      %1405 = vmatprep.subr.bf16.mxu0 0
      %1406 = vmatpush1.bf16.msra.mxu0 %v1381
      %1407 = vmatprep.subr.bf16.mxu0 0
      %1408 = vmatpush1.bf16.msra.mxu0 %v1380
      %1409 = vmatprep.subr.bf16.mxu0 0
      %1410 = vmatpush1.bf16.msra.mxu0 %v1379
      %1411 = vmatprep.subr.bf16.mxu0 0
      %1412 = vmatpush2.bf16.msra.mxu0 0
      %1413 = vmatprep.subr.bf16.mxu0 0
      %1414 = vmatpush2.bf16.msra.mxu0 0
      %1415 = vmatprep.subr.bf16.mxu0 0
      %1416 = vmatpush2.bf16.msra.mxu0 0
      %1417 = vmatprep.subr.bf16.mxu0 0
      %1418 = vmatpush2.bf16.msra.mxu0 0
      %1419 = vmatprep.subr.bf16.mxu0 0
      %1420 = vmatpush2.bf16.msra.mxu0 0
      %1421 = vmatprep.subr.bf16.mxu0 0
      %1422 = vmatpush2.bf16.msra.mxu0 0
      %1423 = vmatprep.subr.bf16.mxu0 0
      %1424 = vmatpush2.bf16.msra.mxu0 0
      %1425 = vmatprep.subr.bf16.mxu0 0
      %1426 = vmatpush2.bf16.msra.mxu0 0
      %1427 = vmatprep.mubr.bf16.mxu0 0
      %1428 = vmatmul.mubr.bf16.gmra.mxu0 %v1339
      %v1429 = vpop.f32.mrf.mxu0
      %v1430 = vadd.f32 0.0, %v1429
      %v1431 = vpop.f32.mrf.mxu0
      %v1432 = vpop.f32.mrf.mxu0
      %v1433 = vadd.f32 0.0, %v1432
      %v1434 = vpop.f32.mrf.mxu0
      %1435 = vmatprep.mubr.bf16.mxu0 0
      %1436 = vmatmul.mubr.bf16.gmra.mxu0 %v1340
      %v1437 = vpop.f32.mrf.mxu0
      %v1438 = vadd.f32 0.0, %v1437
      %v1439 = vpop.f32.mrf.mxu0
      %v1440 = vpop.f32.mrf.mxu0
      %v1441 = vadd.f32 0.0, %v1440
      %v1442 = vpop.f32.mrf.mxu0
      %1443 = vmatprep.mubr.bf16.mxu0 0
      %1444 = vmatmul.mubr.bf16.gmra.mxu0 %v1341
      %v1445 = vpop.f32.mrf.mxu0
      %v1446 = vadd.f32 0.0, %v1445
      %v1447 = vpop.f32.mrf.mxu0
      %v1448 = vpop.f32.mrf.mxu0
      %v1449 = vadd.f32 0.0, %v1448
      %v1450 = vpop.f32.mrf.mxu0
      %1451 = vmatprep.mubr.bf16.mxu0 0
      %1452 = vmatmul.mubr.bf16.gmra.mxu0 %v1342
      %v1453 = vpop.f32.mrf.mxu0
      %v1454 = vadd.f32 0.0, %v1453
      %v1455 = vpop.f32.mrf.mxu0
      %v1456 = vpop.f32.mrf.mxu0
      %v1457 = vadd.f32 0.0, %v1456
      %v1458 = vpop.f32.mrf.mxu0
      %1459 = vdwg.mxu0
      %v1460 = vld [vmem:[#allocation2] sm:$0xff]
      %v1461 = vld [vmem:[#allocation2 + $0x8] sm:$0xff]
      %v1462 = vld [vmem:[#allocation2 + $0x10] sm:$0xff]
      %v1463 = vld [vmem:[#allocation2 + $0x18] sm:$0xff]
      %v1464 = vld [vmem:[#allocation2 + $0x20] sm:$0xff]
      %v1465 = vld [vmem:[#allocation2 + $0x28] sm:$0xff]
      %v1466 = vld [vmem:[#allocation2 + $0x30] sm:$0xff]
      %v1467 = vld [vmem:[#allocation2 + $0x38] sm:$0xff]
      %v1468 = vadd.f32 %v1460, %v1430
      %v1469 = vadd.f32 %v1461, %v1433
      %v1470 = vadd.f32 %v1462, %v1438
      %v1471 = vadd.f32 %v1463, %v1441
      %v1472 = vadd.f32 %v1464, %v1446
      %v1473 = vadd.f32 %v1465, %v1449
      %v1474 = vadd.f32 %v1466, %v1454
      %v1475 = vadd.f32 %v1467, %v1457
      %1476 = vst [vmem:[#allocation2] sm:$0xff] %v1468
      %1477 = vst [vmem:[#allocation2 + $0x8] sm:$0xff] %v1469
      %1478 = vst [vmem:[#allocation2 + $0x10] sm:$0xff] %v1470
      %1479 = vst [vmem:[#allocation2 + $0x18] sm:$0xff] %v1471
      %1480 = vst [vmem:[#allocation2 + $0x20] sm:$0xff] %v1472
      %1481 = vst [vmem:[#allocation2 + $0x28] sm:$0xff] %v1473
      %1482 = vst [vmem:[#allocation2 + $0x30] sm:$0xff] %v1474
      %1483 = vst [vmem:[#allocation2 + $0x38] sm:$0xff] %v1475
      %v1484 = vld [vmem:[%s999] sm:$0xe]
      %v1485 = vld [vmem:[%s999 + $0x4] sm:$0x1]
      %v1486 = vld [vmem:[%s999 + $0x8] sm:$0xe]
      %v1487 = vld [vmem:[%s999 + $0xc] sm:$0x1]
      %v1488 = vld [vmem:[%s999 + $0x10] sm:$0xe]
      %v1489 = vld [vmem:[%s999 + $0x14] sm:$0x1]
      %v1490 = vld [vmem:[%s999 + $0x18] sm:$0xe]
      %v1491 = vld [vmem:[%s999 + $0x1c] sm:$0x1]
      %v1492 = vld [vmem:[%s999 + $0x20] sm:$0xe]
      %v1493 = vld [vmem:[%s999 + $0x24] sm:$0x1]
      %v1494 = vld [vmem:[%s999 + $0x28] sm:$0xe]
      %v1495 = vld [vmem:[%s999 + $0x2c] sm:$0x1]
      %v1496 = vld [vmem:[%s999 + $0x30] sm:$0xe]
      %v1497 = vld [vmem:[%s999 + $0x34] sm:$0x1]
      %v1498 = vld [vmem:[%s999 + $0x38] sm:$0xe]
      %v1499 = vld [vmem:[%s999 + $0x3c] sm:$0x1]
      %v1516 = vrot.slane %v1484, 5
      %v1517 = vrot.slane %v1516, 4
      %v1518 = vrot.slane %v1485, 5
      %v1519 = vsel %vm793, %v1517, %v1518
      %v1520 = vrot.slane %v1486, 5
      %v1521 = vrot.slane %v1520, 4
      %v1522 = vrot.slane %v1487, 5
      %v1523 = vsel %vm793, %v1521, %v1522
      %v1524 = vrot.slane %v1488, 5
      %v1525 = vrot.slane %v1524, 4
      %v1526 = vrot.slane %v1489, 5
      %v1527 = vsel %vm793, %v1525, %v1526
      %v1528 = vrot.slane %v1490, 5
      %v1529 = vrot.slane %v1528, 4
      %v1530 = vrot.slane %v1491, 5
      %v1531 = vsel %vm793, %v1529, %v1530
      %v1532 = vrot.slane %v1492, 5
      %v1533 = vrot.slane %v1532, 4
      %v1534 = vrot.slane %v1493, 5
      %v1535 = vsel %vm793, %v1533, %v1534
      %v1536 = vrot.slane %v1494, 5
      %v1537 = vrot.slane %v1536, 4
      %v1538 = vrot.slane %v1495, 5
      %v1539 = vsel %vm793, %v1537, %v1538
      %v1540 = vrot.slane %v1496, 5
      %v1541 = vrot.slane %v1540, 4
      %v1542 = vrot.slane %v1497, 5
      %v1543 = vsel %vm793, %v1541, %v1542
      %v1544 = vrot.slane %v1498, 5
      %v1545 = vrot.slane %v1544, 4
      %v1546 = vrot.slane %v1499, 5
      %v1547 = vsel %vm793, %v1545, %v1546
      %s1548 = scalar_lea.vmem %s1, 320
      %v1549 = vld [vmem:[%s1548] sm:$0xf]
      %v1550 = vld [vmem:[%s1548 + $0x4] sm:$0xf]
      %v1551 = vld [vmem:[%s1548 + $0x8] sm:$0xf]
      %v1552 = vld [vmem:[%s1548 + $0xc] sm:$0xf]
      %v1553 = vld [vmem:[%s1548 + $0x10] sm:$0xf]
      %v1554 = vld [vmem:[%s1548 + $0x14] sm:$0xf]
      %v1555 = vld [vmem:[%s1548 + $0x18] sm:$0xf]
      %v1556 = vld [vmem:[%s1548 + $0x1c] sm:$0xf]
      %v1557 = vld [vmem:[%s1548 + $0x20] sm:$0xf]
      %v1558 = vld [vmem:[%s1548 + $0x24] sm:$0xf]
      %v1559 = vld [vmem:[%s1548 + $0x28] sm:$0xf]
      %v1560 = vld [vmem:[%s1548 + $0x2c] sm:$0xf]
      %v1561 = vld [vmem:[%s1548 + $0x30] sm:$0xf]
      %v1562 = vld [vmem:[%s1548 + $0x34] sm:$0xf]
      %v1563 = vld [vmem:[%s1548 + $0x38] sm:$0xf]
      %v1564 = vld [vmem:[%s1548 + $0x3c] sm:$0xf]
      %v1565 = vunpack.c.l.b16 %v1519
      %v1566 = vunpack.c.l.b16 %v1523
      %v1567 = vunpack.c.l.b16 %v1527
      %v1568 = vunpack.c.l.b16 %v1531
      %v1569 = vunpack.c.l.b16 %v1535
      %v1570 = vunpack.c.l.b16 %v1539
      %v1571 = vunpack.c.l.b16 %v1543
      %v1572 = vunpack.c.l.b16 %v1547
      %v1573 = vpack.c.b16 %v1566, %v1565
      %v1574 = vpack.c.b16 %v1568, %v1567
      %v1575 = vpack.c.b16 %v1570, %v1569
      %v1576 = vpack.c.b16 %v1572, %v1571
      %v1597 = vunpack.c.l.b16 %v1549
      %v1598 = vunpack.c.l.b16 %v1550
      %v1599 = vunpack.c.l.b16 %v1551
      %v1600 = vunpack.c.l.b16 %v1552
      %v1601 = vunpack.c.l.b16 %v1553
      %v1602 = vunpack.c.l.b16 %v1554
      %v1603 = vunpack.c.l.b16 %v1555
      %v1604 = vunpack.c.l.b16 %v1556
      %v1605 = vunpack.c.l.b16 %v1557
      %v1606 = vunpack.c.l.b16 %v1558
      %v1607 = vunpack.c.l.b16 %v1559
      %v1608 = vunpack.c.l.b16 %v1560
      %v1609 = vunpack.c.l.b16 %v1561
      %v1610 = vunpack.c.l.b16 %v1562
      %v1611 = vunpack.c.l.b16 %v1563
      %v1612 = vunpack.c.l.b16 %v1564
      %v1613 = vpack.c.b16 %v1598, %v1597
      %v1614 = vpack.c.b16 %v1600, %v1599
      %v1615 = vpack.c.b16 %v1602, %v1601
      %v1616 = vpack.c.b16 %v1604, %v1603
      %v1617 = vpack.c.b16 %v1606, %v1605
      %v1618 = vpack.c.b16 %v1608, %v1607
      %v1619 = vpack.c.b16 %v1610, %v1609
      %v1620 = vpack.c.b16 %v1612, %v1611
      %1629 = vmatprep.subr.bf16.mxu0 0
      %1630 = vmatpush1.bf16.msra.mxu0 %v1620
      %1631 = vmatprep.subr.bf16.mxu0 0
      %1632 = vmatpush1.bf16.msra.mxu0 %v1619
      %1633 = vmatprep.subr.bf16.mxu0 0
      %1634 = vmatpush1.bf16.msra.mxu0 %v1618
      %1635 = vmatprep.subr.bf16.mxu0 0
      %1636 = vmatpush1.bf16.msra.mxu0 %v1617
      %1637 = vmatprep.subr.bf16.mxu0 0
      %1638 = vmatpush1.bf16.msra.mxu0 %v1616
      %1639 = vmatprep.subr.bf16.mxu0 0
      %1640 = vmatpush1.bf16.msra.mxu0 %v1615
      %1641 = vmatprep.subr.bf16.mxu0 0
      %1642 = vmatpush1.bf16.msra.mxu0 %v1614
      %1643 = vmatprep.subr.bf16.mxu0 0
      %1644 = vmatpush1.bf16.msra.mxu0 %v1613
      %1645 = vmatprep.subr.bf16.mxu0 0
      %1646 = vmatpush2.bf16.msra.mxu0 0
      %1647 = vmatprep.subr.bf16.mxu0 0
      %1648 = vmatpush2.bf16.msra.mxu0 0
      %1649 = vmatprep.subr.bf16.mxu0 0
      %1650 = vmatpush2.bf16.msra.mxu0 0
      %1651 = vmatprep.subr.bf16.mxu0 0
      %1652 = vmatpush2.bf16.msra.mxu0 0
      %1653 = vmatprep.subr.bf16.mxu0 0
      %1654 = vmatpush2.bf16.msra.mxu0 0
      %1655 = vmatprep.subr.bf16.mxu0 0
      %1656 = vmatpush2.bf16.msra.mxu0 0
      %1657 = vmatprep.subr.bf16.mxu0 0
      %1658 = vmatpush2.bf16.msra.mxu0 0
      %1659 = vmatprep.subr.bf16.mxu0 0
      %1660 = vmatpush2.bf16.msra.mxu0 0
      %1661 = vmatprep.mubr.bf16.mxu0 0
      %1662 = vmatmul.mubr.bf16.gmra.mxu0 %v1573
      %v1663 = vpop.f32.mrf.mxu0
      %v1664 = vadd.f32 0.0, %v1663
      %v1665 = vpop.f32.mrf.mxu0
      %v1666 = vpop.f32.mrf.mxu0
      %v1667 = vadd.f32 0.0, %v1666
      %v1668 = vpop.f32.mrf.mxu0
      %1669 = vmatprep.mubr.bf16.mxu0 0
      %1670 = vmatmul.mubr.bf16.gmra.mxu0 %v1574
      %v1671 = vpop.f32.mrf.mxu0
      %v1672 = vadd.f32 0.0, %v1671
      %v1673 = vpop.f32.mrf.mxu0
      %v1674 = vpop.f32.mrf.mxu0
      %v1675 = vadd.f32 0.0, %v1674
      %v1676 = vpop.f32.mrf.mxu0
      %1677 = vmatprep.mubr.bf16.mxu0 0
      %1678 = vmatmul.mubr.bf16.gmra.mxu0 %v1575
      %v1679 = vpop.f32.mrf.mxu0
      %v1680 = vadd.f32 0.0, %v1679
      %v1681 = vpop.f32.mrf.mxu0
      %v1682 = vpop.f32.mrf.mxu0
      %v1683 = vadd.f32 0.0, %v1682
      %v1684 = vpop.f32.mrf.mxu0
      %1685 = vmatprep.mubr.bf16.mxu0 0
      %1686 = vmatmul.mubr.bf16.gmra.mxu0 %v1576
      %v1687 = vpop.f32.mrf.mxu0
      %v1688 = vadd.f32 0.0, %v1687
      %v1689 = vpop.f32.mrf.mxu0
      %v1690 = vpop.f32.mrf.mxu0
      %v1691 = vadd.f32 0.0, %v1690
      %v1692 = vpop.f32.mrf.mxu0
      %1693 = vdwg.mxu0
      %v1694 = vld [vmem:[#allocation2] sm:$0xff]
      %v1695 = vld [vmem:[#allocation2 + $0x8] sm:$0xff]
      %v1696 = vld [vmem:[#allocation2 + $0x10] sm:$0xff]
      %v1697 = vld [vmem:[#allocation2 + $0x18] sm:$0xff]
      %v1698 = vld [vmem:[#allocation2 + $0x20] sm:$0xff]
      %v1699 = vld [vmem:[#allocation2 + $0x28] sm:$0xff]
      %v1700 = vld [vmem:[#allocation2 + $0x30] sm:$0xff]
      %v1701 = vld [vmem:[#allocation2 + $0x38] sm:$0xff]
      %v1702 = vadd.f32 %v1694, %v1664
      %v1703 = vadd.f32 %v1695, %v1667
      %v1704 = vadd.f32 %v1696, %v1672
      %v1705 = vadd.f32 %v1697, %v1675
      %v1706 = vadd.f32 %v1698, %v1680
      %v1707 = vadd.f32 %v1699, %v1683
      %v1708 = vadd.f32 %v1700, %v1688
      %v1709 = vadd.f32 %v1701, %v1691
      %1710 = vst [vmem:[#allocation2] sm:$0xff] %v1702
      %1711 = vst [vmem:[#allocation2 + $0x8] sm:$0xff] %v1703
      %1712 = vst [vmem:[#allocation2 + $0x10] sm:$0xff] %v1704
      %1713 = vst [vmem:[#allocation2 + $0x18] sm:$0xff] %v1705
      %1714 = vst [vmem:[#allocation2 + $0x20] sm:$0xff] %v1706
      %1715 = vst [vmem:[#allocation2 + $0x28] sm:$0xff] %v1707
      %1716 = vst [vmem:[#allocation2 + $0x30] sm:$0xff] %v1708
      %1717 = vst [vmem:[#allocation2 + $0x38] sm:$0xff] %v1709
      %s1718 = sadd.s32 %s285, 2
      %s1719 = smul.u32 %s1718, 2
      %s1720 = smul.addr %s1719, 4
      %s1721 = scalar_lea.vmem %s263, %s1720
      %v1722 = vld [vmem:[%s1721] sm:$0xf]
      %v1723 = vld [vmem:[%s1721 + $0x8] sm:$0xf]
      %v1724 = vld [vmem:[%s1721 + $0x10] sm:$0xf]
      %v1725 = vld [vmem:[%s1721 + $0x18] sm:$0xf]
      %v1726 = vld [vmem:[%s1721 + $0x20] sm:$0xf]
      %v1727 = vld [vmem:[%s1721 + $0x28] sm:$0xf]
      %v1728 = vld [vmem:[%s1721 + $0x30] sm:$0xf]
      %v1729 = vld [vmem:[%s1721 + $0x38] sm:$0xf]
      %s1730 = scalar_lea.vmem %s1, 384
      %v1731 = vld [vmem:[%s1730] sm:$0xf]
      %v1732 = vld [vmem:[%s1730 + $0x4] sm:$0xf]
      %v1733 = vld [vmem:[%s1730 + $0x8] sm:$0xf]
      %v1734 = vld [vmem:[%s1730 + $0xc] sm:$0xf]
      %v1735 = vld [vmem:[%s1730 + $0x10] sm:$0xf]
      %v1736 = vld [vmem:[%s1730 + $0x14] sm:$0xf]
      %v1737 = vld [vmem:[%s1730 + $0x18] sm:$0xf]
      %v1738 = vld [vmem:[%s1730 + $0x1c] sm:$0xf]
      %v1739 = vld [vmem:[%s1730 + $0x20] sm:$0xf]
      %v1740 = vld [vmem:[%s1730 + $0x24] sm:$0xf]
      %v1741 = vld [vmem:[%s1730 + $0x28] sm:$0xf]
      %v1742 = vld [vmem:[%s1730 + $0x2c] sm:$0xf]
      %v1743 = vld [vmem:[%s1730 + $0x30] sm:$0xf]
      %v1744 = vld [vmem:[%s1730 + $0x34] sm:$0xf]
      %v1745 = vld [vmem:[%s1730 + $0x38] sm:$0xf]
      %v1746 = vld [vmem:[%s1730 + $0x3c] sm:$0xf]
      %v1755 = vunpack.c.l.b16 %v1722
      %v1756 = vunpack.c.l.b16 %v1723
      %v1757 = vunpack.c.l.b16 %v1724
      %v1758 = vunpack.c.l.b16 %v1725
      %v1759 = vunpack.c.l.b16 %v1726
      %v1760 = vunpack.c.l.b16 %v1727
      %v1761 = vunpack.c.l.b16 %v1728
      %v1762 = vunpack.c.l.b16 %v1729
      %v1763 = vpack.c.b16 %v1756, %v1755
      %v1764 = vpack.c.b16 %v1758, %v1757
      %v1765 = vpack.c.b16 %v1760, %v1759
      %v1766 = vpack.c.b16 %v1762, %v1761
      %v1787 = vunpack.c.l.b16 %v1731
      %v1788 = vunpack.c.l.b16 %v1732
      %v1789 = vunpack.c.l.b16 %v1733
      %v1790 = vunpack.c.l.b16 %v1734
      %v1791 = vunpack.c.l.b16 %v1735
      %v1792 = vunpack.c.l.b16 %v1736
      %v1793 = vunpack.c.l.b16 %v1737
      %v1794 = vunpack.c.l.b16 %v1738
      %v1795 = vunpack.c.l.b16 %v1739
      %v1796 = vunpack.c.l.b16 %v1740
      %v1797 = vunpack.c.l.b16 %v1741
      %v1798 = vunpack.c.l.b16 %v1742
      %v1799 = vunpack.c.l.b16 %v1743
      %v1800 = vunpack.c.l.b16 %v1744
      %v1801 = vunpack.c.l.b16 %v1745
      %v1802 = vunpack.c.l.b16 %v1746
      %v1803 = vpack.c.b16 %v1788, %v1787
      %v1804 = vpack.c.b16 %v1790, %v1789
      %v1805 = vpack.c.b16 %v1792, %v1791
      %v1806 = vpack.c.b16 %v1794, %v1793
      %v1807 = vpack.c.b16 %v1796, %v1795
      %v1808 = vpack.c.b16 %v1798, %v1797
      %v1809 = vpack.c.b16 %v1800, %v1799
      %v1810 = vpack.c.b16 %v1802, %v1801
      %1819 = vmatprep.subr.bf16.mxu0 0
      %1820 = vmatpush1.bf16.msra.mxu0 %v1810
      %1821 = vmatprep.subr.bf16.mxu0 0
      %1822 = vmatpush1.bf16.msra.mxu0 %v1809
      %1823 = vmatprep.subr.bf16.mxu0 0
      %1824 = vmatpush1.bf16.msra.mxu0 %v1808
      %1825 = vmatprep.subr.bf16.mxu0 0
      %1826 = vmatpush1.bf16.msra.mxu0 %v1807
      %1827 = vmatprep.subr.bf16.mxu0 0
      %1828 = vmatpush1.bf16.msra.mxu0 %v1806
      %1829 = vmatprep.subr.bf16.mxu0 0
      %1830 = vmatpush1.bf16.msra.mxu0 %v1805
      %1831 = vmatprep.subr.bf16.mxu0 0
      %1832 = vmatpush1.bf16.msra.mxu0 %v1804
      %1833 = vmatprep.subr.bf16.mxu0 0
      %1834 = vmatpush1.bf16.msra.mxu0 %v1803
      %1835 = vmatprep.subr.bf16.mxu0 0
      %1836 = vmatpush2.bf16.msra.mxu0 0
      %1837 = vmatprep.subr.bf16.mxu0 0
      %1838 = vmatpush2.bf16.msra.mxu0 0
      %1839 = vmatprep.subr.bf16.mxu0 0
      %1840 = vmatpush2.bf16.msra.mxu0 0
      %1841 = vmatprep.subr.bf16.mxu0 0
      %1842 = vmatpush2.bf16.msra.mxu0 0
      %1843 = vmatprep.subr.bf16.mxu0 0
      %1844 = vmatpush2.bf16.msra.mxu0 0
      %1845 = vmatprep.subr.bf16.mxu0 0
      %1846 = vmatpush2.bf16.msra.mxu0 0
      %1847 = vmatprep.subr.bf16.mxu0 0
      %1848 = vmatpush2.bf16.msra.mxu0 0
      %1849 = vmatprep.subr.bf16.mxu0 0
      %1850 = vmatpush2.bf16.msra.mxu0 0
      %1851 = vmatprep.mubr.bf16.mxu0 0
      %1852 = vmatmul.mubr.bf16.gmra.mxu0 %v1763
      %v1853 = vpop.f32.mrf.mxu0
      %v1854 = vadd.f32 0.0, %v1853
      %v1855 = vpop.f32.mrf.mxu0
      %v1856 = vpop.f32.mrf.mxu0
      %v1857 = vadd.f32 0.0, %v1856
      %v1858 = vpop.f32.mrf.mxu0
      %1859 = vmatprep.mubr.bf16.mxu0 0
      %1860 = vmatmul.mubr.bf16.gmra.mxu0 %v1764
      %v1861 = vpop.f32.mrf.mxu0
      %v1862 = vadd.f32 0.0, %v1861
      %v1863 = vpop.f32.mrf.mxu0
      %v1864 = vpop.f32.mrf.mxu0
      %v1865 = vadd.f32 0.0, %v1864
      %v1866 = vpop.f32.mrf.mxu0
      %1867 = vmatprep.mubr.bf16.mxu0 0
      %1868 = vmatmul.mubr.bf16.gmra.mxu0 %v1765
      %v1869 = vpop.f32.mrf.mxu0
      %v1870 = vadd.f32 0.0, %v1869
      %v1871 = vpop.f32.mrf.mxu0
      %v1872 = vpop.f32.mrf.mxu0
      %v1873 = vadd.f32 0.0, %v1872
      %v1874 = vpop.f32.mrf.mxu0
      %1875 = vmatprep.mubr.bf16.mxu0 0
      %1876 = vmatmul.mubr.bf16.gmra.mxu0 %v1766
      %v1877 = vpop.f32.mrf.mxu0
      %v1878 = vadd.f32 0.0, %v1877
      %v1879 = vpop.f32.mrf.mxu0
      %v1880 = vpop.f32.mrf.mxu0
      %v1881 = vadd.f32 0.0, %v1880
      %v1882 = vpop.f32.mrf.mxu0
      %1883 = vdwg.mxu0
      %v1884 = vld [vmem:[#allocation2] sm:$0xff]
      %v1885 = vld [vmem:[#allocation2 + $0x8] sm:$0xff]
      %v1886 = vld [vmem:[#allocation2 + $0x10] sm:$0xff]
      %v1887 = vld [vmem:[#allocation2 + $0x18] sm:$0xff]
      %v1888 = vld [vmem:[#allocation2 + $0x20] sm:$0xff]
      %v1889 = vld [vmem:[#allocation2 + $0x28] sm:$0xff]
      %v1890 = vld [vmem:[#allocation2 + $0x30] sm:$0xff]
      %v1891 = vld [vmem:[#allocation2 + $0x38] sm:$0xff]
      %v1892 = vadd.f32 %v1884, %v1854
      %v1893 = vadd.f32 %v1885, %v1857
      %v1894 = vadd.f32 %v1886, %v1862
      %v1895 = vadd.f32 %v1887, %v1865
      %v1896 = vadd.f32 %v1888, %v1870
      %v1897 = vadd.f32 %v1889, %v1873
      %v1898 = vadd.f32 %v1890, %v1878
      %v1899 = vadd.f32 %v1891, %v1881
      %1900 = vst [vmem:[#allocation2] sm:$0xff] %v1892
      %1901 = vst [vmem:[#allocation2 + $0x8] sm:$0xff] %v1893
      %1902 = vst [vmem:[#allocation2 + $0x10] sm:$0xff] %v1894
      %1903 = vst [vmem:[#allocation2 + $0x18] sm:$0xff] %v1895
      %1904 = vst [vmem:[#allocation2 + $0x20] sm:$0xff] %v1896
      %1905 = vst [vmem:[#allocation2 + $0x28] sm:$0xff] %v1897
      %1906 = vst [vmem:[#allocation2 + $0x30] sm:$0xff] %v1898
      %1907 = vst [vmem:[#allocation2 + $0x38] sm:$0xff] %v1899
      %v1908 = vld [vmem:[%s1721] sm:$0xf]
      %v1909 = vld [vmem:[%s1721 + $0x4] sm:$0x1]
      %v1910 = vld [vmem:[%s1721 + $0x8] sm:$0xf]
      %v1911 = vld [vmem:[%s1721 + $0xc] sm:$0x1]
      %v1912 = vld [vmem:[%s1721 + $0x10] sm:$0xf]
      %v1913 = vld [vmem:[%s1721 + $0x14] sm:$0x1]
      %v1914 = vld [vmem:[%s1721 + $0x18] sm:$0xf]
      %v1915 = vld [vmem:[%s1721 + $0x1c] sm:$0x1]
      %v1916 = vld [vmem:[%s1721 + $0x20] sm:$0xf]
      %v1917 = vld [vmem:[%s1721 + $0x24] sm:$0x1]
      %v1918 = vld [vmem:[%s1721 + $0x28] sm:$0xf]
      %v1919 = vld [vmem:[%s1721 + $0x2c] sm:$0x1]
      %v1920 = vld [vmem:[%s1721 + $0x30] sm:$0xf]
      %v1921 = vld [vmem:[%s1721 + $0x34] sm:$0x1]
      %v1922 = vld [vmem:[%s1721 + $0x38] sm:$0xf]
      %v1923 = vld [vmem:[%s1721 + $0x3c] sm:$0x1]
      %v1925 = vshrl.u32 %v1908, 16
      %v1927 = vrot.slane %v1925, 4
      %v1928 = vshll.u32 %v1908, 16
      %v1930 = vrot.slane %v1928, 5
      %v1931 = vor.u32 %v1927, %v1930
      %v1932 = vrot.slane %v1931, 4
      %v1934 = vshll.u32 %v1909, 16
      %v1936 = vrot.slane %v1934, 5
      %v1937 = vsel %vm476, %v1932, %v1936
      %v1939 = vshrl.u32 %v1910, 16
      %v1941 = vrot.slane %v1939, 4
      %v1942 = vshll.u32 %v1910, 16
      %v1944 = vrot.slane %v1942, 5
      %v1945 = vor.u32 %v1941, %v1944
      %v1946 = vrot.slane %v1945, 4
      %v1948 = vshll.u32 %v1911, 16
      %v1950 = vrot.slane %v1948, 5
      %v1951 = vsel %vm476, %v1946, %v1950
      %v1953 = vshrl.u32 %v1912, 16
      %v1955 = vrot.slane %v1953, 4
      %v1956 = vshll.u32 %v1912, 16
      %v1958 = vrot.slane %v1956, 5
      %v1959 = vor.u32 %v1955, %v1958
      %v1960 = vrot.slane %v1959, 4
      %v1962 = vshll.u32 %v1913, 16
      %v1964 = vrot.slane %v1962, 5
      %v1965 = vsel %vm476, %v1960, %v1964
      %v1967 = vshrl.u32 %v1914, 16
      %v1969 = vrot.slane %v1967, 4
      %v1970 = vshll.u32 %v1914, 16
      %v1972 = vrot.slane %v1970, 5
      %v1973 = vor.u32 %v1969, %v1972
      %v1974 = vrot.slane %v1973, 4
      %v1976 = vshll.u32 %v1915, 16
      %v1978 = vrot.slane %v1976, 5
      %v1979 = vsel %vm476, %v1974, %v1978
      %v1981 = vshrl.u32 %v1916, 16
      %v1983 = vrot.slane %v1981, 4
      %v1984 = vshll.u32 %v1916, 16
      %v1986 = vrot.slane %v1984, 5
      %v1987 = vor.u32 %v1983, %v1986
      %v1988 = vrot.slane %v1987, 4
      %v1990 = vshll.u32 %v1917, 16
      %v1992 = vrot.slane %v1990, 5
      %v1993 = vsel %vm476, %v1988, %v1992
      %v1995 = vshrl.u32 %v1918, 16
      %v1997 = vrot.slane %v1995, 4
      %v1998 = vshll.u32 %v1918, 16
      %v2000 = vrot.slane %v1998, 5
      %v2001 = vor.u32 %v1997, %v2000
      %v2002 = vrot.slane %v2001, 4
      %v2004 = vshll.u32 %v1919, 16
      %v2006 = vrot.slane %v2004, 5
      %v2007 = vsel %vm476, %v2002, %v2006
      %v2009 = vshrl.u32 %v1920, 16
      %v2011 = vrot.slane %v2009, 4
      %v2012 = vshll.u32 %v1920, 16
      %v2014 = vrot.slane %v2012, 5
      %v2015 = vor.u32 %v2011, %v2014
      %v2016 = vrot.slane %v2015, 4
      %v2018 = vshll.u32 %v1921, 16
      %v2020 = vrot.slane %v2018, 5
      %v2021 = vsel %vm476, %v2016, %v2020
      %v2023 = vshrl.u32 %v1922, 16
      %v2025 = vrot.slane %v2023, 4
      %v2026 = vshll.u32 %v1922, 16
      %v2028 = vrot.slane %v2026, 5
      %v2029 = vor.u32 %v2025, %v2028
      %v2030 = vrot.slane %v2029, 4
      %v2032 = vshll.u32 %v1923, 16
      %v2034 = vrot.slane %v2032, 5
      %v2035 = vsel %vm476, %v2030, %v2034
      %s2036 = scalar_lea.vmem %s1, 448
      %v2037 = vld [vmem:[%s2036] sm:$0xf]
      %v2038 = vld [vmem:[%s2036 + $0x4] sm:$0xf]
      %v2039 = vld [vmem:[%s2036 + $0x8] sm:$0xf]
      %v2040 = vld [vmem:[%s2036 + $0xc] sm:$0xf]
      %v2041 = vld [vmem:[%s2036 + $0x10] sm:$0xf]
      %v2042 = vld [vmem:[%s2036 + $0x14] sm:$0xf]
      %v2043 = vld [vmem:[%s2036 + $0x18] sm:$0xf]
      %v2044 = vld [vmem:[%s2036 + $0x1c] sm:$0xf]
      %v2045 = vld [vmem:[%s2036 + $0x20] sm:$0xf]
      %v2046 = vld [vmem:[%s2036 + $0x24] sm:$0xf]
      %v2047 = vld [vmem:[%s2036 + $0x28] sm:$0xf]
      %v2048 = vld [vmem:[%s2036 + $0x2c] sm:$0xf]
      %v2049 = vld [vmem:[%s2036 + $0x30] sm:$0xf]
      %v2050 = vld [vmem:[%s2036 + $0x34] sm:$0xf]
      %v2051 = vld [vmem:[%s2036 + $0x38] sm:$0xf]
      %v2052 = vld [vmem:[%s2036 + $0x3c] sm:$0xf]
      %v2053 = vunpack.c.l.b16 %v1937
      %v2054 = vunpack.c.l.b16 %v1951
      %v2055 = vunpack.c.l.b16 %v1965
      %v2056 = vunpack.c.l.b16 %v1979
      %v2057 = vunpack.c.l.b16 %v1993
      %v2058 = vunpack.c.l.b16 %v2007
      %v2059 = vunpack.c.l.b16 %v2021
      %v2060 = vunpack.c.l.b16 %v2035
      %v2061 = vpack.c.b16 %v2054, %v2053
      %v2062 = vpack.c.b16 %v2056, %v2055
      %v2063 = vpack.c.b16 %v2058, %v2057
      %v2064 = vpack.c.b16 %v2060, %v2059
      %v2085 = vunpack.c.l.b16 %v2037
      %v2086 = vunpack.c.l.b16 %v2038
      %v2087 = vunpack.c.l.b16 %v2039
      %v2088 = vunpack.c.l.b16 %v2040
      %v2089 = vunpack.c.l.b16 %v2041
      %v2090 = vunpack.c.l.b16 %v2042
      %v2091 = vunpack.c.l.b16 %v2043
      %v2092 = vunpack.c.l.b16 %v2044
      %v2093 = vunpack.c.l.b16 %v2045
      %v2094 = vunpack.c.l.b16 %v2046
      %v2095 = vunpack.c.l.b16 %v2047
      %v2096 = vunpack.c.l.b16 %v2048
      %v2097 = vunpack.c.l.b16 %v2049
      %v2098 = vunpack.c.l.b16 %v2050
      %v2099 = vunpack.c.l.b16 %v2051
      %v2100 = vunpack.c.l.b16 %v2052
      %v2101 = vpack.c.b16 %v2086, %v2085
      %v2102 = vpack.c.b16 %v2088, %v2087
      %v2103 = vpack.c.b16 %v2090, %v2089
      %v2104 = vpack.c.b16 %v2092, %v2091
      %v2105 = vpack.c.b16 %v2094, %v2093
      %v2106 = vpack.c.b16 %v2096, %v2095
      %v2107 = vpack.c.b16 %v2098, %v2097
      %v2108 = vpack.c.b16 %v2100, %v2099
      %2117 = vmatprep.subr.bf16.mxu0 0
      %2118 = vmatpush1.bf16.msra.mxu0 %v2108
      %2119 = vmatprep.subr.bf16.mxu0 0
      %2120 = vmatpush1.bf16.msra.mxu0 %v2107
      %2121 = vmatprep.subr.bf16.mxu0 0
      %2122 = vmatpush1.bf16.msra.mxu0 %v2106
      %2123 = vmatprep.subr.bf16.mxu0 0
      %2124 = vmatpush1.bf16.msra.mxu0 %v2105
      %2125 = vmatprep.subr.bf16.mxu0 0
      %2126 = vmatpush1.bf16.msra.mxu0 %v2104
      %2127 = vmatprep.subr.bf16.mxu0 0
      %2128 = vmatpush1.bf16.msra.mxu0 %v2103
      %2129 = vmatprep.subr.bf16.mxu0 0
      %2130 = vmatpush1.bf16.msra.mxu0 %v2102
      %2131 = vmatprep.subr.bf16.mxu0 0
      %2132 = vmatpush1.bf16.msra.mxu0 %v2101
      %2133 = vmatprep.subr.bf16.mxu0 0
      %2134 = vmatpush2.bf16.msra.mxu0 0
      %2135 = vmatprep.subr.bf16.mxu0 0
      %2136 = vmatpush2.bf16.msra.mxu0 0
      %2137 = vmatprep.subr.bf16.mxu0 0
      %2138 = vmatpush2.bf16.msra.mxu0 0
      %2139 = vmatprep.subr.bf16.mxu0 0
      %2140 = vmatpush2.bf16.msra.mxu0 0
      %2141 = vmatprep.subr.bf16.mxu0 0
      %2142 = vmatpush2.bf16.msra.mxu0 0
      %2143 = vmatprep.subr.bf16.mxu0 0
      %2144 = vmatpush2.bf16.msra.mxu0 0
      %2145 = vmatprep.subr.bf16.mxu0 0
      %2146 = vmatpush2.bf16.msra.mxu0 0
      %2147 = vmatprep.subr.bf16.mxu0 0
      %2148 = vmatpush2.bf16.msra.mxu0 0
      %2149 = vmatprep.mubr.bf16.mxu0 0
      %2150 = vmatmul.mubr.bf16.gmra.mxu0 %v2061
      %v2151 = vpop.f32.mrf.mxu0
      %v2152 = vadd.f32 0.0, %v2151
      %v2153 = vpop.f32.mrf.mxu0
      %v2154 = vpop.f32.mrf.mxu0
      %v2155 = vadd.f32 0.0, %v2154
      %v2156 = vpop.f32.mrf.mxu0
      %2157 = vmatprep.mubr.bf16.mxu0 0
      %2158 = vmatmul.mubr.bf16.gmra.mxu0 %v2062
      %v2159 = vpop.f32.mrf.mxu0
      %v2160 = vadd.f32 0.0, %v2159
      %v2161 = vpop.f32.mrf.mxu0
      %v2162 = vpop.f32.mrf.mxu0
      %v2163 = vadd.f32 0.0, %v2162
      %v2164 = vpop.f32.mrf.mxu0
      %2165 = vmatprep.mubr.bf16.mxu0 0
      %2166 = vmatmul.mubr.bf16.gmra.mxu0 %v2063
      %v2167 = vpop.f32.mrf.mxu0
      %v2168 = vadd.f32 0.0, %v2167
      %v2169 = vpop.f32.mrf.mxu0
      %v2170 = vpop.f32.mrf.mxu0
      %v2171 = vadd.f32 0.0, %v2170
      %v2172 = vpop.f32.mrf.mxu0
      %2173 = vmatprep.mubr.bf16.mxu0 0
      %2174 = vmatmul.mubr.bf16.gmra.mxu0 %v2064
      %v2175 = vpop.f32.mrf.mxu0
      %v2176 = vadd.f32 0.0, %v2175
      %v2177 = vpop.f32.mrf.mxu0
      %v2178 = vpop.f32.mrf.mxu0
      %v2179 = vadd.f32 0.0, %v2178
      %v2180 = vpop.f32.mrf.mxu0
      %2181 = vdwg.mxu0
      %v2182 = vld [vmem:[#allocation2] sm:$0xff]
      %v2183 = vld [vmem:[#allocation2 + $0x8] sm:$0xff]
      %v2184 = vld [vmem:[#allocation2 + $0x10] sm:$0xff]
      %v2185 = vld [vmem:[#allocation2 + $0x18] sm:$0xff]
      %v2186 = vld [vmem:[#allocation2 + $0x20] sm:$0xff]
      %v2187 = vld [vmem:[#allocation2 + $0x28] sm:$0xff]
      %v2188 = vld [vmem:[#allocation2 + $0x30] sm:$0xff]
      %v2189 = vld [vmem:[#allocation2 + $0x38] sm:$0xff]
      %v2190 = vadd.f32 %v2182, %v2152
      %v2191 = vadd.f32 %v2183, %v2155
      %v2192 = vadd.f32 %v2184, %v2160
      %v2193 = vadd.f32 %v2185, %v2163
      %v2194 = vadd.f32 %v2186, %v2168
      %v2195 = vadd.f32 %v2187, %v2171
      %v2196 = vadd.f32 %v2188, %v2176
      %v2197 = vadd.f32 %v2189, %v2179
      %2198 = vst [vmem:[#allocation2] sm:$0xff] %v2190
      %2199 = vst [vmem:[#allocation2 + $0x8] sm:$0xff] %v2191
      %2200 = vst [vmem:[#allocation2 + $0x10] sm:$0xff] %v2192
      %2201 = vst [vmem:[#allocation2 + $0x18] sm:$0xff] %v2193
      %2202 = vst [vmem:[#allocation2 + $0x20] sm:$0xff] %v2194
      %2203 = vst [vmem:[#allocation2 + $0x28] sm:$0xff] %v2195
      %2204 = vst [vmem:[#allocation2 + $0x30] sm:$0xff] %v2196
      %2205 = vst [vmem:[#allocation2 + $0x38] sm:$0xff] %v2197
      %v2206 = vld [vmem:[%s1721] sm:$0xe]
      %v2207 = vld [vmem:[%s1721 + $0x4] sm:$0x1]
      %v2208 = vld [vmem:[%s1721 + $0x8] sm:$0xe]
      %v2209 = vld [vmem:[%s1721 + $0xc] sm:$0x1]
      %v2210 = vld [vmem:[%s1721 + $0x10] sm:$0xe]
      %v2211 = vld [vmem:[%s1721 + $0x14] sm:$0x1]
      %v2212 = vld [vmem:[%s1721 + $0x18] sm:$0xe]
      %v2213 = vld [vmem:[%s1721 + $0x1c] sm:$0x1]
      %v2214 = vld [vmem:[%s1721 + $0x20] sm:$0xe]
      %v2215 = vld [vmem:[%s1721 + $0x24] sm:$0x1]
      %v2216 = vld [vmem:[%s1721 + $0x28] sm:$0xe]
      %v2217 = vld [vmem:[%s1721 + $0x2c] sm:$0x1]
      %v2218 = vld [vmem:[%s1721 + $0x30] sm:$0xe]
      %v2219 = vld [vmem:[%s1721 + $0x34] sm:$0x1]
      %v2220 = vld [vmem:[%s1721 + $0x38] sm:$0xe]
      %v2221 = vld [vmem:[%s1721 + $0x3c] sm:$0x1]
      %v2238 = vrot.slane %v2206, 5
      %v2239 = vrot.slane %v2238, 4
      %v2240 = vrot.slane %v2207, 5
      %v2241 = vsel %vm793, %v2239, %v2240
      %v2242 = vrot.slane %v2208, 5
      %v2243 = vrot.slane %v2242, 4
      %v2244 = vrot.slane %v2209, 5
      %v2245 = vsel %vm793, %v2243, %v2244
      %v2246 = vrot.slane %v2210, 5
      %v2247 = vrot.slane %v2246, 4
      %v2248 = vrot.slane %v2211, 5
      %v2249 = vsel %vm793, %v2247, %v2248
      %v2250 = vrot.slane %v2212, 5
      %v2251 = vrot.slane %v2250, 4
      %v2252 = vrot.slane %v2213, 5
      %v2253 = vsel %vm793, %v2251, %v2252
      %v2254 = vrot.slane %v2214, 5
      %v2255 = vrot.slane %v2254, 4
      %v2256 = vrot.slane %v2215, 5
      %v2257 = vsel %vm793, %v2255, %v2256
      %v2258 = vrot.slane %v2216, 5
      %v2259 = vrot.slane %v2258, 4
      %v2260 = vrot.slane %v2217, 5
      %v2261 = vsel %vm793, %v2259, %v2260
      %v2262 = vrot.slane %v2218, 5
      %v2263 = vrot.slane %v2262, 4
      %v2264 = vrot.slane %v2219, 5
      %v2265 = vsel %vm793, %v2263, %v2264
      %v2266 = vrot.slane %v2220, 5
      %v2267 = vrot.slane %v2266, 4
      %v2268 = vrot.slane %v2221, 5
      %v2269 = vsel %vm793, %v2267, %v2268
      %s2270 = scalar_lea.vmem %s1, 512
      %v2271 = vld [vmem:[%s2270] sm:$0xf]
      %v2272 = vld [vmem:[%s2270 + $0x4] sm:$0xf]
      %v2273 = vld [vmem:[%s2270 + $0x8] sm:$0xf]
      %v2274 = vld [vmem:[%s2270 + $0xc] sm:$0xf]
      %v2275 = vld [vmem:[%s2270 + $0x10] sm:$0xf]
      %v2276 = vld [vmem:[%s2270 + $0x14] sm:$0xf]
      %v2277 = vld [vmem:[%s2270 + $0x18] sm:$0xf]
      %v2278 = vld [vmem:[%s2270 + $0x1c] sm:$0xf]
      %v2279 = vld [vmem:[%s2270 + $0x20] sm:$0xf]
      %v2280 = vld [vmem:[%s2270 + $0x24] sm:$0xf]
      %v2281 = vld [vmem:[%s2270 + $0x28] sm:$0xf]
      %v2282 = vld [vmem:[%s2270 + $0x2c] sm:$0xf]
      %v2283 = vld [vmem:[%s2270 + $0x30] sm:$0xf]
      %v2284 = vld [vmem:[%s2270 + $0x34] sm:$0xf]
      %v2285 = vld [vmem:[%s2270 + $0x38] sm:$0xf]
      %v2286 = vld [vmem:[%s2270 + $0x3c] sm:$0xf]
      %v2287 = vunpack.c.l.b16 %v2241
      %v2288 = vunpack.c.l.b16 %v2245
      %v2289 = vunpack.c.l.b16 %v2249
      %v2290 = vunpack.c.l.b16 %v2253
      %v2291 = vunpack.c.l.b16 %v2257
      %v2292 = vunpack.c.l.b16 %v2261
      %v2293 = vunpack.c.l.b16 %v2265
      %v2294 = vunpack.c.l.b16 %v2269
      %v2295 = vpack.c.b16 %v2288, %v2287
      %v2296 = vpack.c.b16 %v2290, %v2289
      %v2297 = vpack.c.b16 %v2292, %v2291
      %v2298 = vpack.c.b16 %v2294, %v2293
      %v2319 = vunpack.c.l.b16 %v2271
      %v2320 = vunpack.c.l.b16 %v2272
      %v2321 = vunpack.c.l.b16 %v2273
      %v2322 = vunpack.c.l.b16 %v2274
      %v2323 = vunpack.c.l.b16 %v2275
      %v2324 = vunpack.c.l.b16 %v2276
      %v2325 = vunpack.c.l.b16 %v2277
      %v2326 = vunpack.c.l.b16 %v2278
      %v2327 = vunpack.c.l.b16 %v2279
      %v2328 = vunpack.c.l.b16 %v2280
      %v2329 = vunpack.c.l.b16 %v2281
      %v2330 = vunpack.c.l.b16 %v2282
      %v2331 = vunpack.c.l.b16 %v2283
      %v2332 = vunpack.c.l.b16 %v2284
      %v2333 = vunpack.c.l.b16 %v2285
      %v2334 = vunpack.c.l.b16 %v2286
      %v2335 = vpack.c.b16 %v2320, %v2319
      %v2336 = vpack.c.b16 %v2322, %v2321
      %v2337 = vpack.c.b16 %v2324, %v2323
      %v2338 = vpack.c.b16 %v2326, %v2325
      %v2339 = vpack.c.b16 %v2328, %v2327
      %v2340 = vpack.c.b16 %v2330, %v2329
      %v2341 = vpack.c.b16 %v2332, %v2331
      %v2342 = vpack.c.b16 %v2334, %v2333
      %2351 = vmatprep.subr.bf16.mxu0 0
      %2352 = vmatpush1.bf16.msra.mxu0 %v2342
      %2353 = vmatprep.subr.bf16.mxu0 0
      %2354 = vmatpush1.bf16.msra.mxu0 %v2341
      %2355 = vmatprep.subr.bf16.mxu0 0
      %2356 = vmatpush1.bf16.msra.mxu0 %v2340
      %2357 = vmatprep.subr.bf16.mxu0 0
      %2358 = vmatpush1.bf16.msra.mxu0 %v2339
      %2359 = vmatprep.subr.bf16.mxu0 0
      %2360 = vmatpush1.bf16.msra.mxu0 %v2338
      %2361 = vmatprep.subr.bf16.mxu0 0
      %2362 = vmatpush1.bf16.msra.mxu0 %v2337
      %2363 = vmatprep.subr.bf16.mxu0 0
      %2364 = vmatpush1.bf16.msra.mxu0 %v2336
      %2365 = vmatprep.subr.bf16.mxu0 0
      %2366 = vmatpush1.bf16.msra.mxu0 %v2335
      %2367 = vmatprep.subr.bf16.mxu0 0
      %2368 = vmatpush2.bf16.msra.mxu0 0
      %2369 = vmatprep.subr.bf16.mxu0 0
      %2370 = vmatpush2.bf16.msra.mxu0 0
      %2371 = vmatprep.subr.bf16.mxu0 0
      %2372 = vmatpush2.bf16.msra.mxu0 0
      %2373 = vmatprep.subr.bf16.mxu0 0
      %2374 = vmatpush2.bf16.msra.mxu0 0
      %2375 = vmatprep.subr.bf16.mxu0 0
      %2376 = vmatpush2.bf16.msra.mxu0 0
      %2377 = vmatprep.subr.bf16.mxu0 0
      %2378 = vmatpush2.bf16.msra.mxu0 0
      %2379 = vmatprep.subr.bf16.mxu0 0
      %2380 = vmatpush2.bf16.msra.mxu0 0
      %2381 = vmatprep.subr.bf16.mxu0 0
      %2382 = vmatpush2.bf16.msra.mxu0 0
      %2383 = vmatprep.mubr.bf16.mxu0 0
      %2384 = vmatmul.mubr.bf16.gmra.mxu0 %v2295
      %v2385 = vpop.f32.mrf.mxu0
      %v2386 = vadd.f32 0.0, %v2385
      %v2387 = vpop.f32.mrf.mxu0
      %v2388 = vpop.f32.mrf.mxu0
      %v2389 = vadd.f32 0.0, %v2388
      %v2390 = vpop.f32.mrf.mxu0
      %2391 = vmatprep.mubr.bf16.mxu0 0
      %2392 = vmatmul.mubr.bf16.gmra.mxu0 %v2296
      %v2393 = vpop.f32.mrf.mxu0
      %v2394 = vadd.f32 0.0, %v2393
      %v2395 = vpop.f32.mrf.mxu0
      %v2396 = vpop.f32.mrf.mxu0
      %v2397 = vadd.f32 0.0, %v2396
      %v2398 = vpop.f32.mrf.mxu0
      %2399 = vmatprep.mubr.bf16.mxu0 0
      %2400 = vmatmul.mubr.bf16.gmra.mxu0 %v2297
      %v2401 = vpop.f32.mrf.mxu0
      %v2402 = vadd.f32 0.0, %v2401
      %v2403 = vpop.f32.mrf.mxu0
      %v2404 = vpop.f32.mrf.mxu0
      %v2405 = vadd.f32 0.0, %v2404
      %v2406 = vpop.f32.mrf.mxu0
      %2407 = vmatprep.mubr.bf16.mxu0 0
      %2408 = vmatmul.mubr.bf16.gmra.mxu0 %v2298
      %v2409 = vpop.f32.mrf.mxu0
      %v2410 = vadd.f32 0.0, %v2409
      %v2411 = vpop.f32.mrf.mxu0
      %v2412 = vpop.f32.mrf.mxu0
      %v2413 = vadd.f32 0.0, %v2412
      %v2414 = vpop.f32.mrf.mxu0
      %2415 = vdwg.mxu0
      %v2416 = vld [vmem:[#allocation2] sm:$0xff]
      %v2417 = vld [vmem:[#allocation2 + $0x8] sm:$0xff]
      %v2418 = vld [vmem:[#allocation2 + $0x10] sm:$0xff]
      %v2419 = vld [vmem:[#allocation2 + $0x18] sm:$0xff]
      %v2420 = vld [vmem:[#allocation2 + $0x20] sm:$0xff]
      %v2421 = vld [vmem:[#allocation2 + $0x28] sm:$0xff]
      %v2422 = vld [vmem:[#allocation2 + $0x30] sm:$0xff]
      %v2423 = vld [vmem:[#allocation2 + $0x38] sm:$0xff]
      %v2424 = vadd.f32 %v2416, %v2386
      %v2425 = vadd.f32 %v2417, %v2389
      %v2426 = vadd.f32 %v2418, %v2394
      %v2427 = vadd.f32 %v2419, %v2397
      %v2428 = vadd.f32 %v2420, %v2402
      %v2429 = vadd.f32 %v2421, %v2405
      %v2430 = vadd.f32 %v2422, %v2410
      %v2431 = vadd.f32 %v2423, %v2413
      %2432 = vst [vmem:[#allocation2] sm:$0xff] %v2424
      %2433 = vst [vmem:[#allocation2 + $0x8] sm:$0xff] %v2425
      %2434 = vst [vmem:[#allocation2 + $0x10] sm:$0xff] %v2426
      %2435 = vst [vmem:[#allocation2 + $0x18] sm:$0xff] %v2427
      %2436 = vst [vmem:[#allocation2 + $0x20] sm:$0xff] %v2428
      %2437 = vst [vmem:[#allocation2 + $0x28] sm:$0xff] %v2429
      %2438 = vst [vmem:[#allocation2 + $0x30] sm:$0xff] %v2430
      %2439 = vst [vmem:[#allocation2 + $0x38] sm:$0xff] %v2431
      %v2440 = vld [vmem:[#allocation2] sm:$0xff]
      %v2441 = vld [vmem:[#allocation2 + $0x8] sm:$0xff]
      %v2442 = vld [vmem:[#allocation2 + $0x10] sm:$0xff]
      %v2443 = vld [vmem:[#allocation2 + $0x18] sm:$0xff]
      %v2444 = vld [vmem:[#allocation2 + $0x20] sm:$0xff]
      %v2445 = vld [vmem:[#allocation2 + $0x28] sm:$0xff]
      %v2446 = vld [vmem:[#allocation2 + $0x30] sm:$0xff]
      %v2447 = vld [vmem:[#allocation2 + $0x38] sm:$0xff]
      %v2448 = vld [vmem:[%s2] sm:$0x1]
      %v2450 = vlaneseq
      %v2451 = vshrl.u32 %v2450, 7
      %v2452 = vsub.s32 0, %v2451
      %v2453 = vrot.slane %v2448, %v2452
      %v2455 = vmul.f32 %v2440, %v2453
      %v2456 = vmul.f32 %v2441, %v2453
      %v2457 = vmul.f32 %v2442, %v2453
      %v2458 = vmul.f32 %v2443, %v2453
      %v2459 = vmul.f32 %v2444, %v2453
      %v2460 = vmul.f32 %v2445, %v2453
      %v2461 = vmul.f32 %v2446, %v2453
      %v2462 = vmul.f32 %v2447, %v2453
      %v2463 = vld [vmem:[%s3] sm:$0x1]
      %v2465 = vlaneseq
      %v2466 = vshrl.u32 %v2465, 7
      %v2467 = vsub.s32 0, %v2466
      %v2468 = vrot.slane %v2463, %v2467
      %v2470 = vadd.f32 %v2455, %v2468
      %v2471 = vadd.f32 %v2456, %v2468
      %v2472 = vadd.f32 %v2457, %v2468
      %v2473 = vadd.f32 %v2458, %v2468
      %v2474 = vadd.f32 %v2459, %v2468
      %v2475 = vadd.f32 %v2460, %v2468
      %v2476 = vadd.f32 %v2461, %v2468
      %v2477 = vadd.f32 %v2462, %v2468
      %v2478 = vld [vmem:[%s272] sm:$0xf]
      %v2479 = vld [vmem:[%s272 + $0x4] sm:$0xf]
      %v2480 = vld [vmem:[%s272 + $0x8] sm:$0xf]
      %v2481 = vld [vmem:[%s272 + $0xc] sm:$0xf]
      %v2482 = vld [vmem:[%s272 + $0x10] sm:$0xf]
      %v2483 = vld [vmem:[%s272 + $0x14] sm:$0xf]
      %v2484 = vld [vmem:[%s272 + $0x18] sm:$0xf]
      %v2485 = vld [vmem:[%s272 + $0x1c] sm:$0xf]
      %v2486 = vunpack.c.l.bf16 %v2478
      %v2487 = vunpack.c.l.bf16 %v2479
      %v2488 = vunpack.c.l.bf16 %v2480
      %v2489 = vunpack.c.l.bf16 %v2481
      %v2490 = vunpack.c.l.bf16 %v2482
      %v2491 = vunpack.c.l.bf16 %v2483
      %v2492 = vunpack.c.l.bf16 %v2484
      %v2493 = vunpack.c.l.bf16 %v2485
      %v2494 = vadd.f32 %v2470, %v2486
      %v2495 = vadd.f32 %v2471, %v2487
      %v2496 = vadd.f32 %v2472, %v2488
      %v2497 = vadd.f32 %v2473, %v2489
      %v2498 = vadd.f32 %v2474, %v2490
      %v2499 = vadd.f32 %v2475, %v2491
      %v2500 = vadd.f32 %v2476, %v2492
      %v2501 = vadd.f32 %v2477, %v2493
      %v2502 = vmax.f32 %v2494, 0.0
      %v2503 = vmax.f32 %v2495, 0.0
      %v2504 = vmax.f32 %v2496, 0.0
      %v2505 = vmax.f32 %v2497, 0.0
      %v2506 = vmax.f32 %v2498, 0.0
      %v2507 = vmax.f32 %v2499, 0.0
      %v2508 = vmax.f32 %v2500, 0.0
      %v2509 = vmax.f32 %v2501, 0.0
      %2510 = vst [vmem:[%s282] sm:$0xff] %v2502
      %2511 = vst [vmem:[%s282 + $0x8] sm:$0xff] %v2503
      %2512 = vst [vmem:[%s282 + $0x10] sm:$0xff] %v2504
      %2513 = vst [vmem:[%s282 + $0x18] sm:$0xff] %v2505
      %2514 = vst [vmem:[%s282 + $0x20] sm:$0xff] %v2506
      %2515 = vst [vmem:[%s282 + $0x28] sm:$0xff] %v2507
      %2516 = vst [vmem:[%s282 + $0x30] sm:$0xff] %v2508
      %2517 = vst [vmem:[%s282 + $0x38] sm:$0xff] %v2509
      %s2518 = smul.u32 8, %s21
      %p2519 = scmp.lt.s32.totalorder %s20, 1
      %s2520 = scalar_select %p2519, %s20, 1
      %p2521 = scmp.lt.s32.totalorder %s2518, 7
      %s2522 = scalar_select %p2521, %s2518, 7
      %s2523 = smul.addr %s2520, 8
      %s2524 = sadd.s32 %s2522, %s2523
      %s2525 = smul.addr %s2524, 8
      %s2526 = scalar_lea.vmem %s5, %s2525
      // Predicated region
      $region41: #{basic_block_forward.5} parent=39 // pred_check
        %p2527 = pneg %p165
      $region42: #{basic_block_forward.5} parent=39 // pred_check_branch
        %2529 = sbr.rel (%p2527) target = $region44
      $region43: #{basic_block_forward.5} parent=39 // pred_region
        %s2530 = smul.u32 8, %s21
      $region44: #{basic_block_forward.5} parent=39 // pred_fallthru
        _
    $region40: #{basic_block_forward.5} parent=5 // pred_fallthru
      _
    %p2531 = scmp.le.s32.totalorder 2, %s11
    // Predicated region
    $region45: #{basic_block_forward.5} parent=5 // pred_check
      %p2532 = pneg %p2531
    $region46: #{basic_block_forward.5} parent=5 // pred_check_branch
      %2534 = sbr.rel (%p2532) target = $region48
    $region47: #{basic_block_forward.5} parent=5 // pred_region
      %s2535 = ssub.s32 %s11, 2
      // Predicated region
      $region49: #{basic_block_forward.5} parent=47 // pred_check
        %p2536 = pneg %p171
      $region50: #{basic_block_forward.5} parent=47 // pred_check_branch
        %2538 = sbr.rel (%p2536) target = $region52
      $region51: #{basic_block_forward.5} parent=47 // pred_region
        %s2539 = smul.u32 8, %s23
        %p2540 = scmp.lt.s32.totalorder %s22, 1
        %s2541 = scalar_select %p2540, %s22, 1
        %p2542 = scmp.lt.s32.totalorder %s2539, 7
        %s2543 = scalar_select %p2542, %s2539, 7
        %s2544 = smul.addr %s2541, 8
        %s2545 = sadd.s32 %s2543, %s2544
        %s2546 = smul.addr %s2545, 8
        %s2547 = scalar_lea.vmem %s5, %s2546
      $region52: #{basic_block_forward.5} parent=47 // pred_fallthru
        _
    $region48: #{basic_block_forward.5} parent=5 // pred_fallthru
      _
  $region6: #{basic_block_forward.5} parent=0 // loop_footer
    %s15 = sadd.s32 1, %s11
  $region7: #{basic_block_forward.5} parent=0 // loop_footer_branch
    %10 = sbr.rel target = $region3
  $region8: #{basic_block_forward.5} parent=0 // loop_exit
    _

</llo_original>
